<compile_context>
chip_gen: v7x
topology: tpu7x:2x2x1
jax: 0.10.0
libtpu: 0.0.40
codegen_flags: <defaults>
</compile_context>

<pallas_src>
import functools
import numpy as np
import jax
import jax.numpy as jnp
from jax.experimental import pallas as pl
from jax.experimental.pallas import tpu as pltpu


# ----------------------------------------------------------------------------
# helpers
# ----------------------------------------------------------------------------
def _round_up(x, m):
    return (x + m - 1) // m * m


def _pick_tm(M):
    """Row-tile size: as large as useful, but guarantee >= 4 grid steps when M
    allows it so both TensorCores get >= 2 pipelined steps on v7x."""
    for tm in (512, 256, 128):
        if M >= 4 * tm:
            return tm
    return 128


_MOSAIC_PARAMS = pltpu.CompilerParams(
    dimension_semantics=("parallel",),
    vmem_limit_bytes=48 * 1024 * 1024,   # explicit headroom under v7x's 64 MiB
)


def _act(y, kind):
    if kind == "swish":
        return y * jax.nn.sigmoid(y)      # sigmoid -> EUP, mul stays on VALU
    if kind == "relu":
        return jnp.maximum(y, 0.0)
    return y


def _itemsize(dt):
    return np.dtype(dt).itemsize


# ----------------------------------------------------------------------------
# Pallas kernels
# ----------------------------------------------------------------------------
def _matmul_bias_kernel(x_ref, w_ref, b_ref, o_ref, *, act):
    """(tm,K) bf16 @ (K,N) bf16 -> f32 acc, fused bias + activation."""
    y = jnp.dot(x_ref[...], w_ref[...], preferred_element_type=jnp.float32)
    y = _act(y + b_ref[...], act)
    o_ref[...] = y.astype(o_ref.dtype)


def _matmul_fused2_kernel(x_ref, w1_ref, b1_ref, w2_ref, b2_ref, o_ref, *,
                          act1, act2):
    """3x3 conv matmul with the following 1x1 conv fused as a second in-VMEM
    matmul on the same tile (no HBM round trip for the intermediate)."""
    h = jnp.dot(x_ref[...], w1_ref[...], preferred_element_type=jnp.float32)
    h = _act(h + b1_ref[...], act1).astype(jnp.bfloat16)
    y = jnp.dot(h, w2_ref[...], preferred_element_type=jnp.float32)
    y = _act(y + b2_ref[...], act2)
    o_ref[...] = y.astype(o_ref.dtype)


def _conv_ddim_kernel(coef_ref, x_ref, w_ref, b_ref, lat_ref, noise_ref, o_ref):
    """Final eps-UNet conv tile fused with the exact p_sample_ddim update:
        eps     = cols @ W3 + b3
        pred_x0 = (x - sqrt(1-a_t)*eps) / sqrt(a_t)
        x_prev  = sqrt(a_prev)*pred_x0 + sqrt(1-a_prev-sigma^2)*eps
                  + sigma*T*noise
    coef = [1/sqrt(a_t), sqrt(1-a_t), sqrt(a_prev), sqrt(1-a_prev-sigma^2),
            sigma*T, ...] in SMEM; noise is an exact Gaussian streamed in."""
    eps = jnp.dot(x_ref[...], w_ref[...], preferred_element_type=jnp.float32)
    eps = eps + b_ref[...]
    x = lat_ref[...]
    pred_x0 = (x - coef_ref[1] * eps) * coef_ref[0]
    o_ref[...] = (coef_ref[2] * pred_x0 + coef_ref[3] * eps
                  + coef_ref[4] * noise_ref[...])


# ----------------------------------------------------------------------------
# Pallas wrappers
# ----------------------------------------------------------------------------
def _pad_rows(x, Mp):
    M = x.shape[0]
    if Mp != M:
        x = jnp.pad(x, ((0, Mp - M), (0, 0)))
    return x


def matmul_bias(cols, w, b_row, act=None, out_dtype=jnp.float32):
    """cols:(M,K) bf16 @ w:(K,N) bf16 + b_row:(1,N) f32, fused activation."""
    M, K = cols.shape
    N = w.shape[1]
    tm = _pick_tm(M)
    Mp = _round_up(M, tm)
    cols = _pad_rows(cols, Mp)
    cost = pl.CostEstimate(
        flops=2 * Mp * K * N,
        transcendentals=(Mp * N if act == "swish" else 0),
        bytes_accessed=Mp * K * 2 + K * N * 2 + Mp * N * _itemsize(out_dtype))
    out = pl.pallas_call(
        functools.partial(_matmul_bias_kernel, act=act),
        out_shape=jax.ShapeDtypeStruct((Mp, N), out_dtype),
        grid=(Mp // tm,),
        in_specs=[
            pl.BlockSpec((tm, K), lambda i: (i, 0)),
            pl.BlockSpec((K, N), lambda i: (0, 0)),
            pl.BlockSpec((1, N), lambda i: (0, 0)),
        ],
        out_specs=pl.BlockSpec((tm, N), lambda i: (i, 0)),
        compiler_params=_MOSAIC_PARAMS,
        cost_estimate=cost,
    )(cols, w, b_row)
    return out[:M]


def matmul_fused2(cols, w1, b1_row, w2, b2_row, act1, act2,
                  out_dtype=jnp.float32):
    """cols @ w1 (+bias, act1) followed by an in-kernel 1x1 conv (@ w2 +bias,
    act2).  The intermediate never touches HBM."""
    M, K = cols.shape
    C1 = w1.shape[1]
    N = w2.shape[1]
    tm = _pick_tm(M)
    Mp = _round_up(M, tm)
    cols = _pad_rows(cols, Mp)
    cost = pl.CostEstimate(
        flops=2 * Mp * K * C1 + 2 * Mp * C1 * N,
        transcendentals=Mp * C1,
        bytes_accessed=(Mp * K * 2 + (K * C1 + C1 * N) * 2
                        + Mp * N * _itemsize(out_dtype)))
    out = pl.pallas_call(
        functools.partial(_matmul_fused2_kernel, act1=act1, act2=act2),
        out_shape=jax.ShapeDtypeStruct((Mp, N), out_dtype),
        grid=(Mp // tm,),
        in_specs=[
            pl.BlockSpec((tm, K), lambda i: (i, 0)),
            pl.BlockSpec((K, C1), lambda i: (0, 0)),
            pl.BlockSpec((1, C1), lambda i: (0, 0)),
            pl.BlockSpec((C1, N), lambda i: (0, 0)),
            pl.BlockSpec((1, N), lambda i: (0, 0)),
        ],
        out_specs=pl.BlockSpec((tm, N), lambda i: (i, 0)),
        compiler_params=_MOSAIC_PARAMS,
        cost_estimate=cost,
    )(cols, w1, b1_row, w2, b2_row)
    return out[:M]


def im2col(x, kh, kw, stride=1, pad=0):
    """x: (B,H,W,C) -> ((B*Ho*Wo, kh*kw*C), (B, Ho, Wo)).
    TODO(synk): move the kh*kw halo gather into the kernel (shifted loads over
    spatial row blocks) to avoid materializing the 9x-expanded cols in HBM."""
    B, H, W, C = x.shape
    if pad:
        x = jnp.pad(x, ((0, 0), (pad, pad), (pad, pad), (0, 0)))
    Ho = (H + 2 * pad - kh) // stride + 1
    Wo = (W + 2 * pad - kw) // stride + 1
    cols = []
    for i in range(kh):
        for j in range(kw):
            cols.append(x[:, i:i + stride * Ho:stride, j:j + stride * Wo:stride, :])
    cols = jnp.concatenate(cols, axis=-1)                      # (B,Ho,Wo,kh*kw*C)
    return cols.reshape(B * Ho * Wo, kh * kw * C), (B, Ho, Wo)


def conv3x3(x, w_mat, b_row, pad=1, act=None, out_dtype=jnp.float32):
    """3x3 conv as im2col + one Pallas matmul.  w_mat: (9*Cin, Cout) bf16."""
    cout = w_mat.shape[1]
    cols, (B, Ho, Wo) = im2col(x.astype(jnp.bfloat16), 3, 3, 1, pad)
    y = matmul_bias(cols, w_mat, b_row, act=act, out_dtype=out_dtype)
    return y.reshape(B, Ho, Wo, cout)


def conv3x3_then_1x1(x, w1_mat, b1_row, w2_mat, b2_row, pad=1, act1="swish",
                     act2=None, out_dtype=jnp.float32):
    """3x3 conv + following 1x1 conv fused in one Pallas kernel."""
    cout = w2_mat.shape[1]
    cols, (B, Ho, Wo) = im2col(x.astype(jnp.bfloat16), 3, 3, 1, pad)
    y = matmul_fused2(cols, w1_mat, b1_row, w2_mat, b2_row, act1, act2,
                      out_dtype=out_dtype)
    return y.reshape(B, Ho, Wo, cout)


def conv_eps_ddim(xc, w3_mat, b3_row, latent_flat, noise_flat, coefs):
    """Last UNet conv (3x3, pad=1) fused with the exact p_sample_ddim update.
    latent_flat / noise_flat: (Mp, z) f32 row-padded slabs, coefs: (8,) f32 in
    SMEM.  The latent slab is aliased in/out (no per-step allocation)."""
    z = latent_flat.shape[1]
    cols, (B, Ho, Wo) = im2col(xc.astype(jnp.bfloat16), 3, 3, 1, 1)
    M, K = cols.shape
    Mp = latent_flat.shape[0]
    tm = _pick_tm(M)
    assert Mp == _round_up(M, tm)
    cols = _pad_rows(cols, Mp)
    cost = pl.CostEstimate(
        flops=2 * Mp * K * z,
        transcendentals=0,
        bytes_accessed=Mp * K * 2 + K * z * 2 + 3 * Mp * z * 4)
    out = pl.pallas_call(
        _conv_ddim_kernel,
        out_shape=jax.ShapeDtypeStruct((Mp, z), jnp.float32),
        grid=(Mp // tm,),
        in_specs=[
            pl.BlockSpec(memory_space=pltpu.MemorySpace.SMEM),   # coefs (8,)
            pl.BlockSpec((tm, K), lambda i: (i, 0)),
            pl.BlockSpec((K, z), lambda i: (0, 0)),
            pl.BlockSpec((1, z), lambda i: (0, 0)),
            pl.BlockSpec((tm, z), lambda i: (i, 0)),
            pl.BlockSpec((tm, z), lambda i: (i, 0)),
        ],
        out_specs=pl.BlockSpec((tm, z), lambda i: (i, 0)),
        input_output_aliases={4: 0},            # latent slab updated in place
        compiler_params=_MOSAIC_PARAMS,
        cost_estimate=cost,
    )(coefs, cols, w3_mat, b3_row, latent_flat, noise_flat)
    return out


# ----------------------------------------------------------------------------
# JAX glue: timestep embedding, pixel shuffle
# ----------------------------------------------------------------------------
def timestep_embedding_batch(t, dim):
    half = dim // 2
    freqs = jnp.exp(-np.log(10000.0) * jnp.arange(half, dtype=jnp.float32) / half)
    args = jnp.asarray(t, jnp.float32)[:, None] * freqs[None, :]
    return jnp.concatenate([jnp.cos(args), jnp.sin(args)], axis=-1)   # (steps, dim)


def pixel_shuffle(x, r):
    """(B, H, W, C*r*r) -> (B, H*r, W*r, C)."""
    B, H, W, Crr = x.shape
    C = Crr // (r * r)
    x = x.reshape(B, H, W, r, r, C)
    x = jnp.transpose(x, (0, 1, 3, 2, 4, 5))
    return x.reshape(B, H * r, W * r, C)


# ----------------------------------------------------------------------------
# Model
# ----------------------------------------------------------------------------
class SRLatentDiffusionPallas:
    """Scaled-down, deterministic-weight stand-in for SRLatentDiffusion('10m')."""

    def __init__(self, bands="10m", key=None):
        assert bands in ("10m", "20m"), "band selection incorrect"
        if key is None:
            key = jax.random.PRNGKey(42)
        self.in_ch = 4 if bands == "10m" else 6
        self.z_ch = self.in_ch              # embed_dim / z_channels
        self.ch = 32                        # scaled down from 128 (VAE ch)
        self.model_ch = 32                  # scaled down from 160 (UNet channels)
        self.emb_dim = 32
        self.linear_start = 0.0015
        self.linear_end = 0.0155
        self.num_timesteps = 1000
        # per-band denorm scale (stand-in for linear_transform_4b 'denorm')
        self.denorm_scale = jnp.asarray(
            [3.0, 3.0, 3.0, 5.0][: self.in_ch] + [3.0] * max(0, self.in_ch - 4),
            jnp.float32)

        keys = jax.random.split(key, 16)

        def init(k, shape, fan_in):
            return jax.random.normal(k, shape, jnp.float32) / np.sqrt(fan_in)

        c, z, mc, e = self.ch, self.z_ch, self.model_ch, self.emb_dim

        # --- first-stage encoder ------------------------------------------------
        # bilinear 4x upsample -> 4x4 stride-4 conv pre-composed into ONE 3x3 conv
        # on the original HxW grid (edge padding reproduces align_corners=False
        # border clamping) -> no 16x-larger upsampled HBM intermediate.
        enc_w1_4x4 = init(keys[0], (4, 4, self.in_ch, c), 16 * self.in_ch)
        A = jnp.asarray([[0.375, 0.625, 0.0],
                         [0.125, 0.875, 0.0],
                         [0.0,   0.875, 0.125],
                         [0.0,   0.625, 0.375]], jnp.float32)    # 4x bilinear weights
        enc_w1f = jnp.einsum("md,ne,mnio->deio", A, A, enc_w1_4x4)   # (3,3,in,c)
        enc_b1 = jnp.zeros((c,), jnp.float32)
        enc_w2 = init(keys[1], (1, 1, c, 2 * z), c)
        enc_b2 = jnp.zeros((2 * z,), jnp.float32)

        # --- eps-UNet (concat conditioning: 2*z input channels) ------------------
        self.t_w = init(keys[2], (e, mc), e)
        self.t_b = jnp.zeros((mc,), jnp.float32)
        u_w1 = init(keys[3], (3, 3, 2 * z, mc), 9 * 2 * z)
        self.u_b1 = jnp.zeros((mc,), jnp.float32)
        u_w2 = init(keys[4], (3, 3, mc, mc), 9 * mc)
        u_b2 = jnp.zeros((mc,), jnp.float32)
        u_w3 = init(keys[5], (3, 3, mc, z), 9 * mc) * 0.1
        u_b3 = jnp.zeros((z,), jnp.float32)

        # --- first-stage decoder --------------------------------------------------
        dec_w1 = init(keys[6], (3, 3, z, c), 9 * z)
        dec_b1 = jnp.zeros((c,), jnp.float32)
        dec_w2 = init(keys[7], (1, 1, c, z * 16), c)
        dec_b2 = jnp.zeros((z * 16,), jnp.float32)
        # Fold the band-wise denorm affine ((y+1)*0.5*scale) into the last conv;
        # the clamp (X[X<0]=0) becomes a fused relu epilogue in the same kernel.
        # pixel_shuffle channel order is band = n % C, so the scale is tiled 16x.
        s_tiled = jnp.tile(self.denorm_scale, 16)                        # (z*16,)
        dec_w2f = dec_w2 * (0.5 * s_tiled)[None, None, None, :]
        dec_b2f = dec_b2 * 0.5 * s_tiled + 0.5 * s_tiled

        # --- pre-reshape + pre-cast every weight ONCE (nothing re-padded / re-cast
        # inside the sampling loop) -----------------------------------------------
        bf = jnp.bfloat16
        self.enc_w1_mat = enc_w1f.reshape(9 * self.in_ch, c).astype(bf)
        self.enc_b1_row = enc_b1.reshape(1, c)
        self.enc_w2_mat = enc_w2.reshape(c, 2 * z).astype(bf)
        self.enc_b2_row = enc_b2.reshape(1, 2 * z)
        self.u_w1_mat = u_w1.reshape(9 * 2 * z, mc).astype(bf)
        self.u_w2_mat = u_w2.reshape(9 * mc, mc).astype(bf)
        self.u_b2_row = u_b2.reshape(1, mc)
        self.u_w3_mat = u_w3.reshape(9 * mc, z).astype(bf)
        self.u_b3_row = u_b3.reshape(1, z)
        self.dec_w1_mat = dec_w1.reshape(9 * z, c).astype(bf)
        self.dec_b1_row = dec_b1.reshape(1, c)
        self.dec_w2f_mat = dec_w2f.reshape(c, z * 16).astype(bf)
        self.dec_b2f_row = dec_b2f.reshape(1, z * 16)

    # --- first stage encoder: fused 3x3 + 1x1 -> moments ----------------------
    def _tensor_encode(self, x_nhwc, key):
        # NOTE: linear_transform(X, 'norm') in the torch code is computed then
        # discarded (encode_conditioning is forced True for SISR), so skipped.
        x_pad = jnp.pad(x_nhwc, ((0, 0), (1, 1), (1, 1), (0, 0)), mode="edge")
        moments = conv3x3_then_1x1(
            x_pad, self.enc_w1_mat, self.enc_b1_row,
            self.enc_w2_mat, self.enc_b2_row, pad=0,
            act1="swish", act2=None, out_dtype=jnp.float32)      # (B,H,W,2z)
        mean, logvar = jnp.split(moments, 2, axis=-1)
        logvar = jnp.clip(logvar, -30.0, 20.0)
        std = jnp.exp(0.5 * logvar)
        noise = jax.random.normal(key, mean.shape, jnp.float32)
        return mean + std * noise                                # DiagonalGaussian.sample()

    # --- first stage decoder: fused 3x3 + 1x1(+denorm) + relu ------------------
    def _tensor_decode(self, latent):
        y = conv3x3_then_1x1(
            latent, self.dec_w1_mat, self.dec_b1_row,
            self.dec_w2f_mat, self.dec_b2f_row, pad=1,
            act1="swish", act2="relu", out_dtype=jnp.float32)    # denormed & clamped
        y = pixel_shuffle(y, 4)                                  # (B, 4H, 4W, z)
        # TODO(synk): hq_histogram_matching (skimage match_histograms, sort-based)
        # has no clean Pallas equivalent and is skipped.
        return y

    # --- DDIM schedule ----------------------------------------------------------
    def _ddim_schedule(self, custom_steps, eta):
        betas = np.linspace(self.linear_start ** 0.5, self.linear_end ** 0.5,
                            self.num_timesteps, dtype=np.float64) ** 2
        acp = np.cumprod(1.0 - betas)
        c = self.num_timesteps // custom_steps
        ts = np.asarray(list(range(0, self.num_timesteps, c))) + 1
        a = acp[ts]
        a_prev = np.asarray([acp[0]] + acp[ts[:-1]].tolist())
        sigmas = eta * np.sqrt((1 - a_prev) / (1 - a) * (1 - a / a_prev))
        return ts, a, a_prev, sigmas

    # --- forward ----------------------------------------------------------------
    def forward(self, X_nchw, key, eta=1.0, custom_steps=4, temperature=1.0):
        # TODO(synk): assert_tensor_validity / revert_padding (shape-padding glue)
        # are identity for well-formed inputs and omitted.
        X = jnp.transpose(X_nchw.astype(jnp.float32), (0, 2, 3, 1))   # NCHW -> NHWC
        B, H, W, _ = X.shape
        z = self.z_ch
        k_enc, k_lat, k_noise = jax.random.split(key, 3)

        cond = self._tensor_encode(X, k_enc)                     # (B, H, W, z) f32
        cond_bf16 = cond.astype(jnp.bfloat16)

        M = B * H * W
        tm = _pick_tm(M)
        Mp = _round_up(M, tm)

        # ---- DDIM schedule / per-step tables (trace-time constants) ----------
        ts, a, a_prev, sigmas = self._ddim_schedule(custom_steps, eta)
        time_range = np.flip(ts)
        coef_np = np.zeros((custom_steps, 8), np.float32)
        for i in range(custom_steps):
            idx = custom_steps - i - 1
            coef_np[i] = [
                1.0 / np.sqrt(a[idx]), np.sqrt(1.0 - a[idx]), np.sqrt(a_prev[idx]),
                np.sqrt(max(1.0 - a_prev[idx] - sigmas[idx] ** 2, 0.0)),
                sigmas[idx] * temperature, 0.0, 0.0, 0.0]
        coef_table = jnp.asarray(coef_np)                                  # (steps, 8)

        # Timestep-embedding MLP hoisted out of the loop: fused per-step bias for
        # the first UNet conv = u_b1 + swish(t_emb @ t_w + t_b).
        emb = timestep_embedding_batch(np.asarray(time_range, np.float32),
                                       self.emb_dim)
        temb = jnp.dot(emb, self.t_w) + self.t_b
        temb = temb * jax.nn.sigmoid(temb)
        bias1_table = (self.u_b1[None, :] + temb)[:, None, :]    # (steps, 1, mc)

        # Exact-Gaussian DDIM noise stream, generated ONCE outside the loop and
        # streamed into the fused eps+DDIM kernel (scaled by sigma*T in-kernel).
        noise_table = jax.random.normal(k_noise, (custom_steps, Mp, z), jnp.float32)

        # Channel-dense latent slab (Mp, z); rows >= M are padding, sliced at end.
        latent0 = jax.random.normal(k_lat, (Mp, z), jnp.float32)

        def body(i, lat):
            latent = lat[:M].reshape(B, H, W, z).astype(jnp.bfloat16)
            xc = jnp.concatenate([latent, cond_bf16], axis=-1)             # concat_mode
            h = conv3x3(xc, self.u_w1_mat, bias1_table[i], pad=1, act="swish",
                        out_dtype=jnp.bfloat16)
            h = conv3x3(h, self.u_w2_mat, self.u_b2_row, pad=1, act="swish",
                        out_dtype=jnp.bfloat16)
            # eps conv + p_sample_ddim update in one kernel, latent aliased in/out
            return conv_eps_ddim(h, self.u_w3_mat, self.u_b3_row, lat,
                                 noise_table[i], coef_table[i])

        latent = jax.lax.fori_loop(0, custom_steps, body, latent0)

        sr = self._tensor_decode(latent[:M].reshape(B, H, W, z))            # (B,4H,4W,C)
        return jnp.transpose(sr, (0, 3, 1, 2))                              # back to NCHW


# ----------------------------------------------------------------------------
if __name__ == "__main__":
    key = jax.random.PRNGKey(0)
    k_x, k_model, k_fwd = jax.random.split(key, 3)

    model = SRLatentDiffusionPallas(bands="10m", key=k_model)

    # Sentinel-2-like reflectances in [0, 1]: B=2, C=4, H=W=16  ->  SR (2,4,64,64)
    X = jax.random.uniform(k_x, (2, 4, 16, 16), dtype=jnp.float32)

    fwd = jax.jit(functools.partial(model.forward, eta=1.0, custom_steps=4,
                                    temperature=1.0))
    sr = jax.block_until_ready(fwd(X, k_fwd))

    assert sr.shape == (2, 4, 64, 64), sr.shape
    assert bool(jnp.all(sr >= 0.0))           # X_dec[X_dec < 0] = 0 (fused relu)
    assert bool(jnp.all(jnp.isfinite(sr)))
    print("KERNEL_OK")
</pallas_src>

<mosaic_0001>
module attributes {stable_mosaic.version = 11 : i64} {
  func.func @_matmul_fused2_kernel(%arg0: i32, %arg1: memref<128x36xbf16, #tpu.memory_space<vmem>>, %arg2: memref<36x32xbf16, #tpu.memory_space<vmem>>, %arg3: memref<1x32xf32, #tpu.memory_space<vmem>>, %arg4: memref<32x8xbf16, #tpu.memory_space<vmem>>, %arg5: memref<1x8xf32, #tpu.memory_space<vmem>>, %arg6: memref<128x8xf32, #tpu.memory_space<vmem>>) attributes {dimension_semantics = [#tpu.dimension_semantics<parallel>], iteration_bounds = array<i64: 4>, scalar_prefetch = 0 : i64, scratch_operands = 0 : i64, tpu.core_type = #tpu.core_type<tc>, window_params = [{transform_indices = @transform_0, window_bounds = array<i64: 128, 36>}, {pipeline_mode = #tpu.pipeline_mode<synchronous>, transform_indices = @transform_1, window_bounds = array<i64: 36, 32>}, {pipeline_mode = #tpu.pipeline_mode<synchronous>, transform_indices = @transform_2, window_bounds = array<i64: 1, 32>}, {pipeline_mode = #tpu.pipeline_mode<synchronous>, transform_indices = @transform_3, window_bounds = array<i64: 32, 8>}, {pipeline_mode = #tpu.pipeline_mode<synchronous>, transform_indices = @transform_4, window_bounds = array<i64: 1, 8>}, {transform_indices = @transform_5, window_bounds = array<i64: 128, 8>}]} {
    %c0 = arith.constant 0 : index
    %c0_0 = arith.constant 0 : index
    %0 = vector.load %arg1[%c0, %c0_0] : memref<128x36xbf16, #tpu.memory_space<vmem>>, vector<128x36xbf16>
    %c0_1 = arith.constant 0 : index
    %c0_2 = arith.constant 0 : index
    %1 = vector.load %arg2[%c0_1, %c0_2] : memref<36x32xbf16, #tpu.memory_space<vmem>>, vector<36x32xbf16>
    %cst = arith.constant dense<0.000000e+00> : vector<128x32xf32>
    %2 = tpu.matmul %0, %1, %cst {dimension_numbers = #tpu.dot_dimension_numbers<[1], [0], [0], [1], [0, 0, 1, 1], [], []>} : vector<128x36xbf16>, vector<36x32xbf16>, vector<128x32xf32> -> vector<128x32xf32>
    %c0_3 = arith.constant 0 : index
    %c0_4 = arith.constant 0 : index
    %3 = vector.load %arg3[%c0_3, %c0_4] : memref<1x32xf32, #tpu.memory_space<vmem>>, vector<1x32xf32>
    %4 = vector.broadcast %3 : vector<1x32xf32> to vector<128x32xf32>
    %5 = arith.addf %2, %4 : vector<128x32xf32>
    %6 = arith.negf %5 : vector<128x32xf32>
    %7 = math.exp %6 : vector<128x32xf32>
    %cst_5 = arith.constant 1.000000e+00 : f32
    %8 = vector.broadcast %cst_5 : f32 to vector<128x32xf32>
    %9 = arith.addf %8, %7 : vector<128x32xf32>
    %10 = arith.divf %8, %9 : vector<128x32xf32>
    %11 = arith.mulf %5, %10 : vector<128x32xf32>
    %12 = arith.truncf %11 : vector<128x32xf32> to vector<128x32xbf16>
    %c0_6 = arith.constant 0 : index
    %c0_7 = arith.constant 0 : index
    %13 = vector.load %arg4[%c0_6, %c0_7] : memref<32x8xbf16, #tpu.memory_space<vmem>>, vector<32x8xbf16>
    %cst_8 = arith.constant dense<0.000000e+00> : vector<128x8xf32>
    %14 = tpu.matmul %12, %13, %cst_8 {dimension_numbers = #tpu.dot_dimension_numbers<[1], [0], [0], [1], [0, 0, 1, 1], [], []>} : vector<128x32xbf16>, vector<32x8xbf16>, vector<128x8xf32> -> vector<128x8xf32>
    %c0_9 = arith.constant 0 : index
    %c0_10 = arith.constant 0 : index
    %15 = vector.load %arg5[%c0_9, %c0_10] : memref<1x8xf32, #tpu.memory_space<vmem>>, vector<1x8xf32>
    %16 = vector.broadcast %15 : vector<1x8xf32> to vector<128x8xf32>
    %17 = arith.addf %14, %16 : vector<128x8xf32>
    %c0_11 = arith.constant 0 : index
    %c0_12 = arith.constant 0 : index
    %18 = vector.load %arg6[%c0_11, %c0_12] : memref<128x8xf32, #tpu.memory_space<vmem>>, vector<128x8xf32>
    tpu.vector_store %arg6[%c0_11, %c0_12], %17 {strides = array<i32>} : memref<128x8xf32, #tpu.memory_space<vmem>>, vector<128x8xf32>,
    return
  }
  func.func @transform_0(%arg0: i32) -> (i32, i32) {
    %c0_i32 = arith.constant 0 : i32
    %c0_i32_0 = arith.constant 0 : i32
    return %arg0, %c0_i32 : i32, i32
  }
  func.func @transform_1(%arg0: i32) -> (i32, i32) {
    %c0_i32 = arith.constant 0 : i32
    %c0_i32_0 = arith.constant 0 : i32
    %c0_i32_1 = arith.constant 0 : i32
    return %c0_i32, %c0_i32_0 : i32, i32
  }
  func.func @transform_2(%arg0: i32) -> (i32, i32) {
    %c0_i32 = arith.constant 0 : i32
    %c0_i32_0 = arith.constant 0 : i32
    %c0_i32_1 = arith.constant 0 : i32
    return %c0_i32, %c0_i32_0 : i32, i32
  }
  func.func @transform_3(%arg0: i32) -> (i32, i32) {
    %c0_i32 = arith.constant 0 : i32
    %c0_i32_0 = arith.constant 0 : i32
    %c0_i32_1 = arith.constant 0 : i32
    return %c0_i32, %c0_i32_0 : i32, i32
  }
  func.func @transform_4(%arg0: i32) -> (i32, i32) {
    %c0_i32 = arith.constant 0 : i32
    %c0_i32_0 = arith.constant 0 : i32
    %c0_i32_1 = arith.constant 0 : i32
    return %c0_i32, %c0_i32_0 : i32, i32
  }
  func.func @transform_5(%arg0: i32) -> (i32, i32) {
    %c0_i32 = arith.constant 0 : i32
    %c0_i32_0 = arith.constant 0 : i32
    return %arg0, %c0_i32 : i32, i32
  }
}

module attributes {stable_mosaic.version = 11 : i64} {
  func.func @_matmul_bias_kernel(%arg0: i32, %arg1: memref<128x72xbf16, #tpu.memory_space<vmem>>, %arg2: memref<72x32xbf16, #tpu.memory_space<vmem>>, %arg3: memref<1x32xf32, #tpu.memory_space<vmem>>, %arg4: memref<128x32xbf16, #tpu.memory_space<vmem>>) attributes {dimension_semantics = [#tpu.dimension_semantics<parallel>], iteration_bounds = array<i64: 4>, scalar_prefetch = 0 : i64, scratch_operands = 0 : i64, tpu.core_type = #tpu.core_type<tc>, window_params = [{transform_indices = @transform_0, window_bounds = array<i64: 128, 72>}, {pipeline_mode = #tpu.pipeline_mode<synchronous>, transform_indices = @transform_1, window_bounds = array<i64: 72, 32>}, {pipeline_mode = #tpu.pipeline_mode<synchronous>, transform_indices = @transform_2, window_bounds = array<i64: 1, 32>}, {transform_indices = @transform_3, window_bounds = array<i64: 128, 32>}]} {
    %c0 = arith.constant 0 : index
    %c0_0 = arith.constant 0 : index
    %0 = vector.load %arg1[%c0, %c0_0] : memref<128x72xbf16, #tpu.memory_space<vmem>>, vector<128x72xbf16>
    %c0_1 = arith.constant 0 : index
    %c0_2 = arith.constant 0 : index
    %1 = vector.load %arg2[%c0_1, %c0_2] : memref<72x32xbf16, #tpu.memory_space<vmem>>, vector<72x32xbf16>
    %cst = arith.constant dense<0.000000e+00> : vector<128x32xf32>
    %2 = tpu.matmul %0, %1, %cst {dimension_numbers = #tpu.dot_dimension_numbers<[1], [0], [0], [1], [0, 0, 1, 1], [], []>} : vector<128x72xbf16>, vector<72x32xbf16>, vector<128x32xf32> -> vector<128x32xf32>
    %c0_3 = arith.constant 0 : index
    %c0_4 = arith.constant 0 : index
    %3 = vector.load %arg3[%c0_3, %c0_4] : memref<1x32xf32, #tpu.memory_space<vmem>>, vector<1x32xf32>
    %4 = vector.broadcast %3 : vector<1x32xf32> to vector<128x32xf32>
    %5 = arith.addf %2, %4 : vector<128x32xf32>
    %6 = arith.negf %5 : vector<128x32xf32>
    %7 = math.exp %6 : vector<128x32xf32>
    %cst_5 = arith.constant 1.000000e+00 : f32
    %8 = vector.broadcast %cst_5 : f32 to vector<128x32xf32>
    %9 = arith.addf %8, %7 : vector<128x32xf32>
    %10 = arith.divf %8, %9 : vector<128x32xf32>
    %11 = arith.mulf %5, %10 : vector<128x32xf32>
    %12 = arith.truncf %11 : vector<128x32xf32> to vector<128x32xbf16>
    %c0_6 = arith.constant 0 : index
    %c0_7 = arith.constant 0 : index
    %13 = vector.load %arg4[%c0_6, %c0_7] : memref<128x32xbf16, #tpu.memory_space<vmem>>, vector<128x32xbf16>
    tpu.vector_store %arg4[%c0_6, %c0_7], %12 {strides = array<i32>} : memref<128x32xbf16, #tpu.memory_space<vmem>>, vector<128x32xbf16>,
    return
  }
  func.func @transform_0(%arg0: i32) -> (i32, i32) {
    %c0_i32 = arith.constant 0 : i32
    %c0_i32_0 = arith.constant 0 : i32
    return %arg0, %c0_i32 : i32, i32
  }
  func.func @transform_1(%arg0: i32) -> (i32, i32) {
    %c0_i32 = arith.constant 0 : i32
    %c0_i32_0 = arith.constant 0 : i32
    %c0_i32_1 = arith.constant 0 : i32
    return %c0_i32, %c0_i32_0 : i32, i32
  }
  func.func @transform_2(%arg0: i32) -> (i32, i32) {
    %c0_i32 = arith.constant 0 : i32
    %c0_i32_0 = arith.constant 0 : i32
    %c0_i32_1 = arith.constant 0 : i32
    return %c0_i32, %c0_i32_0 : i32, i32
  }
  func.func @transform_3(%arg0: i32) -> (i32, i32) {
    %c0_i32 = arith.constant 0 : i32
    %c0_i32_0 = arith.constant 0 : i32
    return %arg0, %c0_i32 : i32, i32
  }
}

module attributes {stable_mosaic.version = 11 : i64} {
  func.func @_matmul_bias_kernel(%arg0: i32, %arg1: memref<128x288xbf16, #tpu.memory_space<vmem>>, %arg2: memref<288x32xbf16, #tpu.memory_space<vmem>>, %arg3: memref<1x32xf32, #tpu.memory_space<vmem>>, %arg4: memref<128x32xbf16, #tpu.memory_space<vmem>>) attributes {dimension_semantics = [#tpu.dimension_semantics<parallel>], iteration_bounds = array<i64: 4>, scalar_prefetch = 0 : i64, scratch_operands = 0 : i64, tpu.core_type = #tpu.core_type<tc>, window_params = [{transform_indices = @transform_0, window_bounds = array<i64: 128, 288>}, {pipeline_mode = #tpu.pipeline_mode<synchronous>, transform_indices = @transform_1, window_bounds = array<i64: 288, 32>}, {pipeline_mode = #tpu.pipeline_mode<synchronous>, transform_indices = @transform_2, window_bounds = array<i64: 1, 32>}, {transform_indices = @transform_3, window_bounds = array<i64: 128, 32>}]} {
    %c0 = arith.constant 0 : index
    %c0_0 = arith.constant 0 : index
    %0 = vector.load %arg1[%c0, %c0_0] : memref<128x288xbf16, #tpu.memory_space<vmem>>, vector<128x288xbf16>
    %c0_1 = arith.constant 0 : index
    %c0_2 = arith.constant 0 : index
    %1 = vector.load %arg2[%c0_1, %c0_2] : memref<288x32xbf16, #tpu.memory_space<vmem>>, vector<288x32xbf16>
    %cst = arith.constant dense<0.000000e+00> : vector<128x32xf32>
    %2 = tpu.matmul %0, %1, %cst {dimension_numbers = #tpu.dot_dimension_numbers<[1], [0], [0], [1], [0, 0, 1, 1], [], []>} : vector<128x288xbf16>, vector<288x32xbf16>, vector<128x32xf32> -> vector<128x32xf32>
    %c0_3 = arith.constant 0 : index
    %c0_4 = arith.constant 0 : index
    %3 = vector.load %arg3[%c0_3, %c0_4] : memref<1x32xf32, #tpu.memory_space<vmem>>, vector<1x32xf32>
    %4 = vector.broadcast %3 : vector<1x32xf32> to vector<128x32xf32>
    %5 = arith.addf %2, %4 : vector<128x32xf32>
    %6 = arith.negf %5 : vector<128x32xf32>
    %7 = math.exp %6 : vector<128x32xf32>
    %cst_5 = arith.constant 1.000000e+00 : f32
    %8 = vector.broadcast %cst_5 : f32 to vector<128x32xf32>
    %9 = arith.addf %8, %7 : vector<128x32xf32>
    %10 = arith.divf %8, %9 : vector<128x32xf32>
    %11 = arith.mulf %5, %10 : vector<128x32xf32>
    %12 = arith.truncf %11 : vector<128x32xf32> to vector<128x32xbf16>
    %c0_6 = arith.constant 0 : index
    %c0_7 = arith.constant 0 : index
    %13 = vector.load %arg4[%c0_6, %c0_7] : memref<128x32xbf16, #tpu.memory_space<vmem>>, vector<128x32xbf16>
    tpu.vector_store %arg4[%c0_6, %c0_7], %12 {strides = array<i32>} : memref<128x32xbf16, #tpu.memory_space<vmem>>, vector<128x32xbf16>,
    return
  }
  func.func @transform_0(%arg0: i32) -> (i32, i32) {
    %c0_i32 = arith.constant 0 : i32
    %c0_i32_0 = arith.constant 0 : i32
    return %arg0, %c0_i32 : i32, i32
  }
  func.func @transform_1(%arg0: i32) -> (i32, i32) {
    %c0_i32 = arith.constant 0 : i32
    %c0_i32_0 = arith.constant 0 : i32
    %c0_i32_1 = arith.constant 0 : i32
    return %c0_i32, %c0_i32_0 : i32, i32
  }
  func.func @transform_2(%arg0: i32) -> (i32, i32) {
    %c0_i32 = arith.constant 0 : i32
    %c0_i32_0 = arith.constant 0 : i32
    %c0_i32_1 = arith.constant 0 : i32
    return %c0_i32, %c0_i32_0 : i32, i32
  }
  func.func @transform_3(%arg0: i32) -> (i32, i32) {
    %c0_i32 = arith.constant 0 : i32
    %c0_i32_0 = arith.constant 0 : i32
    return %arg0, %c0_i32 : i32, i32
  }
}

module attributes {stable_mosaic.version = 11 : i64} {
  func.func @_conv_ddim_kernel(%arg0: i32, %arg1: memref<8xf32, #tpu.memory_space<smem>>, %arg2: memref<128x288xbf16, #tpu.memory_space<vmem>>, %arg3: memref<288x4xbf16, #tpu.memory_space<vmem>>, %arg4: memref<1x4xf32, #tpu.memory_space<vmem>>, %arg5: memref<128x4xf32, #tpu.memory_space<vmem>>, %arg6: memref<128x4xf32, #tpu.memory_space<vmem>>, %arg7: memref<128x4xf32, #tpu.memory_space<vmem>>) attributes {dimension_semantics = [#tpu.dimension_semantics<parallel>], iteration_bounds = array<i64: 4>, scalar_prefetch = 0 : i64, scratch_operands = 0 : i64, tpu.core_type = #tpu.core_type<tc>, window_params = [{transform_indices = @transform_0, window_bounds = array<i64: 8>}, {transform_indices = @transform_1, window_bounds = array<i64: 128, 288>}, {pipeline_mode = #tpu.pipeline_mode<synchronous>, transform_indices = @transform_2, window_bounds = array<i64: 288, 4>}, {pipeline_mode = #tpu.pipeline_mode<synchronous>, transform_indices = @transform_3, window_bounds = array<i64: 1, 4>}, {transform_indices = @transform_4, window_bounds = array<i64: 128, 4>}, {transform_indices = @transform_5, window_bounds = array<i64: 128, 4>}, {transform_indices = @transform_6, window_bounds = array<i64: 128, 4>}]} {
    %c0 = arith.constant 0 : index
    %c0_0 = arith.constant 0 : index
    %0 = vector.load %arg2[%c0, %c0_0] : memref<128x288xbf16, #tpu.memory_space<vmem>>, vector<128x288xbf16>
    %c0_1 = arith.constant 0 : index
    %c0_2 = arith.constant 0 : index
    %1 = vector.load %arg3[%c0_1, %c0_2] : memref<288x4xbf16, #tpu.memory_space<vmem>>, vector<288x4xbf16>
    %cst = arith.constant dense<0.000000e+00> : vector<128x4xf32>
    %2 = tpu.matmul %0, %1, %cst {dimension_numbers = #tpu.dot_dimension_numbers<[1], [0], [0], [1], [0, 0, 1, 1], [], []>} : vector<128x288xbf16>, vector<288x4xbf16>, vector<128x4xf32> -> vector<128x4xf32>
    %c0_3 = arith.constant 0 : index
    %c0_4 = arith.constant 0 : index
    %3 = vector.load %arg4[%c0_3, %c0_4] : memref<1x4xf32, #tpu.memory_space<vmem>>, vector<1x4xf32>
    %4 = vector.broadcast %3 : vector<1x4xf32> to vector<128x4xf32>
    %5 = arith.addf %2, %4 : vector<128x4xf32>
    %c0_5 = arith.constant 0 : index
    %c0_6 = arith.constant 0 : index
    %6 = vector.load %arg5[%c0_5, %c0_6] : memref<128x4xf32, #tpu.memory_space<vmem>>, vector<128x4xf32>
    %c1 = arith.constant 1 : index
    %7 = memref.load %arg1[%c1] : memref<8xf32, #tpu.memory_space<smem>>
    %8 = vector.broadcast %7 : f32 to vector<128x4xf32>
    %9 = arith.mulf %8, %5 : vector<128x4xf32>
    %10 = arith.subf %6, %9 : vector<128x4xf32>
    %c0_7 = arith.constant 0 : index
    %11 = memref.load %arg1[%c0_7] : memref<8xf32, #tpu.memory_space<smem>>
    %12 = vector.broadcast %11 : f32 to vector<128x4xf32>
    %13 = arith.mulf %10, %12 : vector<128x4xf32>
    %c2 = arith.constant 2 : index
    %14 = memref.load %arg1[%c2] : memref<8xf32, #tpu.memory_space<smem>>
    %15 = vector.broadcast %14 : f32 to vector<128x4xf32>
    %16 = arith.mulf %15, %13 : vector<128x4xf32>
    %c3 = arith.constant 3 : index
    %17 = memref.load %arg1[%c3] : memref<8xf32, #tpu.memory_space<smem>>
    %18 = vector.broadcast %17 : f32 to vector<128x4xf32>
    %19 = arith.mulf %18, %5 : vector<128x4xf32>
    %20 = arith.addf %16, %19 : vector<128x4xf32>
    %c4 = arith.constant 4 : index
    %21 = memref.load %arg1[%c4] : memref<8xf32, #tpu.memory_space<smem>>
    %c0_8 = arith.constant 0 : index
    %c0_9 = arith.constant 0 : index
    %22 = vector.load %arg6[%c0_8, %c0_9] : memref<128x4xf32, #tpu.memory_space<vmem>>, vector<128x4xf32>
    %23 = vector.broadcast %21 : f32 to vector<128x4xf32>
    %24 = arith.mulf %23, %22 : vector<128x4xf32>
    %25 = arith.addf %20, %24 : vector<128x4xf32>
    %c0_10 = arith.constant 0 : index
    %c0_11 = arith.constant 0 : index
    %26 = vector.load %arg7[%c0_10, %c0_11] : memref<128x4xf32, #tpu.memory_space<vmem>>, vector<128x4xf32>
    tpu.vector_store %arg7[%c0_10, %c0_11], %25 {strides = array<i32>} : memref<128x4xf32, #tpu.memory_space<vmem>>, vector<128x4xf32>,
    return
  }
  func.func @transform_0(%arg0: i32) -> i32 {
    %c0_i32 = arith.constant 0 : i32
    %c0_i32_0 = arith.constant 0 : i32
    return %c0_i32 : i32
  }
  func.func @transform_1(%arg0: i32) -> (i32, i32) {
    %c0_i32 = arith.constant 0 : i32
    %c0_i32_0 = arith.constant 0 : i32
    return %arg0, %c0_i32 : i32, i32
  }
  func.func @transform_2(%arg0: i32) -> (i32, i32) {
    %c0_i32 = arith.constant 0 : i32
    %c0_i32_0 = arith.constant 0 : i32
    %c0_i32_1 = arith.constant 0 : i32
    return %c0_i32, %c0_i32_0 : i32, i32
  }
  func.func @transform_3(%arg0: i32) -> (i32, i32) {
    %c0_i32 = arith.constant 0 : i32
    %c0_i32_0 = arith.constant 0 : i32
    %c0_i32_1 = arith.constant 0 : i32
    return %c0_i32, %c0_i32_0 : i32, i32
  }
  func.func @transform_4(%arg0: i32) -> (i32, i32) {
    %c0_i32 = arith.constant 0 : i32
    %c0_i32_0 = arith.constant 0 : i32
    return %arg0, %c0_i32 : i32, i32
  }
  func.func @transform_5(%arg0: i32) -> (i32, i32) {
    %c0_i32 = arith.constant 0 : i32
    %c0_i32_0 = arith.constant 0 : i32
    return %arg0, %c0_i32 : i32, i32
  }
  func.func @transform_6(%arg0: i32) -> (i32, i32) {
    %c0_i32 = arith.constant 0 : i32
    %c0_i32_0 = arith.constant 0 : i32
    return %arg0, %c0_i32 : i32, i32
  }
}

module attributes {stable_mosaic.version = 11 : i64} {
  func.func @_matmul_fused2_kernel(%arg0: i32, %arg1: memref<128x36xbf16, #tpu.memory_space<vmem>>, %arg2: memref<36x32xbf16, #tpu.memory_space<vmem>>, %arg3: memref<1x32xf32, #tpu.memory_space<vmem>>, %arg4: memref<32x64xbf16, #tpu.memory_space<vmem>>, %arg5: memref<1x64xf32, #tpu.memory_space<vmem>>, %arg6: memref<128x64xf32, #tpu.memory_space<vmem>>) attributes {dimension_semantics = [#tpu.dimension_semantics<parallel>], iteration_bounds = array<i64: 4>, scalar_prefetch = 0 : i64, scratch_operands = 0 : i64, tpu.core_type = #tpu.core_type<tc>, window_params = [{transform_indices = @transform_0, window_bounds = array<i64: 128, 36>}, {pipeline_mode = #tpu.pipeline_mode<synchronous>, transform_indices = @transform_1, window_bounds = array<i64: 36, 32>}, {pipeline_mode = #tpu.pipeline_mode<synchronous>, transform_indices = @transform_2, window_bounds = array<i64: 1, 32>}, {pipeline_mode = #tpu.pipeline_mode<synchronous>, transform_indices = @transform_3, window_bounds = array<i64: 32, 64>}, {pipeline_mode = #tpu.pipeline_mode<synchronous>, transform_indices = @transform_4, window_bounds = array<i64: 1, 64>}, {transform_indices = @transform_5, window_bounds = array<i64: 128, 64>}]} {
    %c0 = arith.constant 0 : index
    %c0_0 = arith.constant 0 : index
    %0 = vector.load %arg1[%c0, %c0_0] : memref<128x36xbf16, #tpu.memory_space<vmem>>, vector<128x36xbf16>
    %c0_1 = arith.constant 0 : index
    %c0_2 = arith.constant 0 : index
    %1 = vector.load %arg2[%c0_1, %c0_2] : memref<36x32xbf16, #tpu.memory_space<vmem>>, vector<36x32xbf16>
    %cst = arith.constant dense<0.000000e+00> : vector<128x32xf32>
    %2 = tpu.matmul %0, %1, %cst {dimension_numbers = #tpu.dot_dimension_numbers<[1], [0], [0], [1], [0, 0, 1, 1], [], []>} : vector<128x36xbf16>, vector<36x32xbf16>, vector<128x32xf32> -> vector<128x32xf32>
    %c0_3 = arith.constant 0 : index
    %c0_4 = arith.constant 0 : index
    %3 = vector.load %arg3[%c0_3, %c0_4] : memref<1x32xf32, #tpu.memory_space<vmem>>, vector<1x32xf32>
    %4 = vector.broadcast %3 : vector<1x32xf32> to vector<128x32xf32>
    %5 = arith.addf %2, %4 : vector<128x32xf32>
    %6 = arith.negf %5 : vector<128x32xf32>
    %7 = math.exp %6 : vector<128x32xf32>
    %cst_5 = arith.constant 1.000000e+00 : f32
    %8 = vector.broadcast %cst_5 : f32 to vector<128x32xf32>
    %9 = arith.addf %8, %7 : vector<128x32xf32>
    %10 = arith.divf %8, %9 : vector<128x32xf32>
    %11 = arith.mulf %5, %10 : vector<128x32xf32>
    %12 = arith.truncf %11 : vector<128x32xf32> to vector<128x32xbf16>
    %c0_6 = arith.constant 0 : index
    %c0_7 = arith.constant 0 : index
    %13 = vector.load %arg4[%c0_6, %c0_7] : memref<32x64xbf16, #tpu.memory_space<vmem>>, vector<32x64xbf16>
    %cst_8 = arith.constant dense<0.000000e+00> : vector<128x64xf32>
    %14 = tpu.matmul %12, %13, %cst_8 {dimension_numbers = #tpu.dot_dimension_numbers<[1], [0], [0], [1], [0, 0, 1, 1], [], []>} : vector<128x32xbf16>, vector<32x64xbf16>, vector<128x64xf32> -> vector<128x64xf32>
    %c0_9 = arith.constant 0 : index
    %c0_10 = arith.constant 0 : index
    %15 = vector.load %arg5[%c0_9, %c0_10] : memref<1x64xf32, #tpu.memory_space<vmem>>, vector<1x64xf32>
    %16 = vector.broadcast %15 : vector<1x64xf32> to vector<128x64xf32>
    %17 = arith.addf %14, %16 : vector<128x64xf32>
    %cst_11 = arith.constant 0.000000e+00 : f32
    %18 = vector.broadcast %cst_11 : f32 to vector<128x64xf32>
    %19 = arith.maximumf %17, %18 : vector<128x64xf32>
    %c0_12 = arith.constant 0 : index
    %c0_13 = arith.constant 0 : index
    %20 = vector.load %arg6[%c0_12, %c0_13] : memref<128x64xf32, #tpu.memory_space<vmem>>, vector<128x64xf32>
    tpu.vector_store %arg6[%c0_12, %c0_13], %19 {strides = array<i32>} : memref<128x64xf32, #tpu.memory_space<vmem>>, vector<128x64xf32>,
    return
  }
  func.func @transform_0(%arg0: i32) -> (i32, i32) {
    %c0_i32 = arith.constant 0 : i32
    %c0_i32_0 = arith.constant 0 : i32
    return %arg0, %c0_i32 : i32, i32
  }
  func.func @transform_1(%arg0: i32) -> (i32, i32) {
    %c0_i32 = arith.constant 0 : i32
    %c0_i32_0 = arith.constant 0 : i32
    %c0_i32_1 = arith.constant 0 : i32
    return %c0_i32, %c0_i32_0 : i32, i32
  }
  func.func @transform_2(%arg0: i32) -> (i32, i32) {
    %c0_i32 = arith.constant 0 : i32
    %c0_i32_0 = arith.constant 0 : i32
    %c0_i32_1 = arith.constant 0 : i32
    return %c0_i32, %c0_i32_0 : i32, i32
  }
  func.func @transform_3(%arg0: i32) -> (i32, i32) {
    %c0_i32 = arith.constant 0 : i32
    %c0_i32_0 = arith.constant 0 : i32
    %c0_i32_1 = arith.constant 0 : i32
    return %c0_i32, %c0_i32_0 : i32, i32
  }
  func.func @transform_4(%arg0: i32) -> (i32, i32) {
    %c0_i32 = arith.constant 0 : i32
    %c0_i32_0 = arith.constant 0 : i32
    %c0_i32_1 = arith.constant 0 : i32
    return %c0_i32, %c0_i32_0 : i32, i32
  }
  func.func @transform_5(%arg0: i32) -> (i32, i32) {
    %c0_i32 = arith.constant 0 : i32
    %c0_i32_0 = arith.constant 0 : i32
    return %arg0, %c0_i32 : i32, i32
  }
}

</mosaic_0001>

<llo_original>
// kernel: forward.2
$region0: #{forward.2}
  #allocation0 [shape = 'u32[]', space=smem, size = 0x4, offset = 0x4, fixed_abs, tag = 'smem constant byte address 0x4 - core index']
  #allocation1 [shape = 'u32[144,128]{1,0:T(1,128)}', space=vmem, size = 0x12000, scoped, tag = 'internal scratch']
  %s0 = inlined_call_operand.vmem [shape: bf16[512,36], index: 0, kind: input, shape index: {}]
  %s1 = inlined_call_operand.vmem [shape: bf16[36,32], index: 1, kind: input, shape index: {}]
  %s2 = inlined_call_operand.vmem [shape: f32[1,32], index: 2, kind: input, shape index: {}]
  %s3 = inlined_call_operand.vmem [shape: bf16[32,8], index: 3, kind: input, shape index: {}]
  %s4 = inlined_call_operand.vmem [shape: f32[1,8], index: 4, kind: input, shape index: {}]
  %s5 = inlined_call_operand.vmem [shape: f32[512,8], index: 5, kind: output, shape index: {}]
  %s6 = sld [smem:[#allocation0]]
  $region53: #{forward.2} parent=0
    _
  %s8 = ssub.s32 1, %s6
  %s9 = scalar_select 0, %s8, %s6
  loop: start=0, step=1, limit=6
  $region2: #{forward.2} parent=0 // loop_pre_header
    _
  $region3: #{forward.2} parent=0 // loop_header
    %s11 = sphi 0, %s15
    %p12 = scmp.ge.s32.totalorder %s11, 6
    %s21 = sphi 0, %s23
    %s24 = sphi 0, %s21
    %s25 = sphi 0, %s24
    %s41 = sphi 0, %s25
    %s45 = sphi 0, %s45
    %s47 = sphi 0, %s45
    %s48 = sphi 0, %s47
    %s62 = sphi 0, %s48
    %s66 = sphi 0, %s66
    %s68 = sphi 0, %s66
    %s69 = sphi 0, %s68
    %s83 = sphi 0, %s69
    %s87 = sphi 0, %s87
    %s89 = sphi 0, %s87
    %s90 = sphi 0, %s89
    %s104 = sphi 0, %s90
    %s108 = sphi 0, %s108
    %s110 = sphi 0, %s108
    %s111 = sphi 0, %s110
    %s125 = sphi 0, %s111
    %s131 = sphi 0, %s133
    %s134 = sphi 0, %s131
    %s135 = sphi 0, %s134
    %s151 = sphi 0, %s135
  $region4: #{forward.2} parent=0 // loop_header_branch
    %14 = sbr.rel (%p12) target = $region8
  $region5: #{forward.2} parent=0 // loop_body
    %s16 = ssub.s32 %s11, 1
    %s17 = ssub.s32 %s11, 2
    %s18 = sadd.s32 %s11, 1
    %s19 = ssub.s32 %s11, %s18
    %p20 = scmp.eq.s32.totalorder %s19, 0
    %s22 = sadd.s32 %s21, 1
    %s23 = scalar_select %p20, %s21, %s22
    %p26 = pneg %p20
    %p27 = scmp.eq.s32.totalorder %s11, 3
    %p28 = por %p26, %p27
    %p29 = scmp.ne.s32.totalorder %s21, %s24
    %p30 = scmp.eq.s32.totalorder %s11, 0
    %p31 = por %p29, %p30
    %p32 = scmp.ne.s32.totalorder %s21, %s24
    %p33 = scmp.eq.s32.totalorder %s16, 3
    %p34 = por %p32, %p33
    %p35 = scmp.ne.s32.totalorder %s24, %s25
    %p36 = scmp.eq.s32.totalorder %s16, 0
    %p37 = por %p35, %p36
    %p38 = scmp.ne.s32.totalorder %s24, %s25
    %p39 = scmp.eq.s32.totalorder %s17, 3
    %p40 = por %p38, %p39
    %p42 = scmp.ne.s32.totalorder %s25, %s41
    %p43 = scmp.eq.s32.totalorder %s17, 0
    %p44 = por %p42, %p43
    %s46 = sadd.s32 %s45, 1
    %p49 = scmp.eq.s32.totalorder %s11, 3
    %p50 = scmp.ne.s32.totalorder %s45, %s47
    %p51 = scmp.eq.s32.totalorder %s11, 0
    %p52 = por %p50, %p51
    %p53 = scmp.ne.s32.totalorder %s45, %s47
    %p54 = scmp.eq.s32.totalorder %s16, 3
    %p55 = por %p53, %p54
    %p56 = scmp.ne.s32.totalorder %s47, %s48
    %p57 = scmp.eq.s32.totalorder %s16, 0
    %p58 = por %p56, %p57
    %p59 = scmp.ne.s32.totalorder %s47, %s48
    %p60 = scmp.eq.s32.totalorder %s17, 3
    %p61 = por %p59, %p60
    %p63 = scmp.ne.s32.totalorder %s48, %s62
    %p64 = scmp.eq.s32.totalorder %s17, 0
    %p65 = por %p63, %p64
    %s67 = sadd.s32 %s66, 1
    %p70 = scmp.eq.s32.totalorder %s11, 3
    %p71 = scmp.ne.s32.totalorder %s66, %s68
    %p72 = scmp.eq.s32.totalorder %s11, 0
    %p73 = por %p71, %p72
    %p74 = scmp.ne.s32.totalorder %s66, %s68
    %p75 = scmp.eq.s32.totalorder %s16, 3
    %p76 = por %p74, %p75
    %p77 = scmp.ne.s32.totalorder %s68, %s69
    %p78 = scmp.eq.s32.totalorder %s16, 0
    %p79 = por %p77, %p78
    %p80 = scmp.ne.s32.totalorder %s68, %s69
    %p81 = scmp.eq.s32.totalorder %s17, 3
    %p82 = por %p80, %p81
    %p84 = scmp.ne.s32.totalorder %s69, %s83
    %p85 = scmp.eq.s32.totalorder %s17, 0
    %p86 = por %p84, %p85
    %s88 = sadd.s32 %s87, 1
    %p91 = scmp.eq.s32.totalorder %s11, 3
    %p92 = scmp.ne.s32.totalorder %s87, %s89
    %p93 = scmp.eq.s32.totalorder %s11, 0
    %p94 = por %p92, %p93
    %p95 = scmp.ne.s32.totalorder %s87, %s89
    %p96 = scmp.eq.s32.totalorder %s16, 3
    %p97 = por %p95, %p96
    %p98 = scmp.ne.s32.totalorder %s89, %s90
    %p99 = scmp.eq.s32.totalorder %s16, 0
    %p100 = por %p98, %p99
    %p101 = scmp.ne.s32.totalorder %s89, %s90
    %p102 = scmp.eq.s32.totalorder %s17, 3
    %p103 = por %p101, %p102
    %p105 = scmp.ne.s32.totalorder %s90, %s104
    %p106 = scmp.eq.s32.totalorder %s17, 0
    %p107 = por %p105, %p106
    %s109 = sadd.s32 %s108, 1
    %p112 = scmp.eq.s32.totalorder %s11, 3
    %p113 = scmp.ne.s32.totalorder %s108, %s110
    %p114 = scmp.eq.s32.totalorder %s11, 0
    %p115 = por %p113, %p114
    %p116 = scmp.ne.s32.totalorder %s108, %s110
    %p117 = scmp.eq.s32.totalorder %s16, 3
    %p118 = por %p116, %p117
    %p119 = scmp.ne.s32.totalorder %s110, %s111
    %p120 = scmp.eq.s32.totalorder %s16, 0
    %p121 = por %p119, %p120
    %p122 = scmp.ne.s32.totalorder %s110, %s111
    %p123 = scmp.eq.s32.totalorder %s17, 3
    %p124 = por %p122, %p123
    %p126 = scmp.ne.s32.totalorder %s111, %s125
    %p127 = scmp.eq.s32.totalorder %s17, 0
    %p128 = por %p126, %p127
    %s129 = ssub.s32 %s11, %s18
    %p130 = scmp.eq.s32.totalorder %s129, 0
    %s132 = sadd.s32 %s131, 1
    %s133 = scalar_select %p130, %s131, %s132
    %p136 = pneg %p130
    %p137 = scmp.eq.s32.totalorder %s11, 3
    %p138 = por %p136, %p137
    %p139 = scmp.ne.s32.totalorder %s131, %s134
    %p140 = scmp.eq.s32.totalorder %s11, 0
    %p141 = por %p139, %p140
    %p142 = scmp.ne.s32.totalorder %s131, %s134
    %p143 = scmp.eq.s32.totalorder %s16, 3
    %p144 = por %p142, %p143
    %p145 = scmp.ne.s32.totalorder %s134, %s135
    %p146 = scmp.eq.s32.totalorder %s16, 0
    %p147 = por %p145, %p146
    %p148 = scmp.ne.s32.totalorder %s134, %s135
    %p149 = scmp.eq.s32.totalorder %s17, 3
    %p150 = por %p148, %p149
    %p152 = scmp.ne.s32.totalorder %s135, %s151
    %p153 = scmp.eq.s32.totalorder %s17, 0
    %p154 = por %p152, %p153
    %p155 = scmp.le.s32.totalorder 1, %s11
    %p156 = scmp.lt.s32.totalorder %s11, 5
    %p157 = pnand %p155, %p156
    %p158 = pneg %p157
    // Predicated region
    $region9: #{forward.2} parent=5 // pred_check
      _
    $region10: #{forward.2} parent=5 // pred_check_branch
      %160 = sbr.rel (%p157) target = $region12
    $region11: #{forward.2} parent=5 // pred_region
      %s161 = ssub.s32 %s11, 1
      // Predicated region
      $region13: #{forward.2} parent=11 // pred_check
        %p162 = pneg %p58
      $region14: #{forward.2} parent=11 // pred_check_branch
        %164 = sbr.rel (%p162) target = $region16
      $region15: #{forward.2} parent=11 // pred_region
        _
      $region16: #{forward.2} parent=11 // pred_fallthru
        _
      // Predicated region
      $region17: #{forward.2} parent=11 // pred_check
        %p165 = pneg %p79
      $region18: #{forward.2} parent=11 // pred_check_branch
        %167 = sbr.rel (%p165) target = $region20
      $region19: #{forward.2} parent=11 // pred_region
        _
      $region20: #{forward.2} parent=11 // pred_fallthru
        _
      // Predicated region
      $region21: #{forward.2} parent=11 // pred_check
        %p168 = pneg %p100
      $region22: #{forward.2} parent=11 // pred_check_branch
        %170 = sbr.rel (%p168) target = $region24
      $region23: #{forward.2} parent=11 // pred_region
        _
      $region24: #{forward.2} parent=11 // pred_fallthru
        _
      // Predicated region
      $region25: #{forward.2} parent=11 // pred_check
        %p171 = pneg %p121
      $region26: #{forward.2} parent=11 // pred_check_branch
        %173 = sbr.rel (%p171) target = $region28
      $region27: #{forward.2} parent=11 // pred_region
        _
      $region28: #{forward.2} parent=11 // pred_fallthru
        _
    $region12: #{forward.2} parent=5 // pred_fallthru
      _
    %p174 = scmp.lt.s32.totalorder %s11, 4
    // Predicated region
    $region29: #{forward.2} parent=5 // pred_check
      %p175 = pneg %p174
    $region30: #{forward.2} parent=5 // pred_check_branch
      %177 = sbr.rel (%p175) target = $region32
    $region31: #{forward.2} parent=5 // pred_region
      // Predicated region
      $region33: #{forward.2} parent=31 // pred_check
        %p178 = pneg %p31
      $region34: #{forward.2} parent=31 // pred_check_branch
        %180 = sbr.rel (%p178) target = $region36
      $region35: #{forward.2} parent=31 // pred_region
        %s181 = smul.u32 16, %s11
        %p182 = scmp.lt.s32.totalorder %s181, 63
        %s183 = scalar_select %p182, %s181, 63
        %s184 = smul.addr %s183, 4
        %s185 = scalar_lea.vmem %s0, %s184
        %s186 = smul.u32 16, %s11
      $region36: #{forward.2} parent=31 // pred_fallthru
        _
    $region32: #{forward.2} parent=5 // pred_fallthru
      _
    %p187 = scmp.le.s32.totalorder 1, %s11
    %p188 = scmp.lt.s32.totalorder %s11, 5
    %p189 = pnand %p187, %p188
    %p190 = pneg %p189
    // Predicated region
    $region37: #{forward.2} parent=5 // pred_check
      _
    $region38: #{forward.2} parent=5 // pred_check_branch
      %192 = sbr.rel (%p189) target = $region40
    $region39: #{forward.2} parent=5 // pred_region
      %s193 = ssub.s32 %s11, 1
      %s194 = smul.u32 16, %s16
      %p195 = scmp.lt.s32.totalorder %s194, 63
      %s196 = scalar_select %p195, %s194, 63
      %s197 = smul.addr %s196, 4
      %s198 = scalar_lea.vmem %s0, %s197
      %p199 = pneg %p37
      %p200 = pneg %p34
      %p201 = pneg %p58
      %p202 = pneg %p55
      %p203 = pneg %p79
      %p204 = pneg %p76
      %p205 = pneg %p100
      %p206 = pneg %p97
      %p207 = pneg %p121
      %p208 = pneg %p118
      %p209 = pneg %p147
      %p210 = pneg %p144
      %s211 = smul.u32 16, %s16
      %p212 = scmp.lt.s32.totalorder %s211, 63
      %s213 = scalar_select %p212, %s211, 63
      %s214 = smul.addr %s213, 8
      %s215 = scalar_lea.vmem %s5, %s214
      %s216 = smul.u32 16, %s16
      %p217 = scmp.lt.s32.totalorder %s216, 63
      %s218 = scalar_select %p217, %s216, 63
      %s219 = smul.addr %s218, 4
      %s220 = scalar_lea.vmem %s0, %s219
      %s221 = smul.u32 16, %s16
      %s222 = smul.u32 16, %s16
      %p223 = scmp.lt.s32.totalorder %s222, 63
      %s224 = scalar_select %p223, %s222, 63
      %s225 = smul.addr %s224, 8
      %s226 = scalar_lea.vmem %s5, %s225
      %s227 = smul.u32 16, %s16
      %v229 = vld [vmem:[%s220] sm:$0xf]
      %v230 = vld [vmem:[%s220 + $0x4] sm:$0xf]
      %v231 = vld [vmem:[%s220 + $0x8] sm:$0xf]
      %v232 = vld [vmem:[%s220 + $0xc] sm:$0xf]
      %v233 = vld [vmem:[%s220 + $0x10] sm:$0xf]
      %v234 = vld [vmem:[%s220 + $0x14] sm:$0xf]
      %v235 = vld [vmem:[%s220 + $0x18] sm:$0xf]
      %v236 = vld [vmem:[%s220 + $0x1c] sm:$0xf]
      %v237 = vld [vmem:[%s220 + $0x20] sm:$0xf]
      %v238 = vld [vmem:[%s220 + $0x24] sm:$0xf]
      %v239 = vld [vmem:[%s220 + $0x28] sm:$0xf]
      %v240 = vld [vmem:[%s220 + $0x2c] sm:$0xf]
      %v241 = vld [vmem:[%s220 + $0x30] sm:$0xf]
      %v242 = vld [vmem:[%s220 + $0x34] sm:$0xf]
      %v243 = vld [vmem:[%s220 + $0x38] sm:$0xf]
      %v244 = vld [vmem:[%s220 + $0x3c] sm:$0xf]
      %v245 = vld [vmem:[%s1] sm:$0xf]
      %v246 = vld [vmem:[%s1 + $0x4] sm:$0xf]
      %v247 = vld [vmem:[%s1 + $0x8] sm:$0xf]
      %v248 = vld [vmem:[%s1 + $0xc] sm:$0xf]
      %v249 = vld [vmem:[%s1 + $0x10] sm:$0x3]
      %v250 = vld [vmem:[%s2] sm:$0x1]
      %v252 = vlaneseq
      %v253 = vshrl.u32 %v252, 7
      %v254 = vsub.s32 0, %v253
      %v255 = vrot.slane %v250, %v254
      %v273 = vunpack.c.l.b16 %v229
      %v274 = vunpack.c.l.b16 %v230
      %v275 = vunpack.c.l.b16 %v231
      %v276 = vunpack.c.l.b16 %v232
      %v277 = vunpack.c.l.b16 %v233
      %v278 = vunpack.c.l.b16 %v234
      %v279 = vunpack.c.l.b16 %v235
      %v280 = vunpack.c.l.b16 %v236
      %v281 = vunpack.c.l.b16 %v237
      %v282 = vunpack.c.l.b16 %v238
      %v283 = vunpack.c.l.b16 %v239
      %v284 = vunpack.c.l.b16 %v240
      %v285 = vunpack.c.l.b16 %v241
      %v286 = vunpack.c.l.b16 %v242
      %v287 = vunpack.c.l.b16 %v243
      %v288 = vunpack.c.l.b16 %v244
      %v289 = vpack.c.b16 %v274, %v273
      %v290 = vpack.c.b16 %v276, %v275
      %v291 = vpack.c.b16 %v278, %v277
      %v292 = vpack.c.b16 %v280, %v279
      %v293 = vpack.c.b16 %v282, %v281
      %v294 = vpack.c.b16 %v284, %v283
      %v295 = vpack.c.b16 %v286, %v285
      %v296 = vpack.c.b16 %v288, %v287
      %v302 = vunpack.c.l.b16 %v245
      %v303 = vunpack.c.l.b16 %v246
      %v304 = vunpack.c.l.b16 %v247
      %v305 = vunpack.c.l.b16 %v248
      %v306 = vunpack.c.l.b16 %v249
      %v307 = vpack.c.b16 %v303, %v302
      %v308 = vpack.c.b16 %v305, %v304
      %v309 = vpack.c.b16 %v306, %v306
      %vm312 = vcmask 293888
      %v314 = vsel %vm312, %v289, 0
      %v317 = vsel %vm312, %v290, 0
      %v320 = vsel %vm312, %v291, 0
      %v323 = vsel %vm312, %v292, 0
      %v326 = vsel %vm312, %v293, 0
      %v329 = vsel %vm312, %v294, 0
      %v332 = vsel %vm312, %v295, 0
      %v335 = vsel %vm312, %v296, 0
      %vm337 = vcmask 1041408
      %v339 = vsel %vm337, %v309, 0
      %341 = vmatprep.subr.bf16.mxu0 0
      %342 = vmatpush1.bf16.msra.mxu0 %v307
      %343 = vmatprep.subr.bf16.mxu0 0
      %344 = vmatpush1.bf16.msra.mxu0 %v308
      %345 = vmatprep.subr.bf16.mxu0 0
      %346 = vmatpush1.bf16.msra.mxu0 %v339
      %347 = vmatprep.subr.bf16.mxu0 0
      %348 = vmatpush1.bf16.msra.mxu0 0
      %349 = vmatprep.subr.bf16.mxu0 0
      %350 = vmatpush1.bf16.msra.mxu0 0
      %351 = vmatprep.subr.bf16.mxu0 0
      %352 = vmatpush1.bf16.msra.mxu0 0
      %353 = vmatprep.subr.bf16.mxu0 0
      %354 = vmatpush1.bf16.msra.mxu0 0
      %355 = vmatprep.subr.bf16.mxu0 0
      %356 = vmatpush1.bf16.msra.mxu0 0
      %357 = vmatprep.subr.bf16.mxu0 0
      %358 = vmatpush1.bf16.msra.mxu0 0
      %359 = vmatprep.subr.bf16.mxu0 0
      %360 = vmatpush1.bf16.msra.mxu0 0
      %361 = vmatprep.subr.bf16.mxu0 0
      %362 = vmatpush1.bf16.msra.mxu0 0
      %363 = vmatprep.subr.bf16.mxu0 0
      %364 = vmatpush1.bf16.msra.mxu0 0
      %365 = vmatprep.subr.bf16.mxu0 0
      %366 = vmatpush1.bf16.msra.mxu0 0
      %367 = vmatprep.subr.bf16.mxu0 0
      %368 = vmatpush1.bf16.msra.mxu0 0
      %369 = vmatprep.subr.bf16.mxu0 0
      %370 = vmatpush1.bf16.msra.mxu0 0
      %371 = vmatprep.subr.bf16.mxu0 0
      %372 = vmatpush1.bf16.msra.mxu0 0
      %373 = vmatprep.mubr.bf16.mxu0 0
      %374 = vmatmul.mubr.bf16.gmra.mrb[0].mxu0 %v314
      %v375 = vpop.f32.mrb[0].mxu0
      %v376 = vadd.f32 %v255, %v375
      %v377 = vpop.f32.mrb[0].mxu0
      %v378 = vpop.f32.mrb[0].mxu0
      %v379 = vadd.f32 %v255, %v378
      %v380 = vpop.f32.mrb[0].mxu0
      %381 = vmatprep.mubr.bf16.mxu0 0
      %382 = vmatmul.mubr.bf16.gmra.mrb[0].mxu0 %v317
      %v383 = vpop.f32.mrb[0].mxu0
      %v384 = vadd.f32 %v255, %v383
      %v385 = vpop.f32.mrb[0].mxu0
      %v386 = vpop.f32.mrb[0].mxu0
      %v387 = vadd.f32 %v255, %v386
      %v388 = vpop.f32.mrb[0].mxu0
      %389 = vmatprep.mubr.bf16.mxu0 0
      %390 = vmatmul.mubr.bf16.gmra.mrb[0].mxu0 %v320
      %v391 = vpop.f32.mrb[0].mxu0
      %v392 = vadd.f32 %v255, %v391
      %v393 = vpop.f32.mrb[0].mxu0
      %v394 = vpop.f32.mrb[0].mxu0
      %v395 = vadd.f32 %v255, %v394
      %v396 = vpop.f32.mrb[0].mxu0
      %397 = vmatprep.mubr.bf16.mxu0 0
      %398 = vmatmul.mubr.bf16.gmra.mrb[0].mxu0 %v323
      %v399 = vpop.f32.mrb[0].mxu0
      %v400 = vadd.f32 %v255, %v399
      %v401 = vpop.f32.mrb[0].mxu0
      %v402 = vpop.f32.mrb[0].mxu0
      %v403 = vadd.f32 %v255, %v402
      %v404 = vpop.f32.mrb[0].mxu0
      %405 = vmatprep.mubr.bf16.mxu0 0
      %406 = vmatmul.mubr.bf16.gmra.mrb[0].mxu0 %v326
      %v407 = vpop.f32.mrb[0].mxu0
      %v408 = vadd.f32 %v255, %v407
      %v409 = vpop.f32.mrb[0].mxu0
      %v410 = vpop.f32.mrb[0].mxu0
      %v411 = vadd.f32 %v255, %v410
      %v412 = vpop.f32.mrb[0].mxu0
      %413 = vmatprep.mubr.bf16.mxu0 0
      %414 = vmatmul.mubr.bf16.gmra.mrb[0].mxu0 %v329
      %v415 = vpop.f32.mrb[0].mxu0
      %v416 = vadd.f32 %v255, %v415
      %v417 = vpop.f32.mrb[0].mxu0
      %v418 = vpop.f32.mrb[0].mxu0
      %v419 = vadd.f32 %v255, %v418
      %v420 = vpop.f32.mrb[0].mxu0
      %421 = vmatprep.mubr.bf16.mxu0 0
      %422 = vmatmul.mubr.bf16.gmra.mrb[0].mxu0 %v332
      %v423 = vpop.f32.mrb[0].mxu0
      %v424 = vadd.f32 %v255, %v423
      %v425 = vpop.f32.mrb[0].mxu0
      %v426 = vpop.f32.mrb[0].mxu0
      %v427 = vadd.f32 %v255, %v426
      %v428 = vpop.f32.mrb[0].mxu0
      %429 = vmatprep.mubr.bf16.mxu0 0
      %430 = vmatmul.mubr.bf16.gmra.mrb[0].mxu0 %v335
      %v431 = vpop.f32.mrb[0].mxu0
      %v432 = vadd.f32 %v255, %v431
      %v433 = vpop.f32.mrb[0].mxu0
      %v434 = vpop.f32.mrb[0].mxu0
      %v435 = vadd.f32 %v255, %v434
      %v436 = vpop.f32.mrb[0].mxu0
      %437 = vdwg.mxu0
      %v438 = vxor.u32 %v376, 2147483648
      %v439 = vxor.u32 %v379, 2147483648
      %v440 = vxor.u32 %v384, 2147483648
      %v441 = vxor.u32 %v387, 2147483648
      %v442 = vxor.u32 %v392, 2147483648
      %v443 = vxor.u32 %v395, 2147483648
      %v444 = vxor.u32 %v400, 2147483648
      %v445 = vxor.u32 %v403, 2147483648
      %v446 = vxor.u32 %v408, 2147483648
      %v447 = vxor.u32 %v411, 2147483648
      %v448 = vxor.u32 %v416, 2147483648
      %v449 = vxor.u32 %v419, 2147483648
      %v450 = vxor.u32 %v424, 2147483648
      %v451 = vxor.u32 %v427, 2147483648
      %v452 = vxor.u32 %v432, 2147483648
      %v453 = vxor.u32 %v435, 2147483648
      %v454 = vmul.f32 %v438, 1.442695
      %v455 = vpow.pop %v454
      %v456 = vmul.f32 %v439, 1.442695
      %v457 = vpow.pop %v456
      %v458 = vmul.f32 %v440, 1.442695
      %v459 = vpow.pop %v458
      %v460 = vmul.f32 %v441, 1.442695
      %v461 = vpow.pop %v460
      %v462 = vmul.f32 %v442, 1.442695
      %v463 = vpow.pop %v462
      %v464 = vmul.f32 %v443, 1.442695
      %v465 = vpow.pop %v464
      %v466 = vmul.f32 %v444, 1.442695
      %v467 = vpow.pop %v466
      %v468 = vmul.f32 %v445, 1.442695
      %v469 = vpow.pop %v468
      %v470 = vmul.f32 %v446, 1.442695
      %v471 = vpow.pop %v470
      %v472 = vmul.f32 %v447, 1.442695
      %v473 = vpow.pop %v472
      %v474 = vmul.f32 %v448, 1.442695
      %v475 = vpow.pop %v474
      %v476 = vmul.f32 %v449, 1.442695
      %v477 = vpow.pop %v476
      %v478 = vmul.f32 %v450, 1.442695
      %v479 = vpow.pop %v478
      %v480 = vmul.f32 %v451, 1.442695
      %v481 = vpow.pop %v480
      %v482 = vmul.f32 %v452, 1.442695
      %v483 = vpow.pop %v482
      %v484 = vmul.f32 %v453, 1.442695
      %v485 = vpow.pop %v484
      %v486 = vadd.f32 %v455, 1.0
      %v487 = vadd.f32 %v457, 1.0
      %v488 = vadd.f32 %v459, 1.0
      %v489 = vadd.f32 %v461, 1.0
      %v490 = vadd.f32 %v463, 1.0
      %v491 = vadd.f32 %v465, 1.0
      %v492 = vadd.f32 %v467, 1.0
      %v493 = vadd.f32 %v469, 1.0
      %v494 = vadd.f32 %v471, 1.0
      %v495 = vadd.f32 %v473, 1.0
      %v496 = vadd.f32 %v475, 1.0
      %v497 = vadd.f32 %v477, 1.0
      %v498 = vadd.f32 %v479, 1.0
      %v499 = vadd.f32 %v481, 1.0
      %v500 = vadd.f32 %v483, 1.0
      %v501 = vadd.f32 %v485, 1.0
      %v502 = vrcp.pop %v486
      %v503 = vmul.f32 1.0, %v502
      %v504 = vrcp.pop %v487
      %v505 = vmul.f32 1.0, %v504
      %v506 = vrcp.pop %v488
      %v507 = vmul.f32 1.0, %v506
      %v508 = vrcp.pop %v489
      %v509 = vmul.f32 1.0, %v508
      %v510 = vrcp.pop %v490
      %v511 = vmul.f32 1.0, %v510
      %v512 = vrcp.pop %v491
      %v513 = vmul.f32 1.0, %v512
      %v514 = vrcp.pop %v492
      %v515 = vmul.f32 1.0, %v514
      %v516 = vrcp.pop %v493
      %v517 = vmul.f32 1.0, %v516
      %v518 = vrcp.pop %v494
      %v519 = vmul.f32 1.0, %v518
      %v520 = vrcp.pop %v495
      %v521 = vmul.f32 1.0, %v520
      %v522 = vrcp.pop %v496
      %v523 = vmul.f32 1.0, %v522
      %v524 = vrcp.pop %v497
      %v525 = vmul.f32 1.0, %v524
      %v526 = vrcp.pop %v498
      %v527 = vmul.f32 1.0, %v526
      %v528 = vrcp.pop %v499
      %v529 = vmul.f32 1.0, %v528
      %v530 = vrcp.pop %v500
      %v531 = vmul.f32 1.0, %v530
      %v532 = vrcp.pop %v501
      %v533 = vmul.f32 1.0, %v532
      %v534 = vmul.f32 %v376, %v503
      %v535 = vmul.f32 %v379, %v505
      %v536 = vmul.f32 %v384, %v507
      %v537 = vmul.f32 %v387, %v509
      %v538 = vmul.f32 %v392, %v511
      %v539 = vmul.f32 %v395, %v513
      %v540 = vmul.f32 %v400, %v515
      %v541 = vmul.f32 %v403, %v517
      %v542 = vmul.f32 %v408, %v519
      %v543 = vmul.f32 %v411, %v521
      %v544 = vmul.f32 %v416, %v523
      %v545 = vmul.f32 %v419, %v525
      %v546 = vmul.f32 %v424, %v527
      %v547 = vmul.f32 %v427, %v529
      %v548 = vmul.f32 %v432, %v531
      %v549 = vmul.f32 %v435, %v533
      %v550 = vpack.c.bf16 %v535, %v534
      %v551 = vpack.c.bf16 %v537, %v536
      %v552 = vpack.c.bf16 %v539, %v538
      %v553 = vpack.c.bf16 %v541, %v540
      %v554 = vpack.c.bf16 %v543, %v542
      %v555 = vpack.c.bf16 %v545, %v544
      %v556 = vpack.c.bf16 %v547, %v546
      %v557 = vpack.c.bf16 %v549, %v548
      %v558 = vld [vmem:[%s3] sm:$0xf]
      %v559 = vld [vmem:[%s3 + $0x4] sm:$0xf]
      %v560 = vld [vmem:[%s3 + $0x8] sm:$0xf]
      %v561 = vld [vmem:[%s3 + $0xc] sm:$0xf]
      %v562 = vld [vmem:[%s4] sm:$0x1]
      %v564 = vlaneseq
      %v565 = vshrl.u32 %v564, 7
      %v566 = vsub.s32 0, %v565
      %v567 = vrot.slane %v562, %v566
      %v573 = vunpack.c.l.b16 %v558
      %v574 = vunpack.c.l.b16 %v559
      %v575 = vunpack.c.l.b16 %v560
      %v576 = vunpack.c.l.b16 %v561
      %v577 = vpack.c.b16 %v574, %v573
      %v578 = vpack.c.b16 %v576, %v575
      %vm581 = vcmask 261120
      %v583 = vsel %vm581, %v550, 0
      %v586 = vsel %vm581, %v551, 0
      %v589 = vsel %vm581, %v552, 0
      %v592 = vsel %vm581, %v553, 0
      %v595 = vsel %vm581, %v554, 0
      %v598 = vsel %vm581, %v555, 0
      %v601 = vsel %vm581, %v556, 0
      %v604 = vsel %vm581, %v557, 0
      %606 = vmatprep.subr.bf16.mxu0 0
      %607 = vmatpush1.bf16.msra.mxu0 %v577
      %608 = vmatprep.subr.bf16.mxu0 0
      %609 = vmatpush1.bf16.msra.mxu0 %v578
      %610 = vmatprep.subr.bf16.mxu0 0
      %611 = vmatpush1.bf16.msra.mxu0 0
      %612 = vmatprep.subr.bf16.mxu0 0
      %613 = vmatpush1.bf16.msra.mxu0 0
      %614 = vmatprep.subr.bf16.mxu0 0
      %615 = vmatpush1.bf16.msra.mxu0 0
      %616 = vmatprep.subr.bf16.mxu0 0
      %617 = vmatpush1.bf16.msra.mxu0 0
      %618 = vmatprep.subr.bf16.mxu0 0
      %619 = vmatpush1.bf16.msra.mxu0 0
      %620 = vmatprep.subr.bf16.mxu0 0
      %621 = vmatpush1.bf16.msra.mxu0 0
      %622 = vmatprep.subr.bf16.mxu0 0
      %623 = vmatpush1.bf16.msra.mxu0 0
      %624 = vmatprep.subr.bf16.mxu0 0
      %625 = vmatpush1.bf16.msra.mxu0 0
      %626 = vmatprep.subr.bf16.mxu0 0
      %627 = vmatpush1.bf16.msra.mxu0 0
      %628 = vmatprep.subr.bf16.mxu0 0
      %629 = vmatpush1.bf16.msra.mxu0 0
      %630 = vmatprep.subr.bf16.mxu0 0
      %631 = vmatpush1.bf16.msra.mxu0 0
      %632 = vmatprep.subr.bf16.mxu0 0
      %633 = vmatpush1.bf16.msra.mxu0 0
      %634 = vmatprep.subr.bf16.mxu0 0
      %635 = vmatpush1.bf16.msra.mxu0 0
      %636 = vmatprep.subr.bf16.mxu0 0
      %637 = vmatpush1.bf16.msra.mxu0 0
      %638 = vmatprep.mubr.bf16.mxu0 0
      %639 = vmatmul.mubr.bf16.gmra.mrb[0].mxu0 %v583
      %v640 = vpop.f32.mrb[0].mxu0
      %v641 = vadd.f32 %v567, %v640
      %v642 = vpop.f32.mrb[0].mxu0
      %v643 = vpop.f32.mrb[0].mxu0
      %v644 = vadd.f32 %v567, %v643
      %v645 = vpop.f32.mrb[0].mxu0
      %646 = vmatprep.mubr.bf16.mxu0 0
      %647 = vmatmul.mubr.bf16.gmra.mrb[0].mxu0 %v586
      %v648 = vpop.f32.mrb[0].mxu0
      %v649 = vadd.f32 %v567, %v648
      %v650 = vpop.f32.mrb[0].mxu0
      %v651 = vpop.f32.mrb[0].mxu0
      %v652 = vadd.f32 %v567, %v651
      %v653 = vpop.f32.mrb[0].mxu0
      %654 = vmatprep.mubr.bf16.mxu0 0
      %655 = vmatmul.mubr.bf16.gmra.mrb[0].mxu0 %v589
      %v656 = vpop.f32.mrb[0].mxu0
      %v657 = vadd.f32 %v567, %v656
      %v658 = vpop.f32.mrb[0].mxu0
      %v659 = vpop.f32.mrb[0].mxu0
      %v660 = vadd.f32 %v567, %v659
      %v661 = vpop.f32.mrb[0].mxu0
      %662 = vmatprep.mubr.bf16.mxu0 0
      %663 = vmatmul.mubr.bf16.gmra.mrb[0].mxu0 %v592
      %v664 = vpop.f32.mrb[0].mxu0
      %v665 = vadd.f32 %v567, %v664
      %v666 = vpop.f32.mrb[0].mxu0
      %v667 = vpop.f32.mrb[0].mxu0
      %v668 = vadd.f32 %v567, %v667
      %v669 = vpop.f32.mrb[0].mxu0
      %670 = vmatprep.mubr.bf16.mxu0 0
      %671 = vmatmul.mubr.bf16.gmra.mrb[0].mxu0 %v595
      %v672 = vpop.f32.mrb[0].mxu0
      %v673 = vadd.f32 %v567, %v672
      %v674 = vpop.f32.mrb[0].mxu0
      %v675 = vpop.f32.mrb[0].mxu0
      %v676 = vadd.f32 %v567, %v675
      %v677 = vpop.f32.mrb[0].mxu0
      %678 = vmatprep.mubr.bf16.mxu0 0
      %679 = vmatmul.mubr.bf16.gmra.mrb[0].mxu0 %v598
      %v680 = vpop.f32.mrb[0].mxu0
      %v681 = vadd.f32 %v567, %v680
      %v682 = vpop.f32.mrb[0].mxu0
      %v683 = vpop.f32.mrb[0].mxu0
      %v684 = vadd.f32 %v567, %v683
      %v685 = vpop.f32.mrb[0].mxu0
      %686 = vmatprep.mubr.bf16.mxu0 0
      %687 = vmatmul.mubr.bf16.gmra.mrb[0].mxu0 %v601
      %v688 = vpop.f32.mrb[0].mxu0
      %v689 = vadd.f32 %v567, %v688
      %v690 = vpop.f32.mrb[0].mxu0
      %v691 = vpop.f32.mrb[0].mxu0
      %v692 = vadd.f32 %v567, %v691
      %v693 = vpop.f32.mrb[0].mxu0
      %694 = vmatprep.mubr.bf16.mxu0 0
      %695 = vmatmul.mubr.bf16.gmra.mrb[0].mxu0 %v604
      %v696 = vpop.f32.mrb[0].mxu0
      %v697 = vadd.f32 %v567, %v696
      %v698 = vpop.f32.mrb[0].mxu0
      %v699 = vpop.f32.mrb[0].mxu0
      %v700 = vadd.f32 %v567, %v699
      %v701 = vpop.f32.mrb[0].mxu0
      %702 = vdwg.mxu0
      %vm703 = vcmask 64512
      %704 = vst.msk [vmem:[%s226] sm:$0xff] %vm703, %v641
      %705 = vst.msk [vmem:[%s226 + $0x8] sm:$0xff] %vm703, %v644
      %706 = vst.msk [vmem:[%s226 + $0x10] sm:$0xff] %vm703, %v649
      %707 = vst.msk [vmem:[%s226 + $0x18] sm:$0xff] %vm703, %v652
      %708 = vst.msk [vmem:[%s226 + $0x20] sm:$0xff] %vm703, %v657
      %709 = vst.msk [vmem:[%s226 + $0x28] sm:$0xff] %vm703, %v660
      %710 = vst.msk [vmem:[%s226 + $0x30] sm:$0xff] %vm703, %v665
      %711 = vst.msk [vmem:[%s226 + $0x38] sm:$0xff] %vm703, %v668
      %712 = vst.msk [vmem:[%s226 + $0x40] sm:$0xff] %vm703, %v673
      %713 = vst.msk [vmem:[%s226 + $0x48] sm:$0xff] %vm703, %v676
      %714 = vst.msk [vmem:[%s226 + $0x50] sm:$0xff] %vm703, %v681
      %715 = vst.msk [vmem:[%s226 + $0x58] sm:$0xff] %vm703, %v684
      %716 = vst.msk [vmem:[%s226 + $0x60] sm:$0xff] %vm703, %v689
      %717 = vst.msk [vmem:[%s226 + $0x68] sm:$0xff] %vm703, %v692
      %718 = vst.msk [vmem:[%s226 + $0x70] sm:$0xff] %vm703, %v697
      %719 = vst.msk [vmem:[%s226 + $0x78] sm:$0xff] %vm703, %v700
      %s720 = smul.u32 16, %s16
      %p721 = scmp.lt.s32.totalorder %s720, 63
      %s722 = scalar_select %p721, %s720, 63
      %s723 = smul.addr %s722, 8
      %s724 = scalar_lea.vmem %s5, %s723
      // Predicated region
      $region41: #{forward.2} parent=39 // pred_check
        %p725 = pneg %p144
      $region42: #{forward.2} parent=39 // pred_check_branch
        %727 = sbr.rel (%p725) target = $region44
      $region43: #{forward.2} parent=39 // pred_region
        %s728 = smul.u32 16, %s16
      $region44: #{forward.2} parent=39 // pred_fallthru
        _
    $region40: #{forward.2} parent=5 // pred_fallthru
      _
    %p729 = scmp.le.s32.totalorder 2, %s11
    // Predicated region
    $region45: #{forward.2} parent=5 // pred_check
      %p730 = pneg %p729
    $region46: #{forward.2} parent=5 // pred_check_branch
      %732 = sbr.rel (%p730) target = $region48
    $region47: #{forward.2} parent=5 // pred_region
      %s733 = ssub.s32 %s11, 2
      // Predicated region
      $region49: #{forward.2} parent=47 // pred_check
        %p734 = pneg %p150
      $region50: #{forward.2} parent=47 // pred_check_branch
        %736 = sbr.rel (%p734) target = $region52
      $region51: #{forward.2} parent=47 // pred_region
        %s737 = smul.u32 16, %s17
        %p738 = scmp.lt.s32.totalorder %s737, 63
        %s739 = scalar_select %p738, %s737, 63
        %s740 = smul.addr %s739, 8
        %s741 = scalar_lea.vmem %s5, %s740
      $region52: #{forward.2} parent=47 // pred_fallthru
        _
    $region48: #{forward.2} parent=5 // pred_fallthru
      _
  $region6: #{forward.2} parent=0 // loop_footer
    %s15 = sadd.s32 1, %s11
  $region7: #{forward.2} parent=0 // loop_footer_branch
    %10 = sbr.rel target = $region3
  $region8: #{forward.2} parent=0 // loop_exit
    _

// kernel: closed_call.32
$region0: #{closed_call.32}
  #allocation0 [shape = 'u32[]', space=smem, size = 0x4, offset = 0x4, fixed_abs, tag = 'smem constant byte address 0x4 - core index']
  #allocation1 [shape = 'u32[144,128]{1,0:T(1,128)}', space=vmem, size = 0x12000, scoped, tag = 'internal scratch']
  %s0 = inlined_call_operand.vmem [shape: bf16[512,72], index: 0, kind: input, shape index: {}]
  %s1 = inlined_call_operand.vmem [shape: bf16[72,32], index: 1, kind: input, shape index: {}]
  %s2 = inlined_call_operand.vmem [shape: f32[1,32], index: 2, kind: input, shape index: {}]
  %s3 = inlined_call_operand.vmem [shape: bf16[512,32], index: 3, kind: output, shape index: {}]
  %s4 = sld [smem:[#allocation0]]
  $region45: #{closed_call.32} parent=0
    _
  %s6 = ssub.s32 1, %s4
  %s7 = scalar_select 0, %s6, %s4
  loop: start=0, step=1, limit=6
  $region2: #{closed_call.32} parent=0 // loop_pre_header
    _
  $region3: #{closed_call.32} parent=0 // loop_header
    %s9 = sphi 0, %s13
    %p10 = scmp.ge.s32.totalorder %s9, 6
    %s19 = sphi 0, %s21
    %s22 = sphi 0, %s19
    %s23 = sphi 0, %s22
    %s39 = sphi 0, %s23
    %s43 = sphi 0, %s43
    %s45 = sphi 0, %s43
    %s46 = sphi 0, %s45
    %s60 = sphi 0, %s46
    %s64 = sphi 0, %s64
    %s66 = sphi 0, %s64
    %s67 = sphi 0, %s66
    %s81 = sphi 0, %s67
    %s87 = sphi 0, %s89
    %s90 = sphi 0, %s87
    %s91 = sphi 0, %s90
    %s107 = sphi 0, %s91
  $region4: #{closed_call.32} parent=0 // loop_header_branch
    %12 = sbr.rel (%p10) target = $region8
  $region5: #{closed_call.32} parent=0 // loop_body
    %s14 = ssub.s32 %s9, 1
    %s15 = ssub.s32 %s9, 2
    %s16 = sadd.s32 %s9, 1
    %s17 = ssub.s32 %s9, %s16
    %p18 = scmp.eq.s32.totalorder %s17, 0
    %s20 = sadd.s32 %s19, 1
    %s21 = scalar_select %p18, %s19, %s20
    %p24 = pneg %p18
    %p25 = scmp.eq.s32.totalorder %s9, 3
    %p26 = por %p24, %p25
    %p27 = scmp.ne.s32.totalorder %s19, %s22
    %p28 = scmp.eq.s32.totalorder %s9, 0
    %p29 = por %p27, %p28
    %p30 = scmp.ne.s32.totalorder %s19, %s22
    %p31 = scmp.eq.s32.totalorder %s14, 3
    %p32 = por %p30, %p31
    %p33 = scmp.ne.s32.totalorder %s22, %s23
    %p34 = scmp.eq.s32.totalorder %s14, 0
    %p35 = por %p33, %p34
    %p36 = scmp.ne.s32.totalorder %s22, %s23
    %p37 = scmp.eq.s32.totalorder %s15, 3
    %p38 = por %p36, %p37
    %p40 = scmp.ne.s32.totalorder %s23, %s39
    %p41 = scmp.eq.s32.totalorder %s15, 0
    %p42 = por %p40, %p41
    %s44 = sadd.s32 %s43, 1
    %p47 = scmp.eq.s32.totalorder %s9, 3
    %p48 = scmp.ne.s32.totalorder %s43, %s45
    %p49 = scmp.eq.s32.totalorder %s9, 0
    %p50 = por %p48, %p49
    %p51 = scmp.ne.s32.totalorder %s43, %s45
    %p52 = scmp.eq.s32.totalorder %s14, 3
    %p53 = por %p51, %p52
    %p54 = scmp.ne.s32.totalorder %s45, %s46
    %p55 = scmp.eq.s32.totalorder %s14, 0
    %p56 = por %p54, %p55
    %p57 = scmp.ne.s32.totalorder %s45, %s46
    %p58 = scmp.eq.s32.totalorder %s15, 3
    %p59 = por %p57, %p58
    %p61 = scmp.ne.s32.totalorder %s46, %s60
    %p62 = scmp.eq.s32.totalorder %s15, 0
    %p63 = por %p61, %p62
    %s65 = sadd.s32 %s64, 1
    %p68 = scmp.eq.s32.totalorder %s9, 3
    %p69 = scmp.ne.s32.totalorder %s64, %s66
    %p70 = scmp.eq.s32.totalorder %s9, 0
    %p71 = por %p69, %p70
    %p72 = scmp.ne.s32.totalorder %s64, %s66
    %p73 = scmp.eq.s32.totalorder %s14, 3
    %p74 = por %p72, %p73
    %p75 = scmp.ne.s32.totalorder %s66, %s67
    %p76 = scmp.eq.s32.totalorder %s14, 0
    %p77 = por %p75, %p76
    %p78 = scmp.ne.s32.totalorder %s66, %s67
    %p79 = scmp.eq.s32.totalorder %s15, 3
    %p80 = por %p78, %p79
    %p82 = scmp.ne.s32.totalorder %s67, %s81
    %p83 = scmp.eq.s32.totalorder %s15, 0
    %p84 = por %p82, %p83
    %s85 = ssub.s32 %s9, %s16
    %p86 = scmp.eq.s32.totalorder %s85, 0
    %s88 = sadd.s32 %s87, 1
    %s89 = scalar_select %p86, %s87, %s88
    %p92 = pneg %p86
    %p93 = scmp.eq.s32.totalorder %s9, 3
    %p94 = por %p92, %p93
    %p95 = scmp.ne.s32.totalorder %s87, %s90
    %p96 = scmp.eq.s32.totalorder %s9, 0
    %p97 = por %p95, %p96
    %p98 = scmp.ne.s32.totalorder %s87, %s90
    %p99 = scmp.eq.s32.totalorder %s14, 3
    %p100 = por %p98, %p99
    %p101 = scmp.ne.s32.totalorder %s90, %s91
    %p102 = scmp.eq.s32.totalorder %s14, 0
    %p103 = por %p101, %p102
    %p104 = scmp.ne.s32.totalorder %s90, %s91
    %p105 = scmp.eq.s32.totalorder %s15, 3
    %p106 = por %p104, %p105
    %p108 = scmp.ne.s32.totalorder %s91, %s107
    %p109 = scmp.eq.s32.totalorder %s15, 0
    %p110 = por %p108, %p109
    %p111 = scmp.le.s32.totalorder 1, %s9
    %p112 = scmp.lt.s32.totalorder %s9, 5
    %p113 = pnand %p111, %p112
    %p114 = pneg %p113
    // Predicated region
    $region9: #{closed_call.32} parent=5 // pred_check
      _
    $region10: #{closed_call.32} parent=5 // pred_check_branch
      %116 = sbr.rel (%p113) target = $region12
    $region11: #{closed_call.32} parent=5 // pred_region
      %s117 = ssub.s32 %s9, 1
      // Predicated region
      $region13: #{closed_call.32} parent=11 // pred_check
        %p118 = pneg %p56
      $region14: #{closed_call.32} parent=11 // pred_check_branch
        %120 = sbr.rel (%p118) target = $region16
      $region15: #{closed_call.32} parent=11 // pred_region
        _
      $region16: #{closed_call.32} parent=11 // pred_fallthru
        _
      // Predicated region
      $region17: #{closed_call.32} parent=11 // pred_check
        %p121 = pneg %p77
      $region18: #{closed_call.32} parent=11 // pred_check_branch
        %123 = sbr.rel (%p121) target = $region20
      $region19: #{closed_call.32} parent=11 // pred_region
        _
      $region20: #{closed_call.32} parent=11 // pred_fallthru
        _
    $region12: #{closed_call.32} parent=5 // pred_fallthru
      _
    %p124 = scmp.lt.s32.totalorder %s9, 4
    // Predicated region
    $region21: #{closed_call.32} parent=5 // pred_check
      %p125 = pneg %p124
    $region22: #{closed_call.32} parent=5 // pred_check_branch
      %127 = sbr.rel (%p125) target = $region24
    $region23: #{closed_call.32} parent=5 // pred_region
      // Predicated region
      $region25: #{closed_call.32} parent=23 // pred_check
        %p128 = pneg %p29
      $region26: #{closed_call.32} parent=23 // pred_check_branch
        %130 = sbr.rel (%p128) target = $region28
      $region27: #{closed_call.32} parent=23 // pred_region
        %s131 = smul.u32 16, %s9
        %p132 = scmp.lt.s32.totalorder %s131, 63
        %s133 = scalar_select %p132, %s131, 63
        %s134 = smul.addr %s133, 4
        %s135 = scalar_lea.vmem %s0, %s134
        %s136 = smul.u32 16, %s9
      $region28: #{closed_call.32} parent=23 // pred_fallthru
        _
    $region24: #{closed_call.32} parent=5 // pred_fallthru
      _
    %p137 = scmp.le.s32.totalorder 1, %s9
    %p138 = scmp.lt.s32.totalorder %s9, 5
    %p139 = pnand %p137, %p138
    %p140 = pneg %p139
    // Predicated region
    $region29: #{closed_call.32} parent=5 // pred_check
      _
    $region30: #{closed_call.32} parent=5 // pred_check_branch
      %142 = sbr.rel (%p139) target = $region32
    $region31: #{closed_call.32} parent=5 // pred_region
      %s143 = ssub.s32 %s9, 1
      %s144 = smul.u32 16, %s14
      %p145 = scmp.lt.s32.totalorder %s144, 63
      %s146 = scalar_select %p145, %s144, 63
      %s147 = smul.addr %s146, 4
      %s148 = scalar_lea.vmem %s0, %s147
      %p149 = pneg %p35
      %p150 = pneg %p32
      %p151 = pneg %p56
      %p152 = pneg %p53
      %p153 = pneg %p77
      %p154 = pneg %p74
      %p155 = pneg %p103
      %p156 = pneg %p100
      %s157 = smul.u32 16, %s14
      %p158 = scmp.lt.s32.totalorder %s157, 63
      %s159 = scalar_select %p158, %s157, 63
      %s160 = smul.addr %s159, 4
      %s161 = scalar_lea.vmem %s3, %s160
      %s162 = smul.u32 16, %s14
      %p163 = scmp.lt.s32.totalorder %s162, 63
      %s164 = scalar_select %p163, %s162, 63
      %s165 = smul.addr %s164, 4
      %s166 = scalar_lea.vmem %s0, %s165
      %s167 = smul.u32 16, %s14
      %s168 = smul.u32 16, %s14
      %p169 = scmp.lt.s32.totalorder %s168, 63
      %s170 = scalar_select %p169, %s168, 63
      %s171 = smul.addr %s170, 4
      %s172 = scalar_lea.vmem %s3, %s171
      %s173 = smul.u32 16, %s14
      %v175 = vld [vmem:[%s166] sm:$0xf]
      %v176 = vld [vmem:[%s166 + $0x4] sm:$0xf]
      %v177 = vld [vmem:[%s166 + $0x8] sm:$0xf]
      %v178 = vld [vmem:[%s166 + $0xc] sm:$0xf]
      %v179 = vld [vmem:[%s166 + $0x10] sm:$0xf]
      %v180 = vld [vmem:[%s166 + $0x14] sm:$0xf]
      %v181 = vld [vmem:[%s166 + $0x18] sm:$0xf]
      %v182 = vld [vmem:[%s166 + $0x1c] sm:$0xf]
      %v183 = vld [vmem:[%s166 + $0x20] sm:$0xf]
      %v184 = vld [vmem:[%s166 + $0x24] sm:$0xf]
      %v185 = vld [vmem:[%s166 + $0x28] sm:$0xf]
      %v186 = vld [vmem:[%s166 + $0x2c] sm:$0xf]
      %v187 = vld [vmem:[%s166 + $0x30] sm:$0xf]
      %v188 = vld [vmem:[%s166 + $0x34] sm:$0xf]
      %v189 = vld [vmem:[%s166 + $0x38] sm:$0xf]
      %v190 = vld [vmem:[%s166 + $0x3c] sm:$0xf]
      %v191 = vld [vmem:[%s1] sm:$0xf]
      %v192 = vld [vmem:[%s1 + $0x4] sm:$0xf]
      %v193 = vld [vmem:[%s1 + $0x8] sm:$0xf]
      %v194 = vld [vmem:[%s1 + $0xc] sm:$0xf]
      %v195 = vld [vmem:[%s1 + $0x10] sm:$0xf]
      %v196 = vld [vmem:[%s1 + $0x14] sm:$0xf]
      %v197 = vld [vmem:[%s1 + $0x18] sm:$0xf]
      %v198 = vld [vmem:[%s1 + $0x1c] sm:$0xf]
      %v199 = vld [vmem:[%s1 + $0x20] sm:$0xf]
      %v200 = vld [vmem:[%s2] sm:$0x1]
      %v202 = vlaneseq
      %v203 = vshrl.u32 %v202, 7
      %v204 = vsub.s32 0, %v203
      %v205 = vrot.slane %v200, %v204
      %v223 = vunpack.c.l.b16 %v175
      %v224 = vunpack.c.l.b16 %v176
      %v225 = vunpack.c.l.b16 %v177
      %v226 = vunpack.c.l.b16 %v178
      %v227 = vunpack.c.l.b16 %v179
      %v228 = vunpack.c.l.b16 %v180
      %v229 = vunpack.c.l.b16 %v181
      %v230 = vunpack.c.l.b16 %v182
      %v231 = vunpack.c.l.b16 %v183
      %v232 = vunpack.c.l.b16 %v184
      %v233 = vunpack.c.l.b16 %v185
      %v234 = vunpack.c.l.b16 %v186
      %v235 = vunpack.c.l.b16 %v187
      %v236 = vunpack.c.l.b16 %v188
      %v237 = vunpack.c.l.b16 %v189
      %v238 = vunpack.c.l.b16 %v190
      %v239 = vpack.c.b16 %v224, %v223
      %v240 = vpack.c.b16 %v226, %v225
      %v241 = vpack.c.b16 %v228, %v227
      %v242 = vpack.c.b16 %v230, %v229
      %v243 = vpack.c.b16 %v232, %v231
      %v244 = vpack.c.b16 %v234, %v233
      %v245 = vpack.c.b16 %v236, %v235
      %v246 = vpack.c.b16 %v238, %v237
      %v256 = vunpack.c.l.b16 %v191
      %v257 = vunpack.c.l.b16 %v192
      %v258 = vunpack.c.l.b16 %v193
      %v259 = vunpack.c.l.b16 %v194
      %v260 = vunpack.c.l.b16 %v195
      %v261 = vunpack.c.l.b16 %v196
      %v262 = vunpack.c.l.b16 %v197
      %v263 = vunpack.c.l.b16 %v198
      %v264 = vunpack.c.l.b16 %v199
      %v265 = vpack.c.b16 %v257, %v256
      %v266 = vpack.c.b16 %v259, %v258
      %v267 = vpack.c.b16 %v261, %v260
      %v268 = vpack.c.b16 %v263, %v262
      %v269 = vpack.c.b16 %v264, %v264
      %vm274 = vcmask 588800
      %v276 = vsel %vm274, %v239, 0
      %v279 = vsel %vm274, %v240, 0
      %v282 = vsel %vm274, %v241, 0
      %v285 = vsel %vm274, %v242, 0
      %v288 = vsel %vm274, %v243, 0
      %v291 = vsel %vm274, %v244, 0
      %v294 = vsel %vm274, %v245, 0
      %v297 = vsel %vm274, %v246, 0
      %vm299 = vcmask 1043456
      %v301 = vsel %vm299, %v269, 0
      %303 = vmatprep.subr.bf16.mxu0 0
      %304 = vmatpush1.bf16.msra.mxu0 %v265
      %305 = vmatprep.subr.bf16.mxu0 0
      %306 = vmatpush1.bf16.msra.mxu0 %v266
      %307 = vmatprep.subr.bf16.mxu0 0
      %308 = vmatpush1.bf16.msra.mxu0 %v267
      %309 = vmatprep.subr.bf16.mxu0 0
      %310 = vmatpush1.bf16.msra.mxu0 %v268
      %311 = vmatprep.subr.bf16.mxu0 0
      %312 = vmatpush1.bf16.msra.mxu0 %v301
      %313 = vmatprep.subr.bf16.mxu0 0
      %314 = vmatpush1.bf16.msra.mxu0 0
      %315 = vmatprep.subr.bf16.mxu0 0
      %316 = vmatpush1.bf16.msra.mxu0 0
      %317 = vmatprep.subr.bf16.mxu0 0
      %318 = vmatpush1.bf16.msra.mxu0 0
      %319 = vmatprep.subr.bf16.mxu0 0
      %320 = vmatpush1.bf16.msra.mxu0 0
      %321 = vmatprep.subr.bf16.mxu0 0
      %322 = vmatpush1.bf16.msra.mxu0 0
      %323 = vmatprep.subr.bf16.mxu0 0
      %324 = vmatpush1.bf16.msra.mxu0 0
      %325 = vmatprep.subr.bf16.mxu0 0
      %326 = vmatpush1.bf16.msra.mxu0 0
      %327 = vmatprep.subr.bf16.mxu0 0
      %328 = vmatpush1.bf16.msra.mxu0 0
      %329 = vmatprep.subr.bf16.mxu0 0
      %330 = vmatpush1.bf16.msra.mxu0 0
      %331 = vmatprep.subr.bf16.mxu0 0
      %332 = vmatpush1.bf16.msra.mxu0 0
      %333 = vmatprep.subr.bf16.mxu0 0
      %334 = vmatpush1.bf16.msra.mxu0 0
      %335 = vmatprep.mubr.bf16.mxu0 0
      %336 = vmatmul.mubr.bf16.gmra.mrb[0].mxu0 %v276
      %v337 = vpop.f32.mrb[0].mxu0
      %v338 = vadd.f32 %v205, %v337
      %v339 = vpop.f32.mrb[0].mxu0
      %v340 = vpop.f32.mrb[0].mxu0
      %v341 = vadd.f32 %v205, %v340
      %v342 = vpop.f32.mrb[0].mxu0
      %343 = vmatprep.mubr.bf16.mxu0 0
      %344 = vmatmul.mubr.bf16.gmra.mrb[0].mxu0 %v279
      %v345 = vpop.f32.mrb[0].mxu0
      %v346 = vadd.f32 %v205, %v345
      %v347 = vpop.f32.mrb[0].mxu0
      %v348 = vpop.f32.mrb[0].mxu0
      %v349 = vadd.f32 %v205, %v348
      %v350 = vpop.f32.mrb[0].mxu0
      %351 = vmatprep.mubr.bf16.mxu0 0
      %352 = vmatmul.mubr.bf16.gmra.mrb[0].mxu0 %v282
      %v353 = vpop.f32.mrb[0].mxu0
      %v354 = vadd.f32 %v205, %v353
      %v355 = vpop.f32.mrb[0].mxu0
      %v356 = vpop.f32.mrb[0].mxu0
      %v357 = vadd.f32 %v205, %v356
      %v358 = vpop.f32.mrb[0].mxu0
      %359 = vmatprep.mubr.bf16.mxu0 0
      %360 = vmatmul.mubr.bf16.gmra.mrb[0].mxu0 %v285
      %v361 = vpop.f32.mrb[0].mxu0
      %v362 = vadd.f32 %v205, %v361
      %v363 = vpop.f32.mrb[0].mxu0
      %v364 = vpop.f32.mrb[0].mxu0
      %v365 = vadd.f32 %v205, %v364
      %v366 = vpop.f32.mrb[0].mxu0
      %367 = vmatprep.mubr.bf16.mxu0 0
      %368 = vmatmul.mubr.bf16.gmra.mrb[0].mxu0 %v288
      %v369 = vpop.f32.mrb[0].mxu0
      %v370 = vadd.f32 %v205, %v369
      %v371 = vpop.f32.mrb[0].mxu0
      %v372 = vpop.f32.mrb[0].mxu0
      %v373 = vadd.f32 %v205, %v372
      %v374 = vpop.f32.mrb[0].mxu0
      %375 = vmatprep.mubr.bf16.mxu0 0
      %376 = vmatmul.mubr.bf16.gmra.mrb[0].mxu0 %v291
      %v377 = vpop.f32.mrb[0].mxu0
      %v378 = vadd.f32 %v205, %v377
      %v379 = vpop.f32.mrb[0].mxu0
      %v380 = vpop.f32.mrb[0].mxu0
      %v381 = vadd.f32 %v205, %v380
      %v382 = vpop.f32.mrb[0].mxu0
      %383 = vmatprep.mubr.bf16.mxu0 0
      %384 = vmatmul.mubr.bf16.gmra.mrb[0].mxu0 %v294
      %v385 = vpop.f32.mrb[0].mxu0
      %v386 = vadd.f32 %v205, %v385
      %v387 = vpop.f32.mrb[0].mxu0
      %v388 = vpop.f32.mrb[0].mxu0
      %v389 = vadd.f32 %v205, %v388
      %v390 = vpop.f32.mrb[0].mxu0
      %391 = vmatprep.mubr.bf16.mxu0 0
      %392 = vmatmul.mubr.bf16.gmra.mrb[0].mxu0 %v297
      %v393 = vpop.f32.mrb[0].mxu0
      %v394 = vadd.f32 %v205, %v393
      %v395 = vpop.f32.mrb[0].mxu0
      %v396 = vpop.f32.mrb[0].mxu0
      %v397 = vadd.f32 %v205, %v396
      %v398 = vpop.f32.mrb[0].mxu0
      %399 = vdwg.mxu0
      %v400 = vxor.u32 %v338, 2147483648
      %v401 = vxor.u32 %v341, 2147483648
      %v402 = vxor.u32 %v346, 2147483648
      %v403 = vxor.u32 %v349, 2147483648
      %v404 = vxor.u32 %v354, 2147483648
      %v405 = vxor.u32 %v357, 2147483648
      %v406 = vxor.u32 %v362, 2147483648
      %v407 = vxor.u32 %v365, 2147483648
      %v408 = vxor.u32 %v370, 2147483648
      %v409 = vxor.u32 %v373, 2147483648
      %v410 = vxor.u32 %v378, 2147483648
      %v411 = vxor.u32 %v381, 2147483648
      %v412 = vxor.u32 %v386, 2147483648
      %v413 = vxor.u32 %v389, 2147483648
      %v414 = vxor.u32 %v394, 2147483648
      %v415 = vxor.u32 %v397, 2147483648
      %v416 = vmul.f32 %v400, 1.442695
      %v417 = vpow.pop %v416
      %v418 = vmul.f32 %v401, 1.442695
      %v419 = vpow.pop %v418
      %v420 = vmul.f32 %v402, 1.442695
      %v421 = vpow.pop %v420
      %v422 = vmul.f32 %v403, 1.442695
      %v423 = vpow.pop %v422
      %v424 = vmul.f32 %v404, 1.442695
      %v425 = vpow.pop %v424
      %v426 = vmul.f32 %v405, 1.442695
      %v427 = vpow.pop %v426
      %v428 = vmul.f32 %v406, 1.442695
      %v429 = vpow.pop %v428
      %v430 = vmul.f32 %v407, 1.442695
      %v431 = vpow.pop %v430
      %v432 = vmul.f32 %v408, 1.442695
      %v433 = vpow.pop %v432
      %v434 = vmul.f32 %v409, 1.442695
      %v435 = vpow.pop %v434
      %v436 = vmul.f32 %v410, 1.442695
      %v437 = vpow.pop %v436
      %v438 = vmul.f32 %v411, 1.442695
      %v439 = vpow.pop %v438
      %v440 = vmul.f32 %v412, 1.442695
      %v441 = vpow.pop %v440
      %v442 = vmul.f32 %v413, 1.442695
      %v443 = vpow.pop %v442
      %v444 = vmul.f32 %v414, 1.442695
      %v445 = vpow.pop %v444
      %v446 = vmul.f32 %v415, 1.442695
      %v447 = vpow.pop %v446
      %v448 = vadd.f32 %v417, 1.0
      %v449 = vadd.f32 %v419, 1.0
      %v450 = vadd.f32 %v421, 1.0
      %v451 = vadd.f32 %v423, 1.0
      %v452 = vadd.f32 %v425, 1.0
      %v453 = vadd.f32 %v427, 1.0
      %v454 = vadd.f32 %v429, 1.0
      %v455 = vadd.f32 %v431, 1.0
      %v456 = vadd.f32 %v433, 1.0
      %v457 = vadd.f32 %v435, 1.0
      %v458 = vadd.f32 %v437, 1.0
      %v459 = vadd.f32 %v439, 1.0
      %v460 = vadd.f32 %v441, 1.0
      %v461 = vadd.f32 %v443, 1.0
      %v462 = vadd.f32 %v445, 1.0
      %v463 = vadd.f32 %v447, 1.0
      %v464 = vrcp.pop %v448
      %v465 = vmul.f32 1.0, %v464
      %v466 = vrcp.pop %v449
      %v467 = vmul.f32 1.0, %v466
      %v468 = vrcp.pop %v450
      %v469 = vmul.f32 1.0, %v468
      %v470 = vrcp.pop %v451
      %v471 = vmul.f32 1.0, %v470
      %v472 = vrcp.pop %v452
      %v473 = vmul.f32 1.0, %v472
      %v474 = vrcp.pop %v453
      %v475 = vmul.f32 1.0, %v474
      %v476 = vrcp.pop %v454
      %v477 = vmul.f32 1.0, %v476
      %v478 = vrcp.pop %v455
      %v479 = vmul.f32 1.0, %v478
      %v480 = vrcp.pop %v456
      %v481 = vmul.f32 1.0, %v480
      %v482 = vrcp.pop %v457
      %v483 = vmul.f32 1.0, %v482
      %v484 = vrcp.pop %v458
      %v485 = vmul.f32 1.0, %v484
      %v486 = vrcp.pop %v459
      %v487 = vmul.f32 1.0, %v486
      %v488 = vrcp.pop %v460
      %v489 = vmul.f32 1.0, %v488
      %v490 = vrcp.pop %v461
      %v491 = vmul.f32 1.0, %v490
      %v492 = vrcp.pop %v462
      %v493 = vmul.f32 1.0, %v492
      %v494 = vrcp.pop %v463
      %v495 = vmul.f32 1.0, %v494
      %v496 = vmul.f32 %v338, %v465
      %v497 = vmul.f32 %v341, %v467
      %v498 = vmul.f32 %v346, %v469
      %v499 = vmul.f32 %v349, %v471
      %v500 = vmul.f32 %v354, %v473
      %v501 = vmul.f32 %v357, %v475
      %v502 = vmul.f32 %v362, %v477
      %v503 = vmul.f32 %v365, %v479
      %v504 = vmul.f32 %v370, %v481
      %v505 = vmul.f32 %v373, %v483
      %v506 = vmul.f32 %v378, %v485
      %v507 = vmul.f32 %v381, %v487
      %v508 = vmul.f32 %v386, %v489
      %v509 = vmul.f32 %v389, %v491
      %v510 = vmul.f32 %v394, %v493
      %v511 = vmul.f32 %v397, %v495
      %v512 = vpack.c.bf16 %v497, %v496
      %v513 = vpack.c.bf16 %v499, %v498
      %v514 = vpack.c.bf16 %v501, %v500
      %v515 = vpack.c.bf16 %v503, %v502
      %v516 = vpack.c.bf16 %v505, %v504
      %v517 = vpack.c.bf16 %v507, %v506
      %v518 = vpack.c.bf16 %v509, %v508
      %v519 = vpack.c.bf16 %v511, %v510
      %v528 = vunpack.c.l.b16 %v512
      %v529 = vunpack.c.h.b16 %v512
      %v530 = vunpack.c.l.b16 %v513
      %v531 = vunpack.c.h.b16 %v513
      %v532 = vunpack.c.l.b16 %v514
      %v533 = vunpack.c.h.b16 %v514
      %v534 = vunpack.c.l.b16 %v515
      %v535 = vunpack.c.h.b16 %v515
      %v536 = vunpack.c.l.b16 %v516
      %v537 = vunpack.c.h.b16 %v516
      %v538 = vunpack.c.l.b16 %v517
      %v539 = vunpack.c.h.b16 %v517
      %v540 = vunpack.c.l.b16 %v518
      %v541 = vunpack.c.h.b16 %v518
      %v542 = vunpack.c.l.b16 %v519
      %v543 = vunpack.c.h.b16 %v519
      %v544 = vpack.c.b16 %v528, %v528
      %v545 = vpack.c.b16 %v529, %v529
      %v546 = vpack.c.b16 %v530, %v530
      %v547 = vpack.c.b16 %v531, %v531
      %v548 = vpack.c.b16 %v532, %v532
      %v549 = vpack.c.b16 %v533, %v533
      %v550 = vpack.c.b16 %v534, %v534
      %v551 = vpack.c.b16 %v535, %v535
      %v552 = vpack.c.b16 %v536, %v536
      %v553 = vpack.c.b16 %v537, %v537
      %v554 = vpack.c.b16 %v538, %v538
      %v555 = vpack.c.b16 %v539, %v539
      %v556 = vpack.c.b16 %v540, %v540
      %v557 = vpack.c.b16 %v541, %v541
      %v558 = vpack.c.b16 %v542, %v542
      %v559 = vpack.c.b16 %v543, %v543
      %vm576 = vcmask 257024
      %577 = vst.msk [vmem:[%s172] sm:$0xf] %vm576, %v544
      %578 = vst.msk [vmem:[%s172 + $0x4] sm:$0xf] %vm576, %v545
      %579 = vst.msk [vmem:[%s172 + $0x8] sm:$0xf] %vm576, %v546
      %580 = vst.msk [vmem:[%s172 + $0xc] sm:$0xf] %vm576, %v547
      %581 = vst.msk [vmem:[%s172 + $0x10] sm:$0xf] %vm576, %v548
      %582 = vst.msk [vmem:[%s172 + $0x14] sm:$0xf] %vm576, %v549
      %583 = vst.msk [vmem:[%s172 + $0x18] sm:$0xf] %vm576, %v550
      %584 = vst.msk [vmem:[%s172 + $0x1c] sm:$0xf] %vm576, %v551
      %585 = vst.msk [vmem:[%s172 + $0x20] sm:$0xf] %vm576, %v552
      %586 = vst.msk [vmem:[%s172 + $0x24] sm:$0xf] %vm576, %v553
      %587 = vst.msk [vmem:[%s172 + $0x28] sm:$0xf] %vm576, %v554
      %588 = vst.msk [vmem:[%s172 + $0x2c] sm:$0xf] %vm576, %v555
      %589 = vst.msk [vmem:[%s172 + $0x30] sm:$0xf] %vm576, %v556
      %590 = vst.msk [vmem:[%s172 + $0x34] sm:$0xf] %vm576, %v557
      %591 = vst.msk [vmem:[%s172 + $0x38] sm:$0xf] %vm576, %v558
      %592 = vst.msk [vmem:[%s172 + $0x3c] sm:$0xf] %vm576, %v559
      %s593 = smul.u32 16, %s14
      %p594 = scmp.lt.s32.totalorder %s593, 63
      %s595 = scalar_select %p594, %s593, 63
      %s596 = smul.addr %s595, 4
      %s597 = scalar_lea.vmem %s3, %s596
      // Predicated region
      $region33: #{closed_call.32} parent=31 // pred_check
        %p598 = pneg %p100
      $region34: #{closed_call.32} parent=31 // pred_check_branch
        %600 = sbr.rel (%p598) target = $region36
      $region35: #{closed_call.32} parent=31 // pred_region
        %s601 = smul.u32 16, %s14
      $region36: #{closed_call.32} parent=31 // pred_fallthru
        _
    $region32: #{closed_call.32} parent=5 // pred_fallthru
      _
    %p602 = scmp.le.s32.totalorder 2, %s9
    // Predicated region
    $region37: #{closed_call.32} parent=5 // pred_check
      %p603 = pneg %p602
    $region38: #{closed_call.32} parent=5 // pred_check_branch
      %605 = sbr.rel (%p603) target = $region40
    $region39: #{closed_call.32} parent=5 // pred_region
      %s606 = ssub.s32 %s9, 2
      // Predicated region
      $region41: #{closed_call.32} parent=39 // pred_check
        %p607 = pneg %p106
      $region42: #{closed_call.32} parent=39 // pred_check_branch
        %609 = sbr.rel (%p607) target = $region44
      $region43: #{closed_call.32} parent=39 // pred_region
        %s610 = smul.u32 16, %s15
        %p611 = scmp.lt.s32.totalorder %s610, 63
        %s612 = scalar_select %p611, %s610, 63
        %s613 = smul.addr %s612, 4
        %s614 = scalar_lea.vmem %s3, %s613
      $region44: #{closed_call.32} parent=39 // pred_fallthru
        _
    $region40: #{closed_call.32} parent=5 // pred_fallthru
      _
  $region6: #{closed_call.32} parent=0 // loop_footer
    %s13 = sadd.s32 1, %s9
  $region7: #{closed_call.32} parent=0 // loop_footer_branch
    %8 = sbr.rel target = $region3
  $region8: #{closed_call.32} parent=0 // loop_exit
    _

// kernel: closed_call.33
$region0: #{closed_call.33}
  #allocation0 [shape = 'u32[]', space=smem, size = 0x4, offset = 0x4, fixed_abs, tag = 'smem constant byte address 0x4 - core index']
  #allocation1 [shape = 'u32[144,128]{1,0:T(1,128)}', space=vmem, size = 0x12000, scoped, tag = 'internal scratch']
  %s0 = inlined_call_operand.vmem [shape: bf16[512,288], index: 0, kind: input, shape index: {}]
  %s1 = inlined_call_operand.vmem [shape: bf16[288,32], index: 1, kind: input, shape index: {}]
  %s2 = inlined_call_operand.vmem [shape: f32[1,32], index: 2, kind: input, shape index: {}]
  %s3 = inlined_call_operand.vmem [shape: bf16[512,32], index: 3, kind: output, shape index: {}]
  %s4 = sld [smem:[#allocation0]]
  $region45: #{closed_call.33} parent=0
    _
  %s6 = ssub.s32 1, %s4
  %s7 = scalar_select 0, %s6, %s4
  loop: start=0, step=1, limit=6
  $region2: #{closed_call.33} parent=0 // loop_pre_header
    _
  $region3: #{closed_call.33} parent=0 // loop_header
    %s9 = sphi 0, %s13
    %p10 = scmp.ge.s32.totalorder %s9, 6
    %s19 = sphi 0, %s21
    %s22 = sphi 0, %s19
    %s23 = sphi 0, %s22
    %s39 = sphi 0, %s23
    %s43 = sphi 0, %s43
    %s45 = sphi 0, %s43
    %s46 = sphi 0, %s45
    %s60 = sphi 0, %s46
    %s64 = sphi 0, %s64
    %s66 = sphi 0, %s64
    %s67 = sphi 0, %s66
    %s81 = sphi 0, %s67
    %s87 = sphi 0, %s89
    %s90 = sphi 0, %s87
    %s91 = sphi 0, %s90
    %s107 = sphi 0, %s91
  $region4: #{closed_call.33} parent=0 // loop_header_branch
    %12 = sbr.rel (%p10) target = $region8
  $region5: #{closed_call.33} parent=0 // loop_body
    %s14 = ssub.s32 %s9, 1
    %s15 = ssub.s32 %s9, 2
    %s16 = sadd.s32 %s9, 1
    %s17 = ssub.s32 %s9, %s16
    %p18 = scmp.eq.s32.totalorder %s17, 0
    %s20 = sadd.s32 %s19, 1
    %s21 = scalar_select %p18, %s19, %s20
    %p24 = pneg %p18
    %p25 = scmp.eq.s32.totalorder %s9, 3
    %p26 = por %p24, %p25
    %p27 = scmp.ne.s32.totalorder %s19, %s22
    %p28 = scmp.eq.s32.totalorder %s9, 0
    %p29 = por %p27, %p28
    %p30 = scmp.ne.s32.totalorder %s19, %s22
    %p31 = scmp.eq.s32.totalorder %s14, 3
    %p32 = por %p30, %p31
    %p33 = scmp.ne.s32.totalorder %s22, %s23
    %p34 = scmp.eq.s32.totalorder %s14, 0
    %p35 = por %p33, %p34
    %p36 = scmp.ne.s32.totalorder %s22, %s23
    %p37 = scmp.eq.s32.totalorder %s15, 3
    %p38 = por %p36, %p37
    %p40 = scmp.ne.s32.totalorder %s23, %s39
    %p41 = scmp.eq.s32.totalorder %s15, 0
    %p42 = por %p40, %p41
    %s44 = sadd.s32 %s43, 1
    %p47 = scmp.eq.s32.totalorder %s9, 3
    %p48 = scmp.ne.s32.totalorder %s43, %s45
    %p49 = scmp.eq.s32.totalorder %s9, 0
    %p50 = por %p48, %p49
    %p51 = scmp.ne.s32.totalorder %s43, %s45
    %p52 = scmp.eq.s32.totalorder %s14, 3
    %p53 = por %p51, %p52
    %p54 = scmp.ne.s32.totalorder %s45, %s46
    %p55 = scmp.eq.s32.totalorder %s14, 0
    %p56 = por %p54, %p55
    %p57 = scmp.ne.s32.totalorder %s45, %s46
    %p58 = scmp.eq.s32.totalorder %s15, 3
    %p59 = por %p57, %p58
    %p61 = scmp.ne.s32.totalorder %s46, %s60
    %p62 = scmp.eq.s32.totalorder %s15, 0
    %p63 = por %p61, %p62
    %s65 = sadd.s32 %s64, 1
    %p68 = scmp.eq.s32.totalorder %s9, 3
    %p69 = scmp.ne.s32.totalorder %s64, %s66
    %p70 = scmp.eq.s32.totalorder %s9, 0
    %p71 = por %p69, %p70
    %p72 = scmp.ne.s32.totalorder %s64, %s66
    %p73 = scmp.eq.s32.totalorder %s14, 3
    %p74 = por %p72, %p73
    %p75 = scmp.ne.s32.totalorder %s66, %s67
    %p76 = scmp.eq.s32.totalorder %s14, 0
    %p77 = por %p75, %p76
    %p78 = scmp.ne.s32.totalorder %s66, %s67
    %p79 = scmp.eq.s32.totalorder %s15, 3
    %p80 = por %p78, %p79
    %p82 = scmp.ne.s32.totalorder %s67, %s81
    %p83 = scmp.eq.s32.totalorder %s15, 0
    %p84 = por %p82, %p83
    %s85 = ssub.s32 %s9, %s16
    %p86 = scmp.eq.s32.totalorder %s85, 0
    %s88 = sadd.s32 %s87, 1
    %s89 = scalar_select %p86, %s87, %s88
    %p92 = pneg %p86
    %p93 = scmp.eq.s32.totalorder %s9, 3
    %p94 = por %p92, %p93
    %p95 = scmp.ne.s32.totalorder %s87, %s90
    %p96 = scmp.eq.s32.totalorder %s9, 0
    %p97 = por %p95, %p96
    %p98 = scmp.ne.s32.totalorder %s87, %s90
    %p99 = scmp.eq.s32.totalorder %s14, 3
    %p100 = por %p98, %p99
    %p101 = scmp.ne.s32.totalorder %s90, %s91
    %p102 = scmp.eq.s32.totalorder %s14, 0
    %p103 = por %p101, %p102
    %p104 = scmp.ne.s32.totalorder %s90, %s91
    %p105 = scmp.eq.s32.totalorder %s15, 3
    %p106 = por %p104, %p105
    %p108 = scmp.ne.s32.totalorder %s91, %s107
    %p109 = scmp.eq.s32.totalorder %s15, 0
    %p110 = por %p108, %p109
    %p111 = scmp.le.s32.totalorder 1, %s9
    %p112 = scmp.lt.s32.totalorder %s9, 5
    %p113 = pnand %p111, %p112
    %p114 = pneg %p113
    // Predicated region
    $region9: #{closed_call.33} parent=5 // pred_check
      _
    $region10: #{closed_call.33} parent=5 // pred_check_branch
      %116 = sbr.rel (%p113) target = $region12
    $region11: #{closed_call.33} parent=5 // pred_region
      %s117 = ssub.s32 %s9, 1
      // Predicated region
      $region13: #{closed_call.33} parent=11 // pred_check
        %p118 = pneg %p56
      $region14: #{closed_call.33} parent=11 // pred_check_branch
        %120 = sbr.rel (%p118) target = $region16
      $region15: #{closed_call.33} parent=11 // pred_region
        _
      $region16: #{closed_call.33} parent=11 // pred_fallthru
        _
      // Predicated region
      $region17: #{closed_call.33} parent=11 // pred_check
        %p121 = pneg %p77
      $region18: #{closed_call.33} parent=11 // pred_check_branch
        %123 = sbr.rel (%p121) target = $region20
      $region19: #{closed_call.33} parent=11 // pred_region
        _
      $region20: #{closed_call.33} parent=11 // pred_fallthru
        _
    $region12: #{closed_call.33} parent=5 // pred_fallthru
      _
    %p124 = scmp.lt.s32.totalorder %s9, 4
    // Predicated region
    $region21: #{closed_call.33} parent=5 // pred_check
      %p125 = pneg %p124
    $region22: #{closed_call.33} parent=5 // pred_check_branch
      %127 = sbr.rel (%p125) target = $region24
    $region23: #{closed_call.33} parent=5 // pred_region
      // Predicated region
      $region25: #{closed_call.33} parent=23 // pred_check
        %p128 = pneg %p29
      $region26: #{closed_call.33} parent=23 // pred_check_branch
        %130 = sbr.rel (%p128) target = $region28
      $region27: #{closed_call.33} parent=23 // pred_region
        %s131 = smul.u32 16, %s9
        %p132 = scmp.lt.s32.totalorder %s131, 63
        %s133 = scalar_select %p132, %s131, 63
        %s134 = smul.addr %s133, 3
        %s135 = smul.addr %s134, 4
        %s136 = scalar_lea.vmem %s0, %s135
        %s137 = smul.u32 16, %s9
      $region28: #{closed_call.33} parent=23 // pred_fallthru
        _
    $region24: #{closed_call.33} parent=5 // pred_fallthru
      _
    %p138 = scmp.le.s32.totalorder 1, %s9
    %p139 = scmp.lt.s32.totalorder %s9, 5
    %p140 = pnand %p138, %p139
    %p141 = pneg %p140
    // Predicated region
    $region29: #{closed_call.33} parent=5 // pred_check
      _
    $region30: #{closed_call.33} parent=5 // pred_check_branch
      %143 = sbr.rel (%p140) target = $region32
    $region31: #{closed_call.33} parent=5 // pred_region
      %s144 = ssub.s32 %s9, 1
      %s145 = smul.u32 16, %s14
      %p146 = scmp.lt.s32.totalorder %s145, 63
      %s147 = scalar_select %p146, %s145, 63
      %s148 = smul.addr %s147, 3
      %s149 = smul.addr %s148, 4
      %s150 = scalar_lea.vmem %s0, %s149
      %p151 = pneg %p35
      %p152 = pneg %p32
      %p153 = pneg %p56
      %p154 = pneg %p53
      %p155 = pneg %p77
      %p156 = pneg %p74
      %p157 = pneg %p103
      %p158 = pneg %p100
      %s159 = smul.u32 16, %s14
      %p160 = scmp.lt.s32.totalorder %s159, 63
      %s161 = scalar_select %p160, %s159, 63
      %s162 = smul.addr %s161, 4
      %s163 = scalar_lea.vmem %s3, %s162
      %s164 = smul.u32 16, %s14
      %p165 = scmp.lt.s32.totalorder %s164, 63
      %s166 = scalar_select %p165, %s164, 63
      %s167 = smul.addr %s166, 3
      %s168 = smul.addr %s167, 4
      %s169 = scalar_lea.vmem %s0, %s168
      %s170 = smul.u32 16, %s14
      %s171 = smul.u32 16, %s14
      %p172 = scmp.lt.s32.totalorder %s171, 63
      %s173 = scalar_select %p172, %s171, 63
      %s174 = smul.addr %s173, 4
      %s175 = scalar_lea.vmem %s3, %s174
      %s176 = smul.u32 16, %s14
      %v178 = vld [vmem:[%s169] sm:$0xff]
      %v179 = vld [vmem:[%s169 + $0x8] sm:$0xf]
      %v180 = vld [vmem:[%s169 + $0xc] sm:$0xff]
      %v181 = vld [vmem:[%s169 + $0x14] sm:$0xf]
      %v182 = vld [vmem:[%s169 + $0x18] sm:$0xff]
      %v183 = vld [vmem:[%s169 + $0x20] sm:$0xf]
      %v184 = vld [vmem:[%s169 + $0x24] sm:$0xff]
      %v185 = vld [vmem:[%s169 + $0x2c] sm:$0xf]
      %v186 = vld [vmem:[%s169 + $0x30] sm:$0xff]
      %v187 = vld [vmem:[%s169 + $0x38] sm:$0xf]
      %v188 = vld [vmem:[%s169 + $0x3c] sm:$0xff]
      %v189 = vld [vmem:[%s169 + $0x44] sm:$0xf]
      %v190 = vld [vmem:[%s169 + $0x48] sm:$0xff]
      %v191 = vld [vmem:[%s169 + $0x50] sm:$0xf]
      %v192 = vld [vmem:[%s169 + $0x54] sm:$0xff]
      %v193 = vld [vmem:[%s169 + $0x5c] sm:$0xf]
      %v194 = vld [vmem:[%s169 + $0x60] sm:$0xff]
      %v195 = vld [vmem:[%s169 + $0x68] sm:$0xf]
      %v196 = vld [vmem:[%s169 + $0x6c] sm:$0xff]
      %v197 = vld [vmem:[%s169 + $0x74] sm:$0xf]
      %v198 = vld [vmem:[%s169 + $0x78] sm:$0xff]
      %v199 = vld [vmem:[%s169 + $0x80] sm:$0xf]
      %v200 = vld [vmem:[%s169 + $0x84] sm:$0xff]
      %v201 = vld [vmem:[%s169 + $0x8c] sm:$0xf]
      %v202 = vld [vmem:[%s169 + $0x90] sm:$0xff]
      %v203 = vld [vmem:[%s169 + $0x98] sm:$0xf]
      %v204 = vld [vmem:[%s169 + $0x9c] sm:$0xff]
      %v205 = vld [vmem:[%s169 + $0xa4] sm:$0xf]
      %v206 = vld [vmem:[%s169 + $0xa8] sm:$0xff]
      %v207 = vld [vmem:[%s169 + $0xb0] sm:$0xf]
      %v208 = vld [vmem:[%s169 + $0xb4] sm:$0xff]
      %v209 = vld [vmem:[%s169 + $0xbc] sm:$0xf]
      %v210 = vld [vmem:[%s1] sm:$0xf]
      %v211 = vld [vmem:[%s1 + $0x4] sm:$0xf]
      %v212 = vld [vmem:[%s1 + $0x8] sm:$0xf]
      %v213 = vld [vmem:[%s1 + $0xc] sm:$0xf]
      %v214 = vld [vmem:[%s1 + $0x10] sm:$0xf]
      %v215 = vld [vmem:[%s1 + $0x14] sm:$0xf]
      %v216 = vld [vmem:[%s1 + $0x18] sm:$0xf]
      %v217 = vld [vmem:[%s1 + $0x1c] sm:$0xf]
      %v218 = vld [vmem:[%s1 + $0x20] sm:$0xf]
      %v219 = vld [vmem:[%s1 + $0x24] sm:$0xf]
      %v220 = vld [vmem:[%s1 + $0x28] sm:$0xf]
      %v221 = vld [vmem:[%s1 + $0x2c] sm:$0xf]
      %v222 = vld [vmem:[%s1 + $0x30] sm:$0xf]
      %v223 = vld [vmem:[%s1 + $0x34] sm:$0xf]
      %v224 = vld [vmem:[%s1 + $0x38] sm:$0xf]
      %v225 = vld [vmem:[%s1 + $0x3c] sm:$0xf]
      %v226 = vld [vmem:[%s1 + $0x40] sm:$0xf]
      %v227 = vld [vmem:[%s1 + $0x44] sm:$0xf]
      %v228 = vld [vmem:[%s1 + $0x48] sm:$0xf]
      %v229 = vld [vmem:[%s1 + $0x4c] sm:$0xf]
      %v230 = vld [vmem:[%s1 + $0x50] sm:$0xf]
      %v231 = vld [vmem:[%s1 + $0x54] sm:$0xf]
      %v232 = vld [vmem:[%s1 + $0x58] sm:$0xf]
      %v233 = vld [vmem:[%s1 + $0x5c] sm:$0xf]
      %v234 = vld [vmem:[%s1 + $0x60] sm:$0xf]
      %v235 = vld [vmem:[%s1 + $0x64] sm:$0xf]
      %v236 = vld [vmem:[%s1 + $0x68] sm:$0xf]
      %v237 = vld [vmem:[%s1 + $0x6c] sm:$0xf]
      %v238 = vld [vmem:[%s1 + $0x70] sm:$0xf]
      %v239 = vld [vmem:[%s1 + $0x74] sm:$0xf]
      %v240 = vld [vmem:[%s1 + $0x78] sm:$0xf]
      %v241 = vld [vmem:[%s1 + $0x7c] sm:$0xf]
      %v242 = vld [vmem:[%s1 + $0x80] sm:$0xf]
      %v243 = vld [vmem:[%s1 + $0x84] sm:$0xf]
      %v244 = vld [vmem:[%s1 + $0x88] sm:$0xf]
      %v245 = vld [vmem:[%s1 + $0x8c] sm:$0xf]
      %v246 = vld [vmem:[%s2] sm:$0x1]
      %v248 = vlaneseq
      %v249 = vshrl.u32 %v248, 7
      %v250 = vsub.s32 0, %v249
      %v251 = vrot.slane %v246, %v250
      %v285 = vunpack.c.l.b16 %v178
      %v286 = vunpack.c.h.b16 %v178
      %v287 = vunpack.c.l.b16 %v179
      %v288 = vunpack.c.l.b16 %v180
      %v289 = vunpack.c.h.b16 %v180
      %v290 = vunpack.c.l.b16 %v181
      %v291 = vunpack.c.l.b16 %v182
      %v292 = vunpack.c.h.b16 %v182
      %v293 = vunpack.c.l.b16 %v183
      %v294 = vunpack.c.l.b16 %v184
      %v295 = vunpack.c.h.b16 %v184
      %v296 = vunpack.c.l.b16 %v185
      %v297 = vunpack.c.l.b16 %v186
      %v298 = vunpack.c.h.b16 %v186
      %v299 = vunpack.c.l.b16 %v187
      %v300 = vunpack.c.l.b16 %v188
      %v301 = vunpack.c.h.b16 %v188
      %v302 = vunpack.c.l.b16 %v189
      %v303 = vunpack.c.l.b16 %v190
      %v304 = vunpack.c.h.b16 %v190
      %v305 = vunpack.c.l.b16 %v191
      %v306 = vunpack.c.l.b16 %v192
      %v307 = vunpack.c.h.b16 %v192
      %v308 = vunpack.c.l.b16 %v193
      %v309 = vunpack.c.l.b16 %v194
      %v310 = vunpack.c.h.b16 %v194
      %v311 = vunpack.c.l.b16 %v195
      %v312 = vunpack.c.l.b16 %v196
      %v313 = vunpack.c.h.b16 %v196
      %v314 = vunpack.c.l.b16 %v197
      %v315 = vunpack.c.l.b16 %v198
      %v316 = vunpack.c.h.b16 %v198
      %v317 = vunpack.c.l.b16 %v199
      %v318 = vunpack.c.l.b16 %v200
      %v319 = vunpack.c.h.b16 %v200
      %v320 = vunpack.c.l.b16 %v201
      %v321 = vunpack.c.l.b16 %v202
      %v322 = vunpack.c.h.b16 %v202
      %v323 = vunpack.c.l.b16 %v203
      %v324 = vunpack.c.l.b16 %v204
      %v325 = vunpack.c.h.b16 %v204
      %v326 = vunpack.c.l.b16 %v205
      %v327 = vunpack.c.l.b16 %v206
      %v328 = vunpack.c.h.b16 %v206
      %v329 = vunpack.c.l.b16 %v207
      %v330 = vunpack.c.l.b16 %v208
      %v331 = vunpack.c.h.b16 %v208
      %v332 = vunpack.c.l.b16 %v209
      %v333 = vpack.c.b16 %v288, %v285
      %v334 = vpack.c.b16 %v289, %v286
      %v335 = vpack.c.b16 %v290, %v287
      %v336 = vpack.c.b16 %v294, %v291
      %v337 = vpack.c.b16 %v295, %v292
      %v338 = vpack.c.b16 %v296, %v293
      %v339 = vpack.c.b16 %v300, %v297
      %v340 = vpack.c.b16 %v301, %v298
      %v341 = vpack.c.b16 %v302, %v299
      %v342 = vpack.c.b16 %v306, %v303
      %v343 = vpack.c.b16 %v307, %v304
      %v344 = vpack.c.b16 %v308, %v305
      %v345 = vpack.c.b16 %v312, %v309
      %v346 = vpack.c.b16 %v313, %v310
      %v347 = vpack.c.b16 %v314, %v311
      %v348 = vpack.c.b16 %v318, %v315
      %v349 = vpack.c.b16 %v319, %v316
      %v350 = vpack.c.b16 %v320, %v317
      %v351 = vpack.c.b16 %v324, %v321
      %v352 = vpack.c.b16 %v325, %v322
      %v353 = vpack.c.b16 %v326, %v323
      %v354 = vpack.c.b16 %v330, %v327
      %v355 = vpack.c.b16 %v331, %v328
      %v356 = vpack.c.b16 %v332, %v329
      %v409 = vunpack.c.l.b16 %v210
      %v410 = vunpack.c.l.b16 %v211
      %v411 = vunpack.c.l.b16 %v212
      %v412 = vunpack.c.l.b16 %v213
      %v413 = vunpack.c.l.b16 %v214
      %v414 = vunpack.c.l.b16 %v215
      %v415 = vunpack.c.l.b16 %v216
      %v416 = vunpack.c.l.b16 %v217
      %v417 = vunpack.c.l.b16 %v218
      %v418 = vunpack.c.l.b16 %v219
      %v419 = vunpack.c.l.b16 %v220
      %v420 = vunpack.c.l.b16 %v221
      %v421 = vunpack.c.l.b16 %v222
      %v422 = vunpack.c.l.b16 %v223
      %v423 = vunpack.c.l.b16 %v224
      %v424 = vunpack.c.l.b16 %v225
      %v425 = vunpack.c.l.b16 %v226
      %v426 = vunpack.c.l.b16 %v227
      %v427 = vunpack.c.l.b16 %v228
      %v428 = vunpack.c.l.b16 %v229
      %v429 = vunpack.c.l.b16 %v230
      %v430 = vunpack.c.l.b16 %v231
      %v431 = vunpack.c.l.b16 %v232
      %v432 = vunpack.c.l.b16 %v233
      %v433 = vunpack.c.l.b16 %v234
      %v434 = vunpack.c.l.b16 %v235
      %v435 = vunpack.c.l.b16 %v236
      %v436 = vunpack.c.l.b16 %v237
      %v437 = vunpack.c.l.b16 %v238
      %v438 = vunpack.c.l.b16 %v239
      %v439 = vunpack.c.l.b16 %v240
      %v440 = vunpack.c.l.b16 %v241
      %v441 = vunpack.c.l.b16 %v242
      %v442 = vunpack.c.l.b16 %v243
      %v443 = vunpack.c.l.b16 %v244
      %v444 = vunpack.c.l.b16 %v245
      %v445 = vpack.c.b16 %v410, %v409
      %v446 = vpack.c.b16 %v412, %v411
      %v447 = vpack.c.b16 %v414, %v413
      %v448 = vpack.c.b16 %v416, %v415
      %v449 = vpack.c.b16 %v418, %v417
      %v450 = vpack.c.b16 %v420, %v419
      %v451 = vpack.c.b16 %v422, %v421
      %v452 = vpack.c.b16 %v424, %v423
      %v453 = vpack.c.b16 %v426, %v425
      %v454 = vpack.c.b16 %v428, %v427
      %v455 = vpack.c.b16 %v430, %v429
      %v456 = vpack.c.b16 %v432, %v431
      %v457 = vpack.c.b16 %v434, %v433
      %v458 = vpack.c.b16 %v436, %v435
      %v459 = vpack.c.b16 %v438, %v437
      %v460 = vpack.c.b16 %v440, %v439
      %v461 = vpack.c.b16 %v442, %v441
      %v462 = vpack.c.b16 %v444, %v443
      %vm481 = vcmask 261120
      %v483 = vsel %vm481, %v335, 0
      %v486 = vsel %vm481, %v338, 0
      %v489 = vsel %vm481, %v341, 0
      %v492 = vsel %vm481, %v344, 0
      %v495 = vsel %vm481, %v347, 0
      %v498 = vsel %vm481, %v350, 0
      %v501 = vsel %vm481, %v353, 0
      %v504 = vsel %vm481, %v356, 0
      %506 = vmatprep.subr.bf16.mxu0 0
      %507 = vmatpush1.bf16.msra.mxu0 %v445
      %508 = vmatprep.subr.bf16.mxu0 0
      %509 = vmatpush1.bf16.msra.mxu0 %v446
      %510 = vmatprep.subr.bf16.mxu0 0
      %511 = vmatpush1.bf16.msra.mxu0 %v447
      %512 = vmatprep.subr.bf16.mxu0 0
      %513 = vmatpush1.bf16.msra.mxu0 %v448
      %514 = vmatprep.subr.bf16.mxu0 0
      %515 = vmatpush1.bf16.msra.mxu0 %v449
      %516 = vmatprep.subr.bf16.mxu0 0
      %517 = vmatpush1.bf16.msra.mxu0 %v450
      %518 = vmatprep.subr.bf16.mxu0 0
      %519 = vmatpush1.bf16.msra.mxu0 %v451
      %520 = vmatprep.subr.bf16.mxu0 0
      %521 = vmatpush1.bf16.msra.mxu0 %v452
      %522 = vmatprep.subr.bf16.mxu0 0
      %523 = vmatpush1.bf16.msra.mxu0 %v453
      %524 = vmatprep.subr.bf16.mxu0 0
      %525 = vmatpush1.bf16.msra.mxu0 %v454
      %526 = vmatprep.subr.bf16.mxu0 0
      %527 = vmatpush1.bf16.msra.mxu0 %v455
      %528 = vmatprep.subr.bf16.mxu0 0
      %529 = vmatpush1.bf16.msra.mxu0 %v456
      %530 = vmatprep.subr.bf16.mxu0 0
      %531 = vmatpush1.bf16.msra.mxu0 %v457
      %532 = vmatprep.subr.bf16.mxu0 0
      %533 = vmatpush1.bf16.msra.mxu0 %v458
      %534 = vmatprep.subr.bf16.mxu0 0
      %535 = vmatpush1.bf16.msra.mxu0 %v459
      %536 = vmatprep.subr.bf16.mxu0 0
      %537 = vmatpush1.bf16.msra.mxu0 %v460
      %538 = vmatprep.mubr.bf16.mxu0 %v334
      %539 = vmatmul.mubr.bf16.gmra.mrb[0].mxu0 %v333
      %v540 = vpop.f32.mrb[0].mxu0
      %v541 = vadd.f32 %v251, %v540
      %v542 = vpop.f32.mrb[0].mxu0
      %v543 = vpop.f32.mrb[0].mxu0
      %v544 = vadd.f32 %v251, %v543
      %v545 = vpop.f32.mrb[0].mxu0
      %546 = vmatprep.mubr.bf16.mxu0 %v337
      %547 = vmatmul.mubr.bf16.gmra.mrb[0].mxu0 %v336
      %v548 = vpop.f32.mrb[0].mxu0
      %v549 = vadd.f32 %v251, %v548
      %v550 = vpop.f32.mrb[0].mxu0
      %v551 = vpop.f32.mrb[0].mxu0
      %v552 = vadd.f32 %v251, %v551
      %v553 = vpop.f32.mrb[0].mxu0
      %554 = vmatprep.mubr.bf16.mxu0 %v340
      %555 = vmatmul.mubr.bf16.gmra.mrb[0].mxu0 %v339
      %v556 = vpop.f32.mrb[0].mxu0
      %v557 = vadd.f32 %v251, %v556
      %v558 = vpop.f32.mrb[0].mxu0
      %v559 = vpop.f32.mrb[0].mxu0
      %v560 = vadd.f32 %v251, %v559
      %v561 = vpop.f32.mrb[0].mxu0
      %562 = vmatprep.mubr.bf16.mxu0 %v343
      %563 = vmatmul.mubr.bf16.gmra.mrb[0].mxu0 %v342
      %v564 = vpop.f32.mrb[0].mxu0
      %v565 = vadd.f32 %v251, %v564
      %v566 = vpop.f32.mrb[0].mxu0
      %v567 = vpop.f32.mrb[0].mxu0
      %v568 = vadd.f32 %v251, %v567
      %v569 = vpop.f32.mrb[0].mxu0
      %570 = vmatprep.mubr.bf16.mxu0 %v346
      %571 = vmatmul.mubr.bf16.gmra.mrb[0].mxu0 %v345
      %v572 = vpop.f32.mrb[0].mxu0
      %v573 = vadd.f32 %v251, %v572
      %v574 = vpop.f32.mrb[0].mxu0
      %v575 = vpop.f32.mrb[0].mxu0
      %v576 = vadd.f32 %v251, %v575
      %v577 = vpop.f32.mrb[0].mxu0
      %578 = vmatprep.mubr.bf16.mxu0 %v349
      %579 = vmatmul.mubr.bf16.gmra.mrb[0].mxu0 %v348
      %v580 = vpop.f32.mrb[0].mxu0
      %v581 = vadd.f32 %v251, %v580
      %v582 = vpop.f32.mrb[0].mxu0
      %v583 = vpop.f32.mrb[0].mxu0
      %v584 = vadd.f32 %v251, %v583
      %v585 = vpop.f32.mrb[0].mxu0
      %586 = vmatprep.mubr.bf16.mxu0 %v352
      %587 = vmatmul.mubr.bf16.gmra.mrb[0].mxu0 %v351
      %v588 = vpop.f32.mrb[0].mxu0
      %v589 = vadd.f32 %v251, %v588
      %v590 = vpop.f32.mrb[0].mxu0
      %v591 = vpop.f32.mrb[0].mxu0
      %v592 = vadd.f32 %v251, %v591
      %v593 = vpop.f32.mrb[0].mxu0
      %594 = vmatprep.mubr.bf16.mxu0 %v355
      %595 = vmatmul.mubr.bf16.gmra.mrb[0].mxu0 %v354
      %v596 = vpop.f32.mrb[0].mxu0
      %v597 = vadd.f32 %v251, %v596
      %v598 = vpop.f32.mrb[0].mxu0
      %v599 = vpop.f32.mrb[0].mxu0
      %v600 = vadd.f32 %v251, %v599
      %v601 = vpop.f32.mrb[0].mxu0
      %602 = vdwg.mxu0
      %603 = vmatprep.subr.bf16.mxu0 0
      %604 = vmatpush1.bf16.msra.mxu0 %v461
      %605 = vmatprep.subr.bf16.mxu0 0
      %606 = vmatpush1.bf16.msra.mxu0 %v462
      %607 = vmatprep.subr.bf16.mxu0 0
      %608 = vmatpush1.bf16.msra.mxu0 0
      %609 = vmatprep.subr.bf16.mxu0 0
      %610 = vmatpush1.bf16.msra.mxu0 0
      %611 = vmatprep.subr.bf16.mxu0 0
      %612 = vmatpush1.bf16.msra.mxu0 0
      %613 = vmatprep.subr.bf16.mxu0 0
      %614 = vmatpush1.bf16.msra.mxu0 0
      %615 = vmatprep.subr.bf16.mxu0 0
      %616 = vmatpush1.bf16.msra.mxu0 0
      %617 = vmatprep.subr.bf16.mxu0 0
      %618 = vmatpush1.bf16.msra.mxu0 0
      %619 = vmatprep.subr.bf16.mxu0 0
      %620 = vmatpush1.bf16.msra.mxu0 0
      %621 = vmatprep.subr.bf16.mxu0 0
      %622 = vmatpush1.bf16.msra.mxu0 0
      %623 = vmatprep.subr.bf16.mxu0 0
      %624 = vmatpush1.bf16.msra.mxu0 0
      %625 = vmatprep.subr.bf16.mxu0 0
      %626 = vmatpush1.bf16.msra.mxu0 0
      %627 = vmatprep.subr.bf16.mxu0 0
      %628 = vmatpush1.bf16.msra.mxu0 0
      %629 = vmatprep.subr.bf16.mxu0 0
      %630 = vmatpush1.bf16.msra.mxu0 0
      %631 = vmatprep.subr.bf16.mxu0 0
      %632 = vmatpush1.bf16.msra.mxu0 0
      %633 = vmatprep.subr.bf16.mxu0 0
      %634 = vmatpush1.bf16.msra.mxu0 0
      %635 = vmatprep.mubr.bf16.mxu0 0
      %636 = vmatmul.mubr.bf16.gmra.mrb[0].mxu0 %v483
      %v637 = vpop.f32.mrb[0].mxu0
      %v638 = vadd.f32 %v541, %v637
      %v639 = vpop.f32.mrb[0].mxu0
      %v640 = vpop.f32.mrb[0].mxu0
      %v641 = vadd.f32 %v544, %v640
      %v642 = vpop.f32.mrb[0].mxu0
      %643 = vmatprep.mubr.bf16.mxu0 0
      %644 = vmatmul.mubr.bf16.gmra.mrb[0].mxu0 %v486
      %v645 = vpop.f32.mrb[0].mxu0
      %v646 = vadd.f32 %v549, %v645
      %v647 = vpop.f32.mrb[0].mxu0
      %v648 = vpop.f32.mrb[0].mxu0
      %v649 = vadd.f32 %v552, %v648
      %v650 = vpop.f32.mrb[0].mxu0
      %651 = vmatprep.mubr.bf16.mxu0 0
      %652 = vmatmul.mubr.bf16.gmra.mrb[0].mxu0 %v489
      %v653 = vpop.f32.mrb[0].mxu0
      %v654 = vadd.f32 %v557, %v653
      %v655 = vpop.f32.mrb[0].mxu0
      %v656 = vpop.f32.mrb[0].mxu0
      %v657 = vadd.f32 %v560, %v656
      %v658 = vpop.f32.mrb[0].mxu0
      %659 = vmatprep.mubr.bf16.mxu0 0
      %660 = vmatmul.mubr.bf16.gmra.mrb[0].mxu0 %v492
      %v661 = vpop.f32.mrb[0].mxu0
      %v662 = vadd.f32 %v565, %v661
      %v663 = vpop.f32.mrb[0].mxu0
      %v664 = vpop.f32.mrb[0].mxu0
      %v665 = vadd.f32 %v568, %v664
      %v666 = vpop.f32.mrb[0].mxu0
      %667 = vmatprep.mubr.bf16.mxu0 0
      %668 = vmatmul.mubr.bf16.gmra.mrb[0].mxu0 %v495
      %v669 = vpop.f32.mrb[0].mxu0
      %v670 = vadd.f32 %v573, %v669
      %v671 = vpop.f32.mrb[0].mxu0
      %v672 = vpop.f32.mrb[0].mxu0
      %v673 = vadd.f32 %v576, %v672
      %v674 = vpop.f32.mrb[0].mxu0
      %675 = vmatprep.mubr.bf16.mxu0 0
      %676 = vmatmul.mubr.bf16.gmra.mrb[0].mxu0 %v498
      %v677 = vpop.f32.mrb[0].mxu0
      %v678 = vadd.f32 %v581, %v677
      %v679 = vpop.f32.mrb[0].mxu0
      %v680 = vpop.f32.mrb[0].mxu0
      %v681 = vadd.f32 %v584, %v680
      %v682 = vpop.f32.mrb[0].mxu0
      %683 = vmatprep.mubr.bf16.mxu0 0
      %684 = vmatmul.mubr.bf16.gmra.mrb[0].mxu0 %v501
      %v685 = vpop.f32.mrb[0].mxu0
      %v686 = vadd.f32 %v589, %v685
      %v687 = vpop.f32.mrb[0].mxu0
      %v688 = vpop.f32.mrb[0].mxu0
      %v689 = vadd.f32 %v592, %v688
      %v690 = vpop.f32.mrb[0].mxu0
      %691 = vmatprep.mubr.bf16.mxu0 0
      %692 = vmatmul.mubr.bf16.gmra.mrb[0].mxu0 %v504
      %v693 = vpop.f32.mrb[0].mxu0
      %v694 = vadd.f32 %v597, %v693
      %v695 = vpop.f32.mrb[0].mxu0
      %v696 = vpop.f32.mrb[0].mxu0
      %v697 = vadd.f32 %v600, %v696
      %v698 = vpop.f32.mrb[0].mxu0
      %699 = vdwg.mxu0
      %v700 = vxor.u32 %v638, 2147483648
      %v701 = vxor.u32 %v641, 2147483648
      %v702 = vxor.u32 %v646, 2147483648
      %v703 = vxor.u32 %v649, 2147483648
      %v704 = vxor.u32 %v654, 2147483648
      %v705 = vxor.u32 %v657, 2147483648
      %v706 = vxor.u32 %v662, 2147483648
      %v707 = vxor.u32 %v665, 2147483648
      %v708 = vxor.u32 %v670, 2147483648
      %v709 = vxor.u32 %v673, 2147483648
      %v710 = vxor.u32 %v678, 2147483648
      %v711 = vxor.u32 %v681, 2147483648
      %v712 = vxor.u32 %v686, 2147483648
      %v713 = vxor.u32 %v689, 2147483648
      %v714 = vxor.u32 %v694, 2147483648
      %v715 = vxor.u32 %v697, 2147483648
      %v716 = vmul.f32 %v700, 1.442695
      %v717 = vpow.pop %v716
      %v718 = vmul.f32 %v701, 1.442695
      %v719 = vpow.pop %v718
      %v720 = vmul.f32 %v702, 1.442695
      %v721 = vpow.pop %v720
      %v722 = vmul.f32 %v703, 1.442695
      %v723 = vpow.pop %v722
      %v724 = vmul.f32 %v704, 1.442695
      %v725 = vpow.pop %v724
      %v726 = vmul.f32 %v705, 1.442695
      %v727 = vpow.pop %v726
      %v728 = vmul.f32 %v706, 1.442695
      %v729 = vpow.pop %v728
      %v730 = vmul.f32 %v707, 1.442695
      %v731 = vpow.pop %v730
      %v732 = vmul.f32 %v708, 1.442695
      %v733 = vpow.pop %v732
      %v734 = vmul.f32 %v709, 1.442695
      %v735 = vpow.pop %v734
      %v736 = vmul.f32 %v710, 1.442695
      %v737 = vpow.pop %v736
      %v738 = vmul.f32 %v711, 1.442695
      %v739 = vpow.pop %v738
      %v740 = vmul.f32 %v712, 1.442695
      %v741 = vpow.pop %v740
      %v742 = vmul.f32 %v713, 1.442695
      %v743 = vpow.pop %v742
      %v744 = vmul.f32 %v714, 1.442695
      %v745 = vpow.pop %v744
      %v746 = vmul.f32 %v715, 1.442695
      %v747 = vpow.pop %v746
      %v748 = vadd.f32 %v717, 1.0
      %v749 = vadd.f32 %v719, 1.0
      %v750 = vadd.f32 %v721, 1.0
      %v751 = vadd.f32 %v723, 1.0
      %v752 = vadd.f32 %v725, 1.0
      %v753 = vadd.f32 %v727, 1.0
      %v754 = vadd.f32 %v729, 1.0
      %v755 = vadd.f32 %v731, 1.0
      %v756 = vadd.f32 %v733, 1.0
      %v757 = vadd.f32 %v735, 1.0
      %v758 = vadd.f32 %v737, 1.0
      %v759 = vadd.f32 %v739, 1.0
      %v760 = vadd.f32 %v741, 1.0
      %v761 = vadd.f32 %v743, 1.0
      %v762 = vadd.f32 %v745, 1.0
      %v763 = vadd.f32 %v747, 1.0
      %v764 = vrcp.pop %v748
      %v765 = vmul.f32 1.0, %v764
      %v766 = vrcp.pop %v749
      %v767 = vmul.f32 1.0, %v766
      %v768 = vrcp.pop %v750
      %v769 = vmul.f32 1.0, %v768
      %v770 = vrcp.pop %v751
      %v771 = vmul.f32 1.0, %v770
      %v772 = vrcp.pop %v752
      %v773 = vmul.f32 1.0, %v772
      %v774 = vrcp.pop %v753
      %v775 = vmul.f32 1.0, %v774
      %v776 = vrcp.pop %v754
      %v777 = vmul.f32 1.0, %v776
      %v778 = vrcp.pop %v755
      %v779 = vmul.f32 1.0, %v778
      %v780 = vrcp.pop %v756
      %v781 = vmul.f32 1.0, %v780
      %v782 = vrcp.pop %v757
      %v783 = vmul.f32 1.0, %v782
      %v784 = vrcp.pop %v758
      %v785 = vmul.f32 1.0, %v784
      %v786 = vrcp.pop %v759
      %v787 = vmul.f32 1.0, %v786
      %v788 = vrcp.pop %v760
      %v789 = vmul.f32 1.0, %v788
      %v790 = vrcp.pop %v761
      %v791 = vmul.f32 1.0, %v790
      %v792 = vrcp.pop %v762
      %v793 = vmul.f32 1.0, %v792
      %v794 = vrcp.pop %v763
      %v795 = vmul.f32 1.0, %v794
      %v796 = vmul.f32 %v638, %v765
      %v797 = vmul.f32 %v641, %v767
      %v798 = vmul.f32 %v646, %v769
      %v799 = vmul.f32 %v649, %v771
      %v800 = vmul.f32 %v654, %v773
      %v801 = vmul.f32 %v657, %v775
      %v802 = vmul.f32 %v662, %v777
      %v803 = vmul.f32 %v665, %v779
      %v804 = vmul.f32 %v670, %v781
      %v805 = vmul.f32 %v673, %v783
      %v806 = vmul.f32 %v678, %v785
      %v807 = vmul.f32 %v681, %v787
      %v808 = vmul.f32 %v686, %v789
      %v809 = vmul.f32 %v689, %v791
      %v810 = vmul.f32 %v694, %v793
      %v811 = vmul.f32 %v697, %v795
      %v812 = vpack.c.bf16 %v797, %v796
      %v813 = vpack.c.bf16 %v799, %v798
      %v814 = vpack.c.bf16 %v801, %v800
      %v815 = vpack.c.bf16 %v803, %v802
      %v816 = vpack.c.bf16 %v805, %v804
      %v817 = vpack.c.bf16 %v807, %v806
      %v818 = vpack.c.bf16 %v809, %v808
      %v819 = vpack.c.bf16 %v811, %v810
      %v828 = vunpack.c.l.b16 %v812
      %v829 = vunpack.c.h.b16 %v812
      %v830 = vunpack.c.l.b16 %v813
      %v831 = vunpack.c.h.b16 %v813
      %v832 = vunpack.c.l.b16 %v814
      %v833 = vunpack.c.h.b16 %v814
      %v834 = vunpack.c.l.b16 %v815
      %v835 = vunpack.c.h.b16 %v815
      %v836 = vunpack.c.l.b16 %v816
      %v837 = vunpack.c.h.b16 %v816
      %v838 = vunpack.c.l.b16 %v817
      %v839 = vunpack.c.h.b16 %v817
      %v840 = vunpack.c.l.b16 %v818
      %v841 = vunpack.c.h.b16 %v818
      %v842 = vunpack.c.l.b16 %v819
      %v843 = vunpack.c.h.b16 %v819
      %v844 = vpack.c.b16 %v828, %v828
      %v845 = vpack.c.b16 %v829, %v829
      %v846 = vpack.c.b16 %v830, %v830
      %v847 = vpack.c.b16 %v831, %v831
      %v848 = vpack.c.b16 %v832, %v832
      %v849 = vpack.c.b16 %v833, %v833
      %v850 = vpack.c.b16 %v834, %v834
      %v851 = vpack.c.b16 %v835, %v835
      %v852 = vpack.c.b16 %v836, %v836
      %v853 = vpack.c.b16 %v837, %v837
      %v854 = vpack.c.b16 %v838, %v838
      %v855 = vpack.c.b16 %v839, %v839
      %v856 = vpack.c.b16 %v840, %v840
      %v857 = vpack.c.b16 %v841, %v841
      %v858 = vpack.c.b16 %v842, %v842
      %v859 = vpack.c.b16 %v843, %v843
      %vm876 = vcmask 257024
      %877 = vst.msk [vmem:[%s175] sm:$0xf] %vm876, %v844
      %878 = vst.msk [vmem:[%s175 + $0x4] sm:$0xf] %vm876, %v845
      %879 = vst.msk [vmem:[%s175 + $0x8] sm:$0xf] %vm876, %v846
      %880 = vst.msk [vmem:[%s175 + $0xc] sm:$0xf] %vm876, %v847
      %881 = vst.msk [vmem:[%s175 + $0x10] sm:$0xf] %vm876, %v848
      %882 = vst.msk [vmem:[%s175 + $0x14] sm:$0xf] %vm876, %v849
      %883 = vst.msk [vmem:[%s175 + $0x18] sm:$0xf] %vm876, %v850
      %884 = vst.msk [vmem:[%s175 + $0x1c] sm:$0xf] %vm876, %v851
      %885 = vst.msk [vmem:[%s175 + $0x20] sm:$0xf] %vm876, %v852
      %886 = vst.msk [vmem:[%s175 + $0x24] sm:$0xf] %vm876, %v853
      %887 = vst.msk [vmem:[%s175 + $0x28] sm:$0xf] %vm876, %v854
      %888 = vst.msk [vmem:[%s175 + $0x2c] sm:$0xf] %vm876, %v855
      %889 = vst.msk [vmem:[%s175 + $0x30] sm:$0xf] %vm876, %v856
      %890 = vst.msk [vmem:[%s175 + $0x34] sm:$0xf] %vm876, %v857
      %891 = vst.msk [vmem:[%s175 + $0x38] sm:$0xf] %vm876, %v858
      %892 = vst.msk [vmem:[%s175 + $0x3c] sm:$0xf] %vm876, %v859
      %s893 = smul.u32 16, %s14
      %p894 = scmp.lt.s32.totalorder %s893, 63
      %s895 = scalar_select %p894, %s893, 63
      %s896 = smul.addr %s895, 4
      %s897 = scalar_lea.vmem %s3, %s896
      // Predicated region
      $region33: #{closed_call.33} parent=31 // pred_check
        %p898 = pneg %p100
      $region34: #{closed_call.33} parent=31 // pred_check_branch
        %900 = sbr.rel (%p898) target = $region36
      $region35: #{closed_call.33} parent=31 // pred_region
        %s901 = smul.u32 16, %s14
      $region36: #{closed_call.33} parent=31 // pred_fallthru
        _
    $region32: #{closed_call.33} parent=5 // pred_fallthru
      _
    %p902 = scmp.le.s32.totalorder 2, %s9
    // Predicated region
    $region37: #{closed_call.33} parent=5 // pred_check
      %p903 = pneg %p902
    $region38: #{closed_call.33} parent=5 // pred_check_branch
      %905 = sbr.rel (%p903) target = $region40
    $region39: #{closed_call.33} parent=5 // pred_region
      %s906 = ssub.s32 %s9, 2
      // Predicated region
      $region41: #{closed_call.33} parent=39 // pred_check
        %p907 = pneg %p106
      $region42: #{closed_call.33} parent=39 // pred_check_branch
        %909 = sbr.rel (%p907) target = $region44
      $region43: #{closed_call.33} parent=39 // pred_region
        %s910 = smul.u32 16, %s15
        %p911 = scmp.lt.s32.totalorder %s910, 63
        %s912 = scalar_select %p911, %s910, 63
        %s913 = smul.addr %s912, 4
        %s914 = scalar_lea.vmem %s3, %s913
      $region44: #{closed_call.33} parent=39 // pred_fallthru
        _
    $region40: #{closed_call.33} parent=5 // pred_fallthru
      _
  $region6: #{closed_call.33} parent=0 // loop_footer
    %s13 = sadd.s32 1, %s9
  $region7: #{closed_call.33} parent=0 // loop_footer_branch
    %8 = sbr.rel target = $region3
  $region8: #{closed_call.33} parent=0 // loop_exit
    _

// kernel: closed_call.34
$region0: #{closed_call.34}
  #allocation0 [shape = 'u32[]', space=smem, size = 0x4, offset = 0x4, fixed_abs, tag = 'smem constant byte address 0x4 - core index']
  #allocation1 [shape = 'u32[144,128]{1,0:T(1,128)}', space=vmem, size = 0x12000, scoped, tag = 'internal scratch']
  %s0 = inlined_call_operand.vmem [shape: f32[8], index: 0, kind: input, shape index: {}]
  %s1 = inlined_call_operand.vmem [shape: bf16[512,288], index: 1, kind: input, shape index: {}]
  %s2 = inlined_call_operand.vmem [shape: bf16[288,4], index: 2, kind: input, shape index: {}]
  %s3 = inlined_call_operand.vmem [shape: f32[1,4], index: 3, kind: input, shape index: {}]
  %s4 = inlined_call_operand.vmem [shape: f32[512,4], index: 4, kind: input, shape index: {}, may-alias: {4,6}]
  %s5 = inlined_call_operand.vmem [shape: f32[512,4], index: 5, kind: input, shape index: {}]
  %s6 = inlined_call_operand.vmem [shape: f32[512,4], index: 6, kind: output, shape index: {}, may-alias: {4,6}]
  %s7 = sld [smem:[#allocation0]]
  $region61: #{closed_call.34} parent=0
    _
  %s9 = ssub.s32 1, %s7
  %s10 = scalar_select 0, %s9, %s7
  $region1: #{closed_call.34} parent=0
    #allocation2 [shape = 'u8[512]{0}', space=smem, size = 0x200, scoped, tag = 'input window, operand 0, single buffered']
    #allocation3 [shape = 's32[2]{0}', space=sflag, size = 0x8, scoped, tag = 'scoped memory for closed_call.34']
    %11 = vsyncpa [#allocation3], 0
    loop: start=0, step=1, limit=6
    $region2: #{closed_call.34} parent=1 // loop_pre_header
      _
    $region3: #{closed_call.34} parent=1 // loop_header
      %s13 = sphi 0, %s17
      %p14 = scmp.ge.s32.totalorder %s13, 6
      %s21 = sphi 0, %s21
      %s23 = sphi 0, %s21
      %s24 = sphi 0, %s23
      %s38 = sphi 0, %s24
      %s44 = sphi 0, %s46
      %s47 = sphi 0, %s44
      %s48 = sphi 0, %s47
      %s64 = sphi 0, %s48
      %s68 = sphi 0, %s68
      %s70 = sphi 0, %s68
      %s71 = sphi 0, %s70
      %s85 = sphi 0, %s71
      %s89 = sphi 0, %s89
      %s91 = sphi 0, %s89
      %s92 = sphi 0, %s91
      %s106 = sphi 0, %s92
      %s112 = sphi 0, %s114
      %s115 = sphi 0, %s112
      %s116 = sphi 0, %s115
      %s132 = sphi 0, %s116
      %s138 = sphi 0, %s140
      %s141 = sphi 0, %s138
      %s142 = sphi 0, %s141
      %s158 = sphi 0, %s142
      %s164 = sphi 0, %s166
      %s167 = sphi 0, %s164
      %s168 = sphi 0, %s167
      %s184 = sphi 0, %s168
    $region4: #{closed_call.34} parent=1 // loop_header_branch
      %16 = sbr.rel (%p14) target = $region8
    $region5: #{closed_call.34} parent=1 // loop_body
      %s18 = ssub.s32 %s13, 1
      %s19 = ssub.s32 %s13, 2
      %s20 = sadd.s32 %s13, 1
      %s22 = sadd.s32 %s21, 1
      %p25 = scmp.eq.s32.totalorder %s13, 3
      %p26 = scmp.ne.s32.totalorder %s21, %s23
      %p27 = scmp.eq.s32.totalorder %s13, 0
      %p28 = por %p26, %p27
      %p29 = scmp.ne.s32.totalorder %s21, %s23
      %p30 = scmp.eq.s32.totalorder %s18, 3
      %p31 = por %p29, %p30
      %p32 = scmp.ne.s32.totalorder %s23, %s24
      %p33 = scmp.eq.s32.totalorder %s18, 0
      %p34 = por %p32, %p33
      %p35 = scmp.ne.s32.totalorder %s23, %s24
      %p36 = scmp.eq.s32.totalorder %s19, 3
      %p37 = por %p35, %p36
      %p39 = scmp.ne.s32.totalorder %s24, %s38
      %p40 = scmp.eq.s32.totalorder %s19, 0
      %p41 = por %p39, %p40
      %s42 = ssub.s32 %s13, %s20
      %p43 = scmp.eq.s32.totalorder %s42, 0
      %s45 = sadd.s32 %s44, 1
      %s46 = scalar_select %p43, %s44, %s45
      %p49 = pneg %p43
      %p50 = scmp.eq.s32.totalorder %s13, 3
      %p51 = por %p49, %p50
      %p52 = scmp.ne.s32.totalorder %s44, %s47
      %p53 = scmp.eq.s32.totalorder %s13, 0
      %p54 = por %p52, %p53
      %p55 = scmp.ne.s32.totalorder %s44, %s47
      %p56 = scmp.eq.s32.totalorder %s18, 3
      %p57 = por %p55, %p56
      %p58 = scmp.ne.s32.totalorder %s47, %s48
      %p59 = scmp.eq.s32.totalorder %s18, 0
      %p60 = por %p58, %p59
      %p61 = scmp.ne.s32.totalorder %s47, %s48
      %p62 = scmp.eq.s32.totalorder %s19, 3
      %p63 = por %p61, %p62
      %p65 = scmp.ne.s32.totalorder %s48, %s64
      %p66 = scmp.eq.s32.totalorder %s19, 0
      %p67 = por %p65, %p66
      %s69 = sadd.s32 %s68, 1
      %p72 = scmp.eq.s32.totalorder %s13, 3
      %p73 = scmp.ne.s32.totalorder %s68, %s70
      %p74 = scmp.eq.s32.totalorder %s13, 0
      %p75 = por %p73, %p74
      %p76 = scmp.ne.s32.totalorder %s68, %s70
      %p77 = scmp.eq.s32.totalorder %s18, 3
      %p78 = por %p76, %p77
      %p79 = scmp.ne.s32.totalorder %s70, %s71
      %p80 = scmp.eq.s32.totalorder %s18, 0
      %p81 = por %p79, %p80
      %p82 = scmp.ne.s32.totalorder %s70, %s71
      %p83 = scmp.eq.s32.totalorder %s19, 3
      %p84 = por %p82, %p83
      %p86 = scmp.ne.s32.totalorder %s71, %s85
      %p87 = scmp.eq.s32.totalorder %s19, 0
      %p88 = por %p86, %p87
      %s90 = sadd.s32 %s89, 1
      %p93 = scmp.eq.s32.totalorder %s13, 3
      %p94 = scmp.ne.s32.totalorder %s89, %s91
      %p95 = scmp.eq.s32.totalorder %s13, 0
      %p96 = por %p94, %p95
      %p97 = scmp.ne.s32.totalorder %s89, %s91
      %p98 = scmp.eq.s32.totalorder %s18, 3
      %p99 = por %p97, %p98
      %p100 = scmp.ne.s32.totalorder %s91, %s92
      %p101 = scmp.eq.s32.totalorder %s18, 0
      %p102 = por %p100, %p101
      %p103 = scmp.ne.s32.totalorder %s91, %s92
      %p104 = scmp.eq.s32.totalorder %s19, 3
      %p105 = por %p103, %p104
      %p107 = scmp.ne.s32.totalorder %s92, %s106
      %p108 = scmp.eq.s32.totalorder %s19, 0
      %p109 = por %p107, %p108
      %s110 = ssub.s32 %s13, %s20
      %p111 = scmp.eq.s32.totalorder %s110, 0
      %s113 = sadd.s32 %s112, 1
      %s114 = scalar_select %p111, %s112, %s113
      %p117 = pneg %p111
      %p118 = scmp.eq.s32.totalorder %s13, 3
      %p119 = por %p117, %p118
      %p120 = scmp.ne.s32.totalorder %s112, %s115
      %p121 = scmp.eq.s32.totalorder %s13, 0
      %p122 = por %p120, %p121
      %p123 = scmp.ne.s32.totalorder %s112, %s115
      %p124 = scmp.eq.s32.totalorder %s18, 3
      %p125 = por %p123, %p124
      %p126 = scmp.ne.s32.totalorder %s115, %s116
      %p127 = scmp.eq.s32.totalorder %s18, 0
      %p128 = por %p126, %p127
      %p129 = scmp.ne.s32.totalorder %s115, %s116
      %p130 = scmp.eq.s32.totalorder %s19, 3
      %p131 = por %p129, %p130
      %p133 = scmp.ne.s32.totalorder %s116, %s132
      %p134 = scmp.eq.s32.totalorder %s19, 0
      %p135 = por %p133, %p134
      %s136 = ssub.s32 %s13, %s20
      %p137 = scmp.eq.s32.totalorder %s136, 0
      %s139 = sadd.s32 %s138, 1
      %s140 = scalar_select %p137, %s138, %s139
      %p143 = pneg %p137
      %p144 = scmp.eq.s32.totalorder %s13, 3
      %p145 = por %p143, %p144
      %p146 = scmp.ne.s32.totalorder %s138, %s141
      %p147 = scmp.eq.s32.totalorder %s13, 0
      %p148 = por %p146, %p147
      %p149 = scmp.ne.s32.totalorder %s138, %s141
      %p150 = scmp.eq.s32.totalorder %s18, 3
      %p151 = por %p149, %p150
      %p152 = scmp.ne.s32.totalorder %s141, %s142
      %p153 = scmp.eq.s32.totalorder %s18, 0
      %p154 = por %p152, %p153
      %p155 = scmp.ne.s32.totalorder %s141, %s142
      %p156 = scmp.eq.s32.totalorder %s19, 3
      %p157 = por %p155, %p156
      %p159 = scmp.ne.s32.totalorder %s142, %s158
      %p160 = scmp.eq.s32.totalorder %s19, 0
      %p161 = por %p159, %p160
      %s162 = ssub.s32 %s13, %s20
      %p163 = scmp.eq.s32.totalorder %s162, 0
      %s165 = sadd.s32 %s164, 1
      %s166 = scalar_select %p163, %s164, %s165
      %p169 = pneg %p163
      %p170 = scmp.eq.s32.totalorder %s13, 3
      %p171 = por %p169, %p170
      %p172 = scmp.ne.s32.totalorder %s164, %s167
      %p173 = scmp.eq.s32.totalorder %s13, 0
      %p174 = por %p172, %p173
      %p175 = scmp.ne.s32.totalorder %s164, %s167
      %p176 = scmp.eq.s32.totalorder %s18, 3
      %p177 = por %p175, %p176
      %p178 = scmp.ne.s32.totalorder %s167, %s168
      %p179 = scmp.eq.s32.totalorder %s18, 0
      %p180 = por %p178, %p179
      %p181 = scmp.ne.s32.totalorder %s167, %s168
      %p182 = scmp.eq.s32.totalorder %s19, 3
      %p183 = por %p181, %p182
      %p185 = scmp.ne.s32.totalorder %s168, %s184
      %p186 = scmp.eq.s32.totalorder %s19, 0
      %p187 = por %p185, %p186
      %p188 = scmp.le.s32.totalorder 1, %s13
      %p189 = scmp.lt.s32.totalorder %s13, 5
      %p190 = pnand %p188, %p189
      %p191 = pneg %p190
      // Predicated region
      $region9: #{closed_call.34} parent=5 // pred_check
        _
      $region10: #{closed_call.34} parent=5 // pred_check_branch
        %193 = sbr.rel (%p190) target = $region12
      $region11: #{closed_call.34} parent=5 // pred_region
        %s194 = ssub.s32 %s13, 1
        // Predicated region
        $region13: #{closed_call.34} parent=11 // pred_check
          %p195 = pneg %p34
        $region14: #{closed_call.34} parent=11 // pred_check_branch
          %197 = sbr.rel (%p195) target = $region16
        $region15: #{closed_call.34} parent=11 // pred_region
          %s199 = ssub.s32 16, 16
          %200 = vsyncadd [#allocation3], %s199
          %s202 = sshll.u32 %s0, 4
          %s203 = int_to_ptr.vmem [resolvable:$true] %s202
          %205 = dma.vmem_to_smem %s203, 16, [#allocation2], [#allocation3]
        $region16: #{closed_call.34} parent=11 // pred_fallthru
          _
        // Predicated region
        $region17: #{closed_call.34} parent=11 // pred_check
          %p206 = pneg %p81
        $region18: #{closed_call.34} parent=11 // pred_check_branch
          %208 = sbr.rel (%p206) target = $region20
        $region19: #{closed_call.34} parent=11 // pred_region
          _
        $region20: #{closed_call.34} parent=11 // pred_fallthru
          _
        // Predicated region
        $region21: #{closed_call.34} parent=11 // pred_check
          %p209 = pneg %p102
        $region22: #{closed_call.34} parent=11 // pred_check_branch
          %211 = sbr.rel (%p209) target = $region24
        $region23: #{closed_call.34} parent=11 // pred_region
          _
        $region24: #{closed_call.34} parent=11 // pred_fallthru
          _
      $region12: #{closed_call.34} parent=5 // pred_fallthru
        _
      %p212 = scmp.lt.s32.totalorder %s13, 4
      // Predicated region
      $region25: #{closed_call.34} parent=5 // pred_check
        %p213 = pneg %p212
      $region26: #{closed_call.34} parent=5 // pred_check_branch
        %215 = sbr.rel (%p213) target = $region28
      $region27: #{closed_call.34} parent=5 // pred_region
        // Predicated region
        $region29: #{closed_call.34} parent=27 // pred_check
          %p216 = pneg %p54
        $region30: #{closed_call.34} parent=27 // pred_check_branch
          %218 = sbr.rel (%p216) target = $region32
        $region31: #{closed_call.34} parent=27 // pred_region
          %s219 = smul.u32 16, %s13
          %p220 = scmp.lt.s32.totalorder %s219, 63
          %s221 = scalar_select %p220, %s219, 63
          %s222 = smul.addr %s221, 3
          %s223 = smul.addr %s222, 4
          %s224 = scalar_lea.vmem %s1, %s223
          %s225 = smul.u32 16, %s13
        $region32: #{closed_call.34} parent=27 // pred_fallthru
          _
        // Predicated region
        $region33: #{closed_call.34} parent=27 // pred_check
          %p226 = pneg %p122
        $region34: #{closed_call.34} parent=27 // pred_check_branch
          %228 = sbr.rel (%p226) target = $region36
        $region35: #{closed_call.34} parent=27 // pred_region
          %s229 = smul.u32 16, %s13
          %p230 = scmp.lt.s32.totalorder %s229, 63
          %s231 = scalar_select %p230, %s229, 63
          %s232 = smul.addr %s231, 8
          %s233 = scalar_lea.vmem %s4, %s232
          %s234 = smul.u32 16, %s13
        $region36: #{closed_call.34} parent=27 // pred_fallthru
          _
        // Predicated region
        $region37: #{closed_call.34} parent=27 // pred_check
          %p235 = pneg %p148
        $region38: #{closed_call.34} parent=27 // pred_check_branch
          %237 = sbr.rel (%p235) target = $region40
        $region39: #{closed_call.34} parent=27 // pred_region
          %s238 = smul.u32 16, %s13
          %p239 = scmp.lt.s32.totalorder %s238, 63
          %s240 = scalar_select %p239, %s238, 63
          %s241 = smul.addr %s240, 8
          %s242 = scalar_lea.vmem %s5, %s241
          %s243 = smul.u32 16, %s13
        $region40: #{closed_call.34} parent=27 // pred_fallthru
          _
      $region28: #{closed_call.34} parent=5 // pred_fallthru
        _
      %p244 = scmp.le.s32.totalorder 1, %s13
      %p245 = scmp.lt.s32.totalorder %s13, 5
      %p246 = pnand %p244, %p245
      %p247 = pneg %p246
      // Predicated region
      $region41: #{closed_call.34} parent=5 // pred_check
        _
      $region42: #{closed_call.34} parent=5 // pred_check_branch
        %249 = sbr.rel (%p246) target = $region44
      $region43: #{closed_call.34} parent=5 // pred_region
        %s250 = ssub.s32 %s13, 1
        // Predicated region
        $region45: #{closed_call.34} parent=43 // pred_check
          %p251 = pneg %p34
        $region46: #{closed_call.34} parent=43 // pred_check_branch
          %253 = sbr.rel (%p251) target = $region48
        $region47: #{closed_call.34} parent=43 // pred_region
          %254 = dma.done [#allocation3], 16
        $region48: #{closed_call.34} parent=43 // pred_fallthru
          _
        %255 = sfence
        %p256 = pneg %p34
        %p257 = pneg %p31
        %s258 = smul.u32 16, %s18
        %p259 = scmp.lt.s32.totalorder %s258, 63
        %s260 = scalar_select %p259, %s258, 63
        %s261 = smul.addr %s260, 3
        %s262 = smul.addr %s261, 4
        %s263 = scalar_lea.vmem %s1, %s262
        %p264 = pneg %p60
        %p265 = pneg %p57
        %p266 = pneg %p81
        %p267 = pneg %p78
        %p268 = pneg %p102
        %p269 = pneg %p99
        %s270 = smul.u32 16, %s18
        %p271 = scmp.lt.s32.totalorder %s270, 63
        %s272 = scalar_select %p271, %s270, 63
        %s273 = smul.addr %s272, 8
        %s274 = scalar_lea.vmem %s4, %s273
        %p275 = pneg %p128
        %p276 = pneg %p125
        %s277 = smul.u32 16, %s18
        %p278 = scmp.lt.s32.totalorder %s277, 63
        %s279 = scalar_select %p278, %s277, 63
        %s280 = smul.addr %s279, 8
        %s281 = scalar_lea.vmem %s5, %s280
        %p282 = pneg %p154
        %p283 = pneg %p151
        %p284 = pneg %p180
        %p285 = pneg %p177
        %s286 = smul.u32 16, %s18
        %p287 = scmp.lt.s32.totalorder %s286, 63
        %s288 = scalar_select %p287, %s286, 63
        %s289 = smul.addr %s288, 8
        %s290 = scalar_lea.vmem %s6, %s289
        %s291 = smul.u32 16, %s18
        %p292 = scmp.lt.s32.totalorder %s291, 63
        %s293 = scalar_select %p292, %s291, 63
        %s294 = smul.addr %s293, 3
        %s295 = smul.addr %s294, 4
        %s296 = scalar_lea.vmem %s1, %s295
        %s297 = smul.u32 16, %s18
        %s298 = smul.u32 16, %s18
        %p299 = scmp.lt.s32.totalorder %s298, 63
        %s300 = scalar_select %p299, %s298, 63
        %s301 = smul.addr %s300, 8
        %s302 = scalar_lea.vmem %s4, %s301
        %s303 = smul.u32 16, %s18
        %s304 = smul.u32 16, %s18
        %p305 = scmp.lt.s32.totalorder %s304, 63
        %s306 = scalar_select %p305, %s304, 63
        %s307 = smul.addr %s306, 8
        %s308 = scalar_lea.vmem %s5, %s307
        %s309 = smul.u32 16, %s18
        %s310 = smul.u32 16, %s18
        %p311 = scmp.lt.s32.totalorder %s310, 63
        %s312 = scalar_select %p311, %s310, 63
        %s313 = smul.addr %s312, 8
        %s314 = scalar_lea.vmem %s6, %s313
        %s315 = smul.u32 16, %s18
        %v317 = vld [vmem:[%s296] sm:$0xff]
        %v318 = vld [vmem:[%s296 + $0x8] sm:$0xf]
        %v319 = vld [vmem:[%s296 + $0xc] sm:$0xff]
        %v320 = vld [vmem:[%s296 + $0x14] sm:$0xf]
        %v321 = vld [vmem:[%s296 + $0x18] sm:$0xff]
        %v322 = vld [vmem:[%s296 + $0x20] sm:$0xf]
        %v323 = vld [vmem:[%s296 + $0x24] sm:$0xff]
        %v324 = vld [vmem:[%s296 + $0x2c] sm:$0xf]
        %v325 = vld [vmem:[%s296 + $0x30] sm:$0xff]
        %v326 = vld [vmem:[%s296 + $0x38] sm:$0xf]
        %v327 = vld [vmem:[%s296 + $0x3c] sm:$0xff]
        %v328 = vld [vmem:[%s296 + $0x44] sm:$0xf]
        %v329 = vld [vmem:[%s296 + $0x48] sm:$0xff]
        %v330 = vld [vmem:[%s296 + $0x50] sm:$0xf]
        %v331 = vld [vmem:[%s296 + $0x54] sm:$0xff]
        %v332 = vld [vmem:[%s296 + $0x5c] sm:$0xf]
        %v333 = vld [vmem:[%s296 + $0x60] sm:$0xff]
        %v334 = vld [vmem:[%s296 + $0x68] sm:$0xf]
        %v335 = vld [vmem:[%s296 + $0x6c] sm:$0xff]
        %v336 = vld [vmem:[%s296 + $0x74] sm:$0xf]
        %v337 = vld [vmem:[%s296 + $0x78] sm:$0xff]
        %v338 = vld [vmem:[%s296 + $0x80] sm:$0xf]
        %v339 = vld [vmem:[%s296 + $0x84] sm:$0xff]
        %v340 = vld [vmem:[%s296 + $0x8c] sm:$0xf]
        %v341 = vld [vmem:[%s296 + $0x90] sm:$0xff]
        %v342 = vld [vmem:[%s296 + $0x98] sm:$0xf]
        %v343 = vld [vmem:[%s296 + $0x9c] sm:$0xff]
        %v344 = vld [vmem:[%s296 + $0xa4] sm:$0xf]
        %v345 = vld [vmem:[%s296 + $0xa8] sm:$0xff]
        %v346 = vld [vmem:[%s296 + $0xb0] sm:$0xf]
        %v347 = vld [vmem:[%s296 + $0xb4] sm:$0xff]
        %v348 = vld [vmem:[%s296 + $0xbc] sm:$0xf]
        %v349 = vld [vmem:[%s2] sm:$0xf]
        %v350 = vld [vmem:[%s2 + $0x4] sm:$0xf]
        %v351 = vld [vmem:[%s2 + $0x8] sm:$0xf]
        %v352 = vld [vmem:[%s2 + $0xc] sm:$0xf]
        %v353 = vld [vmem:[%s2 + $0x10] sm:$0xf]
        %v354 = vld [vmem:[%s2 + $0x14] sm:$0xf]
        %v355 = vld [vmem:[%s2 + $0x18] sm:$0xf]
        %v356 = vld [vmem:[%s2 + $0x1c] sm:$0xf]
        %v357 = vld [vmem:[%s2 + $0x20] sm:$0xf]
        %v358 = vld [vmem:[%s2 + $0x24] sm:$0xf]
        %v359 = vld [vmem:[%s2 + $0x28] sm:$0xf]
        %v360 = vld [vmem:[%s2 + $0x2c] sm:$0xf]
        %v361 = vld [vmem:[%s2 + $0x30] sm:$0xf]
        %v362 = vld [vmem:[%s2 + $0x34] sm:$0xf]
        %v363 = vld [vmem:[%s2 + $0x38] sm:$0xf]
        %v364 = vld [vmem:[%s2 + $0x3c] sm:$0xf]
        %v365 = vld [vmem:[%s2 + $0x40] sm:$0xf]
        %v366 = vld [vmem:[%s2 + $0x44] sm:$0xf]
        %v367 = vld [vmem:[%s2 + $0x48] sm:$0xf]
        %v368 = vld [vmem:[%s2 + $0x4c] sm:$0xf]
        %v369 = vld [vmem:[%s2 + $0x50] sm:$0xf]
        %v370 = vld [vmem:[%s2 + $0x54] sm:$0xf]
        %v371 = vld [vmem:[%s2 + $0x58] sm:$0xf]
        %v372 = vld [vmem:[%s2 + $0x5c] sm:$0xf]
        %v373 = vld [vmem:[%s2 + $0x60] sm:$0xf]
        %v374 = vld [vmem:[%s2 + $0x64] sm:$0xf]
        %v375 = vld [vmem:[%s2 + $0x68] sm:$0xf]
        %v376 = vld [vmem:[%s2 + $0x6c] sm:$0xf]
        %v377 = vld [vmem:[%s2 + $0x70] sm:$0xf]
        %v378 = vld [vmem:[%s2 + $0x74] sm:$0xf]
        %v379 = vld [vmem:[%s2 + $0x78] sm:$0xf]
        %v380 = vld [vmem:[%s2 + $0x7c] sm:$0xf]
        %v381 = vld [vmem:[%s2 + $0x80] sm:$0xf]
        %v382 = vld [vmem:[%s2 + $0x84] sm:$0xf]
        %v383 = vld [vmem:[%s2 + $0x88] sm:$0xf]
        %v384 = vld [vmem:[%s2 + $0x8c] sm:$0xf]
        %v385 = vld [vmem:[%s3] sm:$0x1]
        %v387 = vlaneseq
        %v388 = vshrl.u32 %v387, 7
        %v389 = vsub.s32 0, %v388
        %v390 = vrot.slane %v385, %v389
        %v424 = vunpack.c.l.b16 %v317
        %v425 = vunpack.c.h.b16 %v317
        %v426 = vunpack.c.l.b16 %v318
        %v427 = vunpack.c.l.b16 %v319
        %v428 = vunpack.c.h.b16 %v319
        %v429 = vunpack.c.l.b16 %v320
        %v430 = vunpack.c.l.b16 %v321
        %v431 = vunpack.c.h.b16 %v321
        %v432 = vunpack.c.l.b16 %v322
        %v433 = vunpack.c.l.b16 %v323
        %v434 = vunpack.c.h.b16 %v323
        %v435 = vunpack.c.l.b16 %v324
        %v436 = vunpack.c.l.b16 %v325
        %v437 = vunpack.c.h.b16 %v325
        %v438 = vunpack.c.l.b16 %v326
        %v439 = vunpack.c.l.b16 %v327
        %v440 = vunpack.c.h.b16 %v327
        %v441 = vunpack.c.l.b16 %v328
        %v442 = vunpack.c.l.b16 %v329
        %v443 = vunpack.c.h.b16 %v329
        %v444 = vunpack.c.l.b16 %v330
        %v445 = vunpack.c.l.b16 %v331
        %v446 = vunpack.c.h.b16 %v331
        %v447 = vunpack.c.l.b16 %v332
        %v448 = vunpack.c.l.b16 %v333
        %v449 = vunpack.c.h.b16 %v333
        %v450 = vunpack.c.l.b16 %v334
        %v451 = vunpack.c.l.b16 %v335
        %v452 = vunpack.c.h.b16 %v335
        %v453 = vunpack.c.l.b16 %v336
        %v454 = vunpack.c.l.b16 %v337
        %v455 = vunpack.c.h.b16 %v337
        %v456 = vunpack.c.l.b16 %v338
        %v457 = vunpack.c.l.b16 %v339
        %v458 = vunpack.c.h.b16 %v339
        %v459 = vunpack.c.l.b16 %v340
        %v460 = vunpack.c.l.b16 %v341
        %v461 = vunpack.c.h.b16 %v341
        %v462 = vunpack.c.l.b16 %v342
        %v463 = vunpack.c.l.b16 %v343
        %v464 = vunpack.c.h.b16 %v343
        %v465 = vunpack.c.l.b16 %v344
        %v466 = vunpack.c.l.b16 %v345
        %v467 = vunpack.c.h.b16 %v345
        %v468 = vunpack.c.l.b16 %v346
        %v469 = vunpack.c.l.b16 %v347
        %v470 = vunpack.c.h.b16 %v347
        %v471 = vunpack.c.l.b16 %v348
        %v472 = vpack.c.b16 %v427, %v424
        %v473 = vpack.c.b16 %v428, %v425
        %v474 = vpack.c.b16 %v429, %v426
        %v475 = vpack.c.b16 %v433, %v430
        %v476 = vpack.c.b16 %v434, %v431
        %v477 = vpack.c.b16 %v435, %v432
        %v478 = vpack.c.b16 %v439, %v436
        %v479 = vpack.c.b16 %v440, %v437
        %v480 = vpack.c.b16 %v441, %v438
        %v481 = vpack.c.b16 %v445, %v442
        %v482 = vpack.c.b16 %v446, %v443
        %v483 = vpack.c.b16 %v447, %v444
        %v484 = vpack.c.b16 %v451, %v448
        %v485 = vpack.c.b16 %v452, %v449
        %v486 = vpack.c.b16 %v453, %v450
        %v487 = vpack.c.b16 %v457, %v454
        %v488 = vpack.c.b16 %v458, %v455
        %v489 = vpack.c.b16 %v459, %v456
        %v490 = vpack.c.b16 %v463, %v460
        %v491 = vpack.c.b16 %v464, %v461
        %v492 = vpack.c.b16 %v465, %v462
        %v493 = vpack.c.b16 %v469, %v466
        %v494 = vpack.c.b16 %v470, %v467
        %v495 = vpack.c.b16 %v471, %v468
        %v548 = vunpack.c.l.b16 %v349
        %v549 = vunpack.c.l.b16 %v350
        %v550 = vunpack.c.l.b16 %v351
        %v551 = vunpack.c.l.b16 %v352
        %v552 = vunpack.c.l.b16 %v353
        %v553 = vunpack.c.l.b16 %v354
        %v554 = vunpack.c.l.b16 %v355
        %v555 = vunpack.c.l.b16 %v356
        %v556 = vunpack.c.l.b16 %v357
        %v557 = vunpack.c.l.b16 %v358
        %v558 = vunpack.c.l.b16 %v359
        %v559 = vunpack.c.l.b16 %v360
        %v560 = vunpack.c.l.b16 %v361
        %v561 = vunpack.c.l.b16 %v362
        %v562 = vunpack.c.l.b16 %v363
        %v563 = vunpack.c.l.b16 %v364
        %v564 = vunpack.c.l.b16 %v365
        %v565 = vunpack.c.l.b16 %v366
        %v566 = vunpack.c.l.b16 %v367
        %v567 = vunpack.c.l.b16 %v368
        %v568 = vunpack.c.l.b16 %v369
        %v569 = vunpack.c.l.b16 %v370
        %v570 = vunpack.c.l.b16 %v371
        %v571 = vunpack.c.l.b16 %v372
        %v572 = vunpack.c.l.b16 %v373
        %v573 = vunpack.c.l.b16 %v374
        %v574 = vunpack.c.l.b16 %v375
        %v575 = vunpack.c.l.b16 %v376
        %v576 = vunpack.c.l.b16 %v377
        %v577 = vunpack.c.l.b16 %v378
        %v578 = vunpack.c.l.b16 %v379
        %v579 = vunpack.c.l.b16 %v380
        %v580 = vunpack.c.l.b16 %v381
        %v581 = vunpack.c.l.b16 %v382
        %v582 = vunpack.c.l.b16 %v383
        %v583 = vunpack.c.l.b16 %v384
        %v584 = vpack.c.b16 %v549, %v548
        %v585 = vpack.c.b16 %v551, %v550
        %v586 = vpack.c.b16 %v553, %v552
        %v587 = vpack.c.b16 %v555, %v554
        %v588 = vpack.c.b16 %v557, %v556
        %v589 = vpack.c.b16 %v559, %v558
        %v590 = vpack.c.b16 %v561, %v560
        %v591 = vpack.c.b16 %v563, %v562
        %v592 = vpack.c.b16 %v565, %v564
        %v593 = vpack.c.b16 %v567, %v566
        %v594 = vpack.c.b16 %v569, %v568
        %v595 = vpack.c.b16 %v571, %v570
        %v596 = vpack.c.b16 %v573, %v572
        %v597 = vpack.c.b16 %v575, %v574
        %v598 = vpack.c.b16 %v577, %v576
        %v599 = vpack.c.b16 %v579, %v578
        %v600 = vpack.c.b16 %v581, %v580
        %v601 = vpack.c.b16 %v583, %v582
        %vm620 = vcmask 261120
        %v622 = vsel %vm620, %v474, 0
        %v625 = vsel %vm620, %v477, 0
        %v628 = vsel %vm620, %v480, 0
        %v631 = vsel %vm620, %v483, 0
        %v634 = vsel %vm620, %v486, 0
        %v637 = vsel %vm620, %v489, 0
        %v640 = vsel %vm620, %v492, 0
        %v643 = vsel %vm620, %v495, 0
        %645 = vmatprep.subr.bf16.mxu0 0
        %646 = vmatpush1.bf16.msra.mxu0 %v584
        %647 = vmatprep.subr.bf16.mxu0 0
        %648 = vmatpush1.bf16.msra.mxu0 %v585
        %649 = vmatprep.subr.bf16.mxu0 0
        %650 = vmatpush1.bf16.msra.mxu0 %v586
        %651 = vmatprep.subr.bf16.mxu0 0
        %652 = vmatpush1.bf16.msra.mxu0 %v587
        %653 = vmatprep.subr.bf16.mxu0 0
        %654 = vmatpush1.bf16.msra.mxu0 %v588
        %655 = vmatprep.subr.bf16.mxu0 0
        %656 = vmatpush1.bf16.msra.mxu0 %v589
        %657 = vmatprep.subr.bf16.mxu0 0
        %658 = vmatpush1.bf16.msra.mxu0 %v590
        %659 = vmatprep.subr.bf16.mxu0 0
        %660 = vmatpush1.bf16.msra.mxu0 %v591
        %661 = vmatprep.subr.bf16.mxu0 0
        %662 = vmatpush1.bf16.msra.mxu0 %v592
        %663 = vmatprep.subr.bf16.mxu0 0
        %664 = vmatpush1.bf16.msra.mxu0 %v593
        %665 = vmatprep.subr.bf16.mxu0 0
        %666 = vmatpush1.bf16.msra.mxu0 %v594
        %667 = vmatprep.subr.bf16.mxu0 0
        %668 = vmatpush1.bf16.msra.mxu0 %v595
        %669 = vmatprep.subr.bf16.mxu0 0
        %670 = vmatpush1.bf16.msra.mxu0 %v596
        %671 = vmatprep.subr.bf16.mxu0 0
        %672 = vmatpush1.bf16.msra.mxu0 %v597
        %673 = vmatprep.subr.bf16.mxu0 0
        %674 = vmatpush1.bf16.msra.mxu0 %v598
        %675 = vmatprep.subr.bf16.mxu0 0
        %676 = vmatpush1.bf16.msra.mxu0 %v599
        %677 = vmatprep.mubr.bf16.mxu0 %v473
        %678 = vmatmul.mubr.bf16.gmra.mrb[0].mxu0 %v472
        %v679 = vpop.f32.mrb[0].mxu0
        %v680 = vadd.f32 %v390, %v679
        %v681 = vpop.f32.mrb[0].mxu0
        %v682 = vpop.f32.mrb[0].mxu0
        %v683 = vadd.f32 %v390, %v682
        %v684 = vpop.f32.mrb[0].mxu0
        %685 = vmatprep.mubr.bf16.mxu0 %v476
        %686 = vmatmul.mubr.bf16.gmra.mrb[0].mxu0 %v475
        %v687 = vpop.f32.mrb[0].mxu0
        %v688 = vadd.f32 %v390, %v687
        %v689 = vpop.f32.mrb[0].mxu0
        %v690 = vpop.f32.mrb[0].mxu0
        %v691 = vadd.f32 %v390, %v690
        %v692 = vpop.f32.mrb[0].mxu0
        %693 = vmatprep.mubr.bf16.mxu0 %v479
        %694 = vmatmul.mubr.bf16.gmra.mrb[0].mxu0 %v478
        %v695 = vpop.f32.mrb[0].mxu0
        %v696 = vadd.f32 %v390, %v695
        %v697 = vpop.f32.mrb[0].mxu0
        %v698 = vpop.f32.mrb[0].mxu0
        %v699 = vadd.f32 %v390, %v698
        %v700 = vpop.f32.mrb[0].mxu0
        %701 = vmatprep.mubr.bf16.mxu0 %v482
        %702 = vmatmul.mubr.bf16.gmra.mrb[0].mxu0 %v481
        %v703 = vpop.f32.mrb[0].mxu0
        %v704 = vadd.f32 %v390, %v703
        %v705 = vpop.f32.mrb[0].mxu0
        %v706 = vpop.f32.mrb[0].mxu0
        %v707 = vadd.f32 %v390, %v706
        %v708 = vpop.f32.mrb[0].mxu0
        %709 = vmatprep.mubr.bf16.mxu0 %v485
        %710 = vmatmul.mubr.bf16.gmra.mrb[0].mxu0 %v484
        %v711 = vpop.f32.mrb[0].mxu0
        %v712 = vadd.f32 %v390, %v711
        %v713 = vpop.f32.mrb[0].mxu0
        %v714 = vpop.f32.mrb[0].mxu0
        %v715 = vadd.f32 %v390, %v714
        %v716 = vpop.f32.mrb[0].mxu0
        %717 = vmatprep.mubr.bf16.mxu0 %v488
        %718 = vmatmul.mubr.bf16.gmra.mrb[0].mxu0 %v487
        %v719 = vpop.f32.mrb[0].mxu0
        %v720 = vadd.f32 %v390, %v719
        %v721 = vpop.f32.mrb[0].mxu0
        %v722 = vpop.f32.mrb[0].mxu0
        %v723 = vadd.f32 %v390, %v722
        %v724 = vpop.f32.mrb[0].mxu0
        %725 = vmatprep.mubr.bf16.mxu0 %v491
        %726 = vmatmul.mubr.bf16.gmra.mrb[0].mxu0 %v490
        %v727 = vpop.f32.mrb[0].mxu0
        %v728 = vadd.f32 %v390, %v727
        %v729 = vpop.f32.mrb[0].mxu0
        %v730 = vpop.f32.mrb[0].mxu0
        %v731 = vadd.f32 %v390, %v730
        %v732 = vpop.f32.mrb[0].mxu0
        %733 = vmatprep.mubr.bf16.mxu0 %v494
        %734 = vmatmul.mubr.bf16.gmra.mrb[0].mxu0 %v493
        %v735 = vpop.f32.mrb[0].mxu0
        %v736 = vadd.f32 %v390, %v735
        %v737 = vpop.f32.mrb[0].mxu0
        %v738 = vpop.f32.mrb[0].mxu0
        %v739 = vadd.f32 %v390, %v738
        %v740 = vpop.f32.mrb[0].mxu0
        %741 = vdwg.mxu0
        %742 = vmatprep.subr.bf16.mxu0 0
        %743 = vmatpush1.bf16.msra.mxu0 %v600
        %744 = vmatprep.subr.bf16.mxu0 0
        %745 = vmatpush1.bf16.msra.mxu0 %v601
        %746 = vmatprep.subr.bf16.mxu0 0
        %747 = vmatpush1.bf16.msra.mxu0 0
        %748 = vmatprep.subr.bf16.mxu0 0
        %749 = vmatpush1.bf16.msra.mxu0 0
        %750 = vmatprep.subr.bf16.mxu0 0
        %751 = vmatpush1.bf16.msra.mxu0 0
        %752 = vmatprep.subr.bf16.mxu0 0
        %753 = vmatpush1.bf16.msra.mxu0 0
        %754 = vmatprep.subr.bf16.mxu0 0
        %755 = vmatpush1.bf16.msra.mxu0 0
        %756 = vmatprep.subr.bf16.mxu0 0
        %757 = vmatpush1.bf16.msra.mxu0 0
        %758 = vmatprep.subr.bf16.mxu0 0
        %759 = vmatpush1.bf16.msra.mxu0 0
        %760 = vmatprep.subr.bf16.mxu0 0
        %761 = vmatpush1.bf16.msra.mxu0 0
        %762 = vmatprep.subr.bf16.mxu0 0
        %763 = vmatpush1.bf16.msra.mxu0 0
        %764 = vmatprep.subr.bf16.mxu0 0
        %765 = vmatpush1.bf16.msra.mxu0 0
        %766 = vmatprep.subr.bf16.mxu0 0
        %767 = vmatpush1.bf16.msra.mxu0 0
        %768 = vmatprep.subr.bf16.mxu0 0
        %769 = vmatpush1.bf16.msra.mxu0 0
        %770 = vmatprep.subr.bf16.mxu0 0
        %771 = vmatpush1.bf16.msra.mxu0 0
        %772 = vmatprep.subr.bf16.mxu0 0
        %773 = vmatpush1.bf16.msra.mxu0 0
        %774 = vmatprep.mubr.bf16.mxu0 0
        %775 = vmatmul.mubr.bf16.gmra.mrb[0].mxu0 %v622
        %v776 = vpop.f32.mrb[0].mxu0
        %v777 = vadd.f32 %v680, %v776
        %v778 = vpop.f32.mrb[0].mxu0
        %v779 = vpop.f32.mrb[0].mxu0
        %v780 = vadd.f32 %v683, %v779
        %v781 = vpop.f32.mrb[0].mxu0
        %782 = vmatprep.mubr.bf16.mxu0 0
        %783 = vmatmul.mubr.bf16.gmra.mrb[0].mxu0 %v625
        %v784 = vpop.f32.mrb[0].mxu0
        %v785 = vadd.f32 %v688, %v784
        %v786 = vpop.f32.mrb[0].mxu0
        %v787 = vpop.f32.mrb[0].mxu0
        %v788 = vadd.f32 %v691, %v787
        %v789 = vpop.f32.mrb[0].mxu0
        %790 = vmatprep.mubr.bf16.mxu0 0
        %791 = vmatmul.mubr.bf16.gmra.mrb[0].mxu0 %v628
        %v792 = vpop.f32.mrb[0].mxu0
        %v793 = vadd.f32 %v696, %v792
        %v794 = vpop.f32.mrb[0].mxu0
        %v795 = vpop.f32.mrb[0].mxu0
        %v796 = vadd.f32 %v699, %v795
        %v797 = vpop.f32.mrb[0].mxu0
        %798 = vmatprep.mubr.bf16.mxu0 0
        %799 = vmatmul.mubr.bf16.gmra.mrb[0].mxu0 %v631
        %v800 = vpop.f32.mrb[0].mxu0
        %v801 = vadd.f32 %v704, %v800
        %v802 = vpop.f32.mrb[0].mxu0
        %v803 = vpop.f32.mrb[0].mxu0
        %v804 = vadd.f32 %v707, %v803
        %v805 = vpop.f32.mrb[0].mxu0
        %806 = vmatprep.mubr.bf16.mxu0 0
        %807 = vmatmul.mubr.bf16.gmra.mrb[0].mxu0 %v634
        %v808 = vpop.f32.mrb[0].mxu0
        %v809 = vadd.f32 %v712, %v808
        %v810 = vpop.f32.mrb[0].mxu0
        %v811 = vpop.f32.mrb[0].mxu0
        %v812 = vadd.f32 %v715, %v811
        %v813 = vpop.f32.mrb[0].mxu0
        %814 = vmatprep.mubr.bf16.mxu0 0
        %815 = vmatmul.mubr.bf16.gmra.mrb[0].mxu0 %v637
        %v816 = vpop.f32.mrb[0].mxu0
        %v817 = vadd.f32 %v720, %v816
        %v818 = vpop.f32.mrb[0].mxu0
        %v819 = vpop.f32.mrb[0].mxu0
        %v820 = vadd.f32 %v723, %v819
        %v821 = vpop.f32.mrb[0].mxu0
        %822 = vmatprep.mubr.bf16.mxu0 0
        %823 = vmatmul.mubr.bf16.gmra.mrb[0].mxu0 %v640
        %v824 = vpop.f32.mrb[0].mxu0
        %v825 = vadd.f32 %v728, %v824
        %v826 = vpop.f32.mrb[0].mxu0
        %v827 = vpop.f32.mrb[0].mxu0
        %v828 = vadd.f32 %v731, %v827
        %v829 = vpop.f32.mrb[0].mxu0
        %830 = vmatprep.mubr.bf16.mxu0 0
        %831 = vmatmul.mubr.bf16.gmra.mrb[0].mxu0 %v643
        %v832 = vpop.f32.mrb[0].mxu0
        %v833 = vadd.f32 %v736, %v832
        %v834 = vpop.f32.mrb[0].mxu0
        %v835 = vpop.f32.mrb[0].mxu0
        %v836 = vadd.f32 %v739, %v835
        %v837 = vpop.f32.mrb[0].mxu0
        %838 = vdwg.mxu0
        %v839 = vld [vmem:[%s302] sm:$0xff]
        %v840 = vld [vmem:[%s302 + $0x8] sm:$0xff]
        %v841 = vld [vmem:[%s302 + $0x10] sm:$0xff]
        %v842 = vld [vmem:[%s302 + $0x18] sm:$0xff]
        %v843 = vld [vmem:[%s302 + $0x20] sm:$0xff]
        %v844 = vld [vmem:[%s302 + $0x28] sm:$0xff]
        %v845 = vld [vmem:[%s302 + $0x30] sm:$0xff]
        %v846 = vld [vmem:[%s302 + $0x38] sm:$0xff]
        %v847 = vld [vmem:[%s302 + $0x40] sm:$0xff]
        %v848 = vld [vmem:[%s302 + $0x48] sm:$0xff]
        %v849 = vld [vmem:[%s302 + $0x50] sm:$0xff]
        %v850 = vld [vmem:[%s302 + $0x58] sm:$0xff]
        %v851 = vld [vmem:[%s302 + $0x60] sm:$0xff]
        %v852 = vld [vmem:[%s302 + $0x68] sm:$0xff]
        %v853 = vld [vmem:[%s302 + $0x70] sm:$0xff]
        %v854 = vld [vmem:[%s302 + $0x78] sm:$0xff]
        %s855 = sld [smem:[#allocation2 + $0x1]]
        %v856 = vstv %s855
        %v857 = vmul.f32 %v856, %v777
        %v858 = vmul.f32 %v856, %v780
        %v859 = vmul.f32 %v856, %v785
        %v860 = vmul.f32 %v856, %v788
        %v861 = vmul.f32 %v856, %v793
        %v862 = vmul.f32 %v856, %v796
        %v863 = vmul.f32 %v856, %v801
        %v864 = vmul.f32 %v856, %v804
        %v865 = vmul.f32 %v856, %v809
        %v866 = vmul.f32 %v856, %v812
        %v867 = vmul.f32 %v856, %v817
        %v868 = vmul.f32 %v856, %v820
        %v869 = vmul.f32 %v856, %v825
        %v870 = vmul.f32 %v856, %v828
        %v871 = vmul.f32 %v856, %v833
        %v872 = vmul.f32 %v856, %v836
        %v873 = vsub.f32 %v839, %v857
        %v874 = vsub.f32 %v840, %v858
        %v875 = vsub.f32 %v841, %v859
        %v876 = vsub.f32 %v842, %v860
        %v877 = vsub.f32 %v843, %v861
        %v878 = vsub.f32 %v844, %v862
        %v879 = vsub.f32 %v845, %v863
        %v880 = vsub.f32 %v846, %v864
        %v881 = vsub.f32 %v847, %v865
        %v882 = vsub.f32 %v848, %v866
        %v883 = vsub.f32 %v849, %v867
        %v884 = vsub.f32 %v850, %v868
        %v885 = vsub.f32 %v851, %v869
        %v886 = vsub.f32 %v852, %v870
        %v887 = vsub.f32 %v853, %v871
        %v888 = vsub.f32 %v854, %v872
        %s889 = sld [smem:[#allocation2]]
        %v890 = vstv %s889
        %v891 = vmul.f32 %v873, %v890
        %v892 = vmul.f32 %v874, %v890
        %v893 = vmul.f32 %v875, %v890
        %v894 = vmul.f32 %v876, %v890
        %v895 = vmul.f32 %v877, %v890
        %v896 = vmul.f32 %v878, %v890
        %v897 = vmul.f32 %v879, %v890
        %v898 = vmul.f32 %v880, %v890
        %v899 = vmul.f32 %v881, %v890
        %v900 = vmul.f32 %v882, %v890
        %v901 = vmul.f32 %v883, %v890
        %v902 = vmul.f32 %v884, %v890
        %v903 = vmul.f32 %v885, %v890
        %v904 = vmul.f32 %v886, %v890
        %v905 = vmul.f32 %v887, %v890
        %v906 = vmul.f32 %v888, %v890
        %s907 = sld [smem:[#allocation2 + $0x2]]
        %v908 = vstv %s907
        %v909 = vmul.f32 %v908, %v891
        %v910 = vmul.f32 %v908, %v892
        %v911 = vmul.f32 %v908, %v893
        %v912 = vmul.f32 %v908, %v894
        %v913 = vmul.f32 %v908, %v895
        %v914 = vmul.f32 %v908, %v896
        %v915 = vmul.f32 %v908, %v897
        %v916 = vmul.f32 %v908, %v898
        %v917 = vmul.f32 %v908, %v899
        %v918 = vmul.f32 %v908, %v900
        %v919 = vmul.f32 %v908, %v901
        %v920 = vmul.f32 %v908, %v902
        %v921 = vmul.f32 %v908, %v903
        %v922 = vmul.f32 %v908, %v904
        %v923 = vmul.f32 %v908, %v905
        %v924 = vmul.f32 %v908, %v906
        %s925 = sld [smem:[#allocation2 + $0x3]]
        %v926 = vstv %s925
        %v927 = vmul.f32 %v926, %v777
        %v928 = vmul.f32 %v926, %v780
        %v929 = vmul.f32 %v926, %v785
        %v930 = vmul.f32 %v926, %v788
        %v931 = vmul.f32 %v926, %v793
        %v932 = vmul.f32 %v926, %v796
        %v933 = vmul.f32 %v926, %v801
        %v934 = vmul.f32 %v926, %v804
        %v935 = vmul.f32 %v926, %v809
        %v936 = vmul.f32 %v926, %v812
        %v937 = vmul.f32 %v926, %v817
        %v938 = vmul.f32 %v926, %v820
        %v939 = vmul.f32 %v926, %v825
        %v940 = vmul.f32 %v926, %v828
        %v941 = vmul.f32 %v926, %v833
        %v942 = vmul.f32 %v926, %v836
        %v943 = vadd.f32 %v909, %v927
        %v944 = vadd.f32 %v910, %v928
        %v945 = vadd.f32 %v911, %v929
        %v946 = vadd.f32 %v912, %v930
        %v947 = vadd.f32 %v913, %v931
        %v948 = vadd.f32 %v914, %v932
        %v949 = vadd.f32 %v915, %v933
        %v950 = vadd.f32 %v916, %v934
        %v951 = vadd.f32 %v917, %v935
        %v952 = vadd.f32 %v918, %v936
        %v953 = vadd.f32 %v919, %v937
        %v954 = vadd.f32 %v920, %v938
        %v955 = vadd.f32 %v921, %v939
        %v956 = vadd.f32 %v922, %v940
        %v957 = vadd.f32 %v923, %v941
        %v958 = vadd.f32 %v924, %v942
        %s959 = sld [smem:[#allocation2 + $0x4]]
        %v960 = vld [vmem:[%s308] sm:$0xff]
        %v961 = vld [vmem:[%s308 + $0x8] sm:$0xff]
        %v962 = vld [vmem:[%s308 + $0x10] sm:$0xff]
        %v963 = vld [vmem:[%s308 + $0x18] sm:$0xff]
        %v964 = vld [vmem:[%s308 + $0x20] sm:$0xff]
        %v965 = vld [vmem:[%s308 + $0x28] sm:$0xff]
        %v966 = vld [vmem:[%s308 + $0x30] sm:$0xff]
        %v967 = vld [vmem:[%s308 + $0x38] sm:$0xff]
        %v968 = vld [vmem:[%s308 + $0x40] sm:$0xff]
        %v969 = vld [vmem:[%s308 + $0x48] sm:$0xff]
        %v970 = vld [vmem:[%s308 + $0x50] sm:$0xff]
        %v971 = vld [vmem:[%s308 + $0x58] sm:$0xff]
        %v972 = vld [vmem:[%s308 + $0x60] sm:$0xff]
        %v973 = vld [vmem:[%s308 + $0x68] sm:$0xff]
        %v974 = vld [vmem:[%s308 + $0x70] sm:$0xff]
        %v975 = vld [vmem:[%s308 + $0x78] sm:$0xff]
        %v976 = vstv %s959
        %v977 = vmul.f32 %v976, %v960
        %v978 = vmul.f32 %v976, %v961
        %v979 = vmul.f32 %v976, %v962
        %v980 = vmul.f32 %v976, %v963
        %v981 = vmul.f32 %v976, %v964
        %v982 = vmul.f32 %v976, %v965
        %v983 = vmul.f32 %v976, %v966
        %v984 = vmul.f32 %v976, %v967
        %v985 = vmul.f32 %v976, %v968
        %v986 = vmul.f32 %v976, %v969
        %v987 = vmul.f32 %v976, %v970
        %v988 = vmul.f32 %v976, %v971
        %v989 = vmul.f32 %v976, %v972
        %v990 = vmul.f32 %v976, %v973
        %v991 = vmul.f32 %v976, %v974
        %v992 = vmul.f32 %v976, %v975
        %v993 = vadd.f32 %v943, %v977
        %v994 = vadd.f32 %v944, %v978
        %v995 = vadd.f32 %v945, %v979
        %v996 = vadd.f32 %v946, %v980
        %v997 = vadd.f32 %v947, %v981
        %v998 = vadd.f32 %v948, %v982
        %v999 = vadd.f32 %v949, %v983
        %v1000 = vadd.f32 %v950, %v984
        %v1001 = vadd.f32 %v951, %v985
        %v1002 = vadd.f32 %v952, %v986
        %v1003 = vadd.f32 %v953, %v987
        %v1004 = vadd.f32 %v954, %v988
        %v1005 = vadd.f32 %v955, %v989
        %v1006 = vadd.f32 %v956, %v990
        %v1007 = vadd.f32 %v957, %v991
        %v1008 = vadd.f32 %v958, %v992
        %vm1009 = vcmask 31744
        %1010 = vst.msk [vmem:[%s314] sm:$0xff] %vm1009, %v993
        %1011 = vst.msk [vmem:[%s314 + $0x8] sm:$0xff] %vm1009, %v994
        %1012 = vst.msk [vmem:[%s314 + $0x10] sm:$0xff] %vm1009, %v995
        %1013 = vst.msk [vmem:[%s314 + $0x18] sm:$0xff] %vm1009, %v996
        %1014 = vst.msk [vmem:[%s314 + $0x20] sm:$0xff] %vm1009, %v997
        %1015 = vst.msk [vmem:[%s314 + $0x28] sm:$0xff] %vm1009, %v998
        %1016 = vst.msk [vmem:[%s314 + $0x30] sm:$0xff] %vm1009, %v999
        %1017 = vst.msk [vmem:[%s314 + $0x38] sm:$0xff] %vm1009, %v1000
        %1018 = vst.msk [vmem:[%s314 + $0x40] sm:$0xff] %vm1009, %v1001
        %1019 = vst.msk [vmem:[%s314 + $0x48] sm:$0xff] %vm1009, %v1002
        %1020 = vst.msk [vmem:[%s314 + $0x50] sm:$0xff] %vm1009, %v1003
        %1021 = vst.msk [vmem:[%s314 + $0x58] sm:$0xff] %vm1009, %v1004
        %1022 = vst.msk [vmem:[%s314 + $0x60] sm:$0xff] %vm1009, %v1005
        %1023 = vst.msk [vmem:[%s314 + $0x68] sm:$0xff] %vm1009, %v1006
        %1024 = vst.msk [vmem:[%s314 + $0x70] sm:$0xff] %vm1009, %v1007
        %1025 = vst.msk [vmem:[%s314 + $0x78] sm:$0xff] %vm1009, %v1008
        %s1026 = smul.u32 16, %s18
        %p1027 = scmp.lt.s32.totalorder %s1026, 63
        %s1028 = scalar_select %p1027, %s1026, 63
        %s1029 = smul.addr %s1028, 8
        %s1030 = scalar_lea.vmem %s6, %s1029
        // Predicated region
        $region49: #{closed_call.34} parent=43 // pred_check
          %p1031 = pneg %p177
        $region50: #{closed_call.34} parent=43 // pred_check_branch
          %1033 = sbr.rel (%p1031) target = $region52
        $region51: #{closed_call.34} parent=43 // pred_region
          %s1034 = smul.u32 16, %s18
        $region52: #{closed_call.34} parent=43 // pred_fallthru
          _
      $region44: #{closed_call.34} parent=5 // pred_fallthru
        _
      %p1035 = scmp.le.s32.totalorder 2, %s13
      // Predicated region
      $region53: #{closed_call.34} parent=5 // pred_check
        %p1036 = pneg %p1035
      $region54: #{closed_call.34} parent=5 // pred_check_branch
        %1038 = sbr.rel (%p1036) target = $region56
      $region55: #{closed_call.34} parent=5 // pred_region
        %s1039 = ssub.s32 %s13, 2
        // Predicated region
        $region57: #{closed_call.34} parent=55 // pred_check
          %p1040 = pneg %p183
        $region58: #{closed_call.34} parent=55 // pred_check_branch
          %1042 = sbr.rel (%p1040) target = $region60
        $region59: #{closed_call.34} parent=55 // pred_region
          %s1043 = smul.u32 16, %s19
          %p1044 = scmp.lt.s32.totalorder %s1043, 63
          %s1045 = scalar_select %p1044, %s1043, 63
          %s1046 = smul.addr %s1045, 8
          %s1047 = scalar_lea.vmem %s6, %s1046
        $region60: #{closed_call.34} parent=55 // pred_fallthru
          _
      $region56: #{closed_call.34} parent=5 // pred_fallthru
        _
    $region6: #{closed_call.34} parent=1 // loop_footer
      %s17 = sadd.s32 1, %s13
    $region7: #{closed_call.34} parent=1 // loop_footer_branch
      %12 = sbr.rel target = $region3
    $region8: #{closed_call.34} parent=1 // loop_exit
      _
    %1048 = vsyncpa [#allocation3], 1
    %s1049 = scalar_lea.sflag [#allocation3], 1
    %1050 = vsyncpa %s1049, 1

// kernel: forward.3
$region0: #{forward.3}
  #allocation0 [shape = 'u32[]', space=smem, size = 0x4, offset = 0x4, fixed_abs, tag = 'smem constant byte address 0x4 - core index']
  #allocation1 [shape = 'u32[144,128]{1,0:T(1,128)}', space=vmem, size = 0x12000, scoped, tag = 'internal scratch']
  %s0 = inlined_call_operand.vmem [shape: bf16[512,36], index: 0, kind: input, shape index: {}]
  %s1 = inlined_call_operand.vmem [shape: bf16[36,32], index: 1, kind: input, shape index: {}]
  %s2 = inlined_call_operand.vmem [shape: f32[1,32], index: 2, kind: input, shape index: {}]
  %s3 = inlined_call_operand.vmem [shape: bf16[32,64], index: 3, kind: input, shape index: {}]
  %s4 = inlined_call_operand.vmem [shape: f32[1,64], index: 4, kind: input, shape index: {}]
  %s5 = inlined_call_operand.vmem [shape: f32[512,64], index: 5, kind: output, shape index: {}]
  %s6 = sld [smem:[#allocation0]]
  $region53: #{forward.3} parent=0
    _
  %s8 = ssub.s32 1, %s6
  %s9 = scalar_select 0, %s8, %s6
  loop: start=0, step=1, limit=6
  $region2: #{forward.3} parent=0 // loop_pre_header
    _
  $region3: #{forward.3} parent=0 // loop_header
    %s11 = sphi 0, %s15
    %p12 = scmp.ge.s32.totalorder %s11, 6
    %s21 = sphi 0, %s23
    %s24 = sphi 0, %s21
    %s25 = sphi 0, %s24
    %s41 = sphi 0, %s25
    %s45 = sphi 0, %s45
    %s47 = sphi 0, %s45
    %s48 = sphi 0, %s47
    %s62 = sphi 0, %s48
    %s66 = sphi 0, %s66
    %s68 = sphi 0, %s66
    %s69 = sphi 0, %s68
    %s83 = sphi 0, %s69
    %s87 = sphi 0, %s87
    %s89 = sphi 0, %s87
    %s90 = sphi 0, %s89
    %s104 = sphi 0, %s90
    %s108 = sphi 0, %s108
    %s110 = sphi 0, %s108
    %s111 = sphi 0, %s110
    %s125 = sphi 0, %s111
    %s131 = sphi 0, %s133
    %s134 = sphi 0, %s131
    %s135 = sphi 0, %s134
    %s151 = sphi 0, %s135
  $region4: #{forward.3} parent=0 // loop_header_branch
    %14 = sbr.rel (%p12) target = $region8
  $region5: #{forward.3} parent=0 // loop_body
    %s16 = ssub.s32 %s11, 1
    %s17 = ssub.s32 %s11, 2
    %s18 = sadd.s32 %s11, 1
    %s19 = ssub.s32 %s11, %s18
    %p20 = scmp.eq.s32.totalorder %s19, 0
    %s22 = sadd.s32 %s21, 1
    %s23 = scalar_select %p20, %s21, %s22
    %p26 = pneg %p20
    %p27 = scmp.eq.s32.totalorder %s11, 3
    %p28 = por %p26, %p27
    %p29 = scmp.ne.s32.totalorder %s21, %s24
    %p30 = scmp.eq.s32.totalorder %s11, 0
    %p31 = por %p29, %p30
    %p32 = scmp.ne.s32.totalorder %s21, %s24
    %p33 = scmp.eq.s32.totalorder %s16, 3
    %p34 = por %p32, %p33
    %p35 = scmp.ne.s32.totalorder %s24, %s25
    %p36 = scmp.eq.s32.totalorder %s16, 0
    %p37 = por %p35, %p36
    %p38 = scmp.ne.s32.totalorder %s24, %s25
    %p39 = scmp.eq.s32.totalorder %s17, 3
    %p40 = por %p38, %p39
    %p42 = scmp.ne.s32.totalorder %s25, %s41
    %p43 = scmp.eq.s32.totalorder %s17, 0
    %p44 = por %p42, %p43
    %s46 = sadd.s32 %s45, 1
    %p49 = scmp.eq.s32.totalorder %s11, 3
    %p50 = scmp.ne.s32.totalorder %s45, %s47
    %p51 = scmp.eq.s32.totalorder %s11, 0
    %p52 = por %p50, %p51
    %p53 = scmp.ne.s32.totalorder %s45, %s47
    %p54 = scmp.eq.s32.totalorder %s16, 3
    %p55 = por %p53, %p54
    %p56 = scmp.ne.s32.totalorder %s47, %s48
    %p57 = scmp.eq.s32.totalorder %s16, 0
    %p58 = por %p56, %p57
    %p59 = scmp.ne.s32.totalorder %s47, %s48
    %p60 = scmp.eq.s32.totalorder %s17, 3
    %p61 = por %p59, %p60
    %p63 = scmp.ne.s32.totalorder %s48, %s62
    %p64 = scmp.eq.s32.totalorder %s17, 0
    %p65 = por %p63, %p64
    %s67 = sadd.s32 %s66, 1
    %p70 = scmp.eq.s32.totalorder %s11, 3
    %p71 = scmp.ne.s32.totalorder %s66, %s68
    %p72 = scmp.eq.s32.totalorder %s11, 0
    %p73 = por %p71, %p72
    %p74 = scmp.ne.s32.totalorder %s66, %s68
    %p75 = scmp.eq.s32.totalorder %s16, 3
    %p76 = por %p74, %p75
    %p77 = scmp.ne.s32.totalorder %s68, %s69
    %p78 = scmp.eq.s32.totalorder %s16, 0
    %p79 = por %p77, %p78
    %p80 = scmp.ne.s32.totalorder %s68, %s69
    %p81 = scmp.eq.s32.totalorder %s17, 3
    %p82 = por %p80, %p81
    %p84 = scmp.ne.s32.totalorder %s69, %s83
    %p85 = scmp.eq.s32.totalorder %s17, 0
    %p86 = por %p84, %p85
    %s88 = sadd.s32 %s87, 1
    %p91 = scmp.eq.s32.totalorder %s11, 3
    %p92 = scmp.ne.s32.totalorder %s87, %s89
    %p93 = scmp.eq.s32.totalorder %s11, 0
    %p94 = por %p92, %p93
    %p95 = scmp.ne.s32.totalorder %s87, %s89
    %p96 = scmp.eq.s32.totalorder %s16, 3
    %p97 = por %p95, %p96
    %p98 = scmp.ne.s32.totalorder %s89, %s90
    %p99 = scmp.eq.s32.totalorder %s16, 0
    %p100 = por %p98, %p99
    %p101 = scmp.ne.s32.totalorder %s89, %s90
    %p102 = scmp.eq.s32.totalorder %s17, 3
    %p103 = por %p101, %p102
    %p105 = scmp.ne.s32.totalorder %s90, %s104
    %p106 = scmp.eq.s32.totalorder %s17, 0
    %p107 = por %p105, %p106
    %s109 = sadd.s32 %s108, 1
    %p112 = scmp.eq.s32.totalorder %s11, 3
    %p113 = scmp.ne.s32.totalorder %s108, %s110
    %p114 = scmp.eq.s32.totalorder %s11, 0
    %p115 = por %p113, %p114
    %p116 = scmp.ne.s32.totalorder %s108, %s110
    %p117 = scmp.eq.s32.totalorder %s16, 3
    %p118 = por %p116, %p117
    %p119 = scmp.ne.s32.totalorder %s110, %s111
    %p120 = scmp.eq.s32.totalorder %s16, 0
    %p121 = por %p119, %p120
    %p122 = scmp.ne.s32.totalorder %s110, %s111
    %p123 = scmp.eq.s32.totalorder %s17, 3
    %p124 = por %p122, %p123
    %p126 = scmp.ne.s32.totalorder %s111, %s125
    %p127 = scmp.eq.s32.totalorder %s17, 0
    %p128 = por %p126, %p127
    %s129 = ssub.s32 %s11, %s18
    %p130 = scmp.eq.s32.totalorder %s129, 0
    %s132 = sadd.s32 %s131, 1
    %s133 = scalar_select %p130, %s131, %s132
    %p136 = pneg %p130
    %p137 = scmp.eq.s32.totalorder %s11, 3
    %p138 = por %p136, %p137
    %p139 = scmp.ne.s32.totalorder %s131, %s134
    %p140 = scmp.eq.s32.totalorder %s11, 0
    %p141 = por %p139, %p140
    %p142 = scmp.ne.s32.totalorder %s131, %s134
    %p143 = scmp.eq.s32.totalorder %s16, 3
    %p144 = por %p142, %p143
    %p145 = scmp.ne.s32.totalorder %s134, %s135
    %p146 = scmp.eq.s32.totalorder %s16, 0
    %p147 = por %p145, %p146
    %p148 = scmp.ne.s32.totalorder %s134, %s135
    %p149 = scmp.eq.s32.totalorder %s17, 3
    %p150 = por %p148, %p149
    %p152 = scmp.ne.s32.totalorder %s135, %s151
    %p153 = scmp.eq.s32.totalorder %s17, 0
    %p154 = por %p152, %p153
    %p155 = scmp.le.s32.totalorder 1, %s11
    %p156 = scmp.lt.s32.totalorder %s11, 5
    %p157 = pnand %p155, %p156
    %p158 = pneg %p157
    // Predicated region
    $region9: #{forward.3} parent=5 // pred_check
      _
    $region10: #{forward.3} parent=5 // pred_check_branch
      %160 = sbr.rel (%p157) target = $region12
    $region11: #{forward.3} parent=5 // pred_region
      %s161 = ssub.s32 %s11, 1
      // Predicated region
      $region13: #{forward.3} parent=11 // pred_check
        %p162 = pneg %p58
      $region14: #{forward.3} parent=11 // pred_check_branch
        %164 = sbr.rel (%p162) target = $region16
      $region15: #{forward.3} parent=11 // pred_region
        _
      $region16: #{forward.3} parent=11 // pred_fallthru
        _
      // Predicated region
      $region17: #{forward.3} parent=11 // pred_check
        %p165 = pneg %p79
      $region18: #{forward.3} parent=11 // pred_check_branch
        %167 = sbr.rel (%p165) target = $region20
      $region19: #{forward.3} parent=11 // pred_region
        _
      $region20: #{forward.3} parent=11 // pred_fallthru
        _
      // Predicated region
      $region21: #{forward.3} parent=11 // pred_check
        %p168 = pneg %p100
      $region22: #{forward.3} parent=11 // pred_check_branch
        %170 = sbr.rel (%p168) target = $region24
      $region23: #{forward.3} parent=11 // pred_region
        _
      $region24: #{forward.3} parent=11 // pred_fallthru
        _
      // Predicated region
      $region25: #{forward.3} parent=11 // pred_check
        %p171 = pneg %p121
      $region26: #{forward.3} parent=11 // pred_check_branch
        %173 = sbr.rel (%p171) target = $region28
      $region27: #{forward.3} parent=11 // pred_region
        _
      $region28: #{forward.3} parent=11 // pred_fallthru
        _
    $region12: #{forward.3} parent=5 // pred_fallthru
      _
    %p174 = scmp.lt.s32.totalorder %s11, 4
    // Predicated region
    $region29: #{forward.3} parent=5 // pred_check
      %p175 = pneg %p174
    $region30: #{forward.3} parent=5 // pred_check_branch
      %177 = sbr.rel (%p175) target = $region32
    $region31: #{forward.3} parent=5 // pred_region
      // Predicated region
      $region33: #{forward.3} parent=31 // pred_check
        %p178 = pneg %p31
      $region34: #{forward.3} parent=31 // pred_check_branch
        %180 = sbr.rel (%p178) target = $region36
      $region35: #{forward.3} parent=31 // pred_region
        %s181 = smul.u32 16, %s11
        %p182 = scmp.lt.s32.totalorder %s181, 63
        %s183 = scalar_select %p182, %s181, 63
        %s184 = smul.addr %s183, 4
        %s185 = scalar_lea.vmem %s0, %s184
        %s186 = smul.u32 16, %s11
      $region36: #{forward.3} parent=31 // pred_fallthru
        _
    $region32: #{forward.3} parent=5 // pred_fallthru
      _
    %p187 = scmp.le.s32.totalorder 1, %s11
    %p188 = scmp.lt.s32.totalorder %s11, 5
    %p189 = pnand %p187, %p188
    %p190 = pneg %p189
    // Predicated region
    $region37: #{forward.3} parent=5 // pred_check
      _
    $region38: #{forward.3} parent=5 // pred_check_branch
      %192 = sbr.rel (%p189) target = $region40
    $region39: #{forward.3} parent=5 // pred_region
      %s193 = ssub.s32 %s11, 1
      %s194 = smul.u32 16, %s16
      %p195 = scmp.lt.s32.totalorder %s194, 63
      %s196 = scalar_select %p195, %s194, 63
      %s197 = smul.addr %s196, 4
      %s198 = scalar_lea.vmem %s0, %s197
      %p199 = pneg %p37
      %p200 = pneg %p34
      %p201 = pneg %p58
      %p202 = pneg %p55
      %p203 = pneg %p79
      %p204 = pneg %p76
      %p205 = pneg %p100
      %p206 = pneg %p97
      %p207 = pneg %p121
      %p208 = pneg %p118
      %p209 = pneg %p147
      %p210 = pneg %p144
      %s211 = smul.u32 16, %s16
      %p212 = scmp.lt.s32.totalorder %s211, 63
      %s213 = scalar_select %p212, %s211, 63
      %s214 = smul.addr %s213, 8
      %s215 = scalar_lea.vmem %s5, %s214
      %s216 = smul.u32 16, %s16
      %p217 = scmp.lt.s32.totalorder %s216, 63
      %s218 = scalar_select %p217, %s216, 63
      %s219 = smul.addr %s218, 4
      %s220 = scalar_lea.vmem %s0, %s219
      %s221 = smul.u32 16, %s16
      %s222 = smul.u32 16, %s16
      %p223 = scmp.lt.s32.totalorder %s222, 63
      %s224 = scalar_select %p223, %s222, 63
      %s225 = smul.addr %s224, 8
      %s226 = scalar_lea.vmem %s5, %s225
      %s227 = smul.u32 16, %s16
      %v229 = vld [vmem:[%s220] sm:$0xf]
      %v230 = vld [vmem:[%s220 + $0x4] sm:$0xf]
      %v231 = vld [vmem:[%s220 + $0x8] sm:$0xf]
      %v232 = vld [vmem:[%s220 + $0xc] sm:$0xf]
      %v233 = vld [vmem:[%s220 + $0x10] sm:$0xf]
      %v234 = vld [vmem:[%s220 + $0x14] sm:$0xf]
      %v235 = vld [vmem:[%s220 + $0x18] sm:$0xf]
      %v236 = vld [vmem:[%s220 + $0x1c] sm:$0xf]
      %v237 = vld [vmem:[%s220 + $0x20] sm:$0xf]
      %v238 = vld [vmem:[%s220 + $0x24] sm:$0xf]
      %v239 = vld [vmem:[%s220 + $0x28] sm:$0xf]
      %v240 = vld [vmem:[%s220 + $0x2c] sm:$0xf]
      %v241 = vld [vmem:[%s220 + $0x30] sm:$0xf]
      %v242 = vld [vmem:[%s220 + $0x34] sm:$0xf]
      %v243 = vld [vmem:[%s220 + $0x38] sm:$0xf]
      %v244 = vld [vmem:[%s220 + $0x3c] sm:$0xf]
      %v245 = vld [vmem:[%s1] sm:$0xf]
      %v246 = vld [vmem:[%s1 + $0x4] sm:$0xf]
      %v247 = vld [vmem:[%s1 + $0x8] sm:$0xf]
      %v248 = vld [vmem:[%s1 + $0xc] sm:$0xf]
      %v249 = vld [vmem:[%s1 + $0x10] sm:$0x3]
      %v250 = vld [vmem:[%s2] sm:$0x1]
      %v252 = vlaneseq
      %v253 = vshrl.u32 %v252, 7
      %v254 = vsub.s32 0, %v253
      %v255 = vrot.slane %v250, %v254
      %v273 = vunpack.c.l.b16 %v229
      %v274 = vunpack.c.l.b16 %v230
      %v275 = vunpack.c.l.b16 %v231
      %v276 = vunpack.c.l.b16 %v232
      %v277 = vunpack.c.l.b16 %v233
      %v278 = vunpack.c.l.b16 %v234
      %v279 = vunpack.c.l.b16 %v235
      %v280 = vunpack.c.l.b16 %v236
      %v281 = vunpack.c.l.b16 %v237
      %v282 = vunpack.c.l.b16 %v238
      %v283 = vunpack.c.l.b16 %v239
      %v284 = vunpack.c.l.b16 %v240
      %v285 = vunpack.c.l.b16 %v241
      %v286 = vunpack.c.l.b16 %v242
      %v287 = vunpack.c.l.b16 %v243
      %v288 = vunpack.c.l.b16 %v244
      %v289 = vpack.c.b16 %v274, %v273
      %v290 = vpack.c.b16 %v276, %v275
      %v291 = vpack.c.b16 %v278, %v277
      %v292 = vpack.c.b16 %v280, %v279
      %v293 = vpack.c.b16 %v282, %v281
      %v294 = vpack.c.b16 %v284, %v283
      %v295 = vpack.c.b16 %v286, %v285
      %v296 = vpack.c.b16 %v288, %v287
      %v302 = vunpack.c.l.b16 %v245
      %v303 = vunpack.c.l.b16 %v246
      %v304 = vunpack.c.l.b16 %v247
      %v305 = vunpack.c.l.b16 %v248
      %v306 = vunpack.c.l.b16 %v249
      %v307 = vpack.c.b16 %v303, %v302
      %v308 = vpack.c.b16 %v305, %v304
      %v309 = vpack.c.b16 %v306, %v306
      %vm312 = vcmask 293888
      %v314 = vsel %vm312, %v289, 0
      %v317 = vsel %vm312, %v290, 0
      %v320 = vsel %vm312, %v291, 0
      %v323 = vsel %vm312, %v292, 0
      %v326 = vsel %vm312, %v293, 0
      %v329 = vsel %vm312, %v294, 0
      %v332 = vsel %vm312, %v295, 0
      %v335 = vsel %vm312, %v296, 0
      %vm337 = vcmask 1041408
      %v339 = vsel %vm337, %v309, 0
      %341 = vmatprep.subr.bf16.mxu0 0
      %342 = vmatpush1.bf16.msra.mxu0 %v307
      %343 = vmatprep.subr.bf16.mxu0 0
      %344 = vmatpush1.bf16.msra.mxu0 %v308
      %345 = vmatprep.subr.bf16.mxu0 0
      %346 = vmatpush1.bf16.msra.mxu0 %v339
      %347 = vmatprep.subr.bf16.mxu0 0
      %348 = vmatpush1.bf16.msra.mxu0 0
      %349 = vmatprep.subr.bf16.mxu0 0
      %350 = vmatpush1.bf16.msra.mxu0 0
      %351 = vmatprep.subr.bf16.mxu0 0
      %352 = vmatpush1.bf16.msra.mxu0 0
      %353 = vmatprep.subr.bf16.mxu0 0
      %354 = vmatpush1.bf16.msra.mxu0 0
      %355 = vmatprep.subr.bf16.mxu0 0
      %356 = vmatpush1.bf16.msra.mxu0 0
      %357 = vmatprep.subr.bf16.mxu0 0
      %358 = vmatpush1.bf16.msra.mxu0 0
      %359 = vmatprep.subr.bf16.mxu0 0
      %360 = vmatpush1.bf16.msra.mxu0 0
      %361 = vmatprep.subr.bf16.mxu0 0
      %362 = vmatpush1.bf16.msra.mxu0 0
      %363 = vmatprep.subr.bf16.mxu0 0
      %364 = vmatpush1.bf16.msra.mxu0 0
      %365 = vmatprep.subr.bf16.mxu0 0
      %366 = vmatpush1.bf16.msra.mxu0 0
      %367 = vmatprep.subr.bf16.mxu0 0
      %368 = vmatpush1.bf16.msra.mxu0 0
      %369 = vmatprep.subr.bf16.mxu0 0
      %370 = vmatpush1.bf16.msra.mxu0 0
      %371 = vmatprep.subr.bf16.mxu0 0
      %372 = vmatpush1.bf16.msra.mxu0 0
      %373 = vmatprep.mubr.bf16.mxu0 0
      %374 = vmatmul.mubr.bf16.gmra.mrb[0].mxu0 %v314
      %v375 = vpop.f32.mrb[0].mxu0
      %v376 = vadd.f32 %v255, %v375
      %v377 = vpop.f32.mrb[0].mxu0
      %v378 = vpop.f32.mrb[0].mxu0
      %v379 = vadd.f32 %v255, %v378
      %v380 = vpop.f32.mrb[0].mxu0
      %381 = vmatprep.mubr.bf16.mxu0 0
      %382 = vmatmul.mubr.bf16.gmra.mrb[0].mxu0 %v317
      %v383 = vpop.f32.mrb[0].mxu0
      %v384 = vadd.f32 %v255, %v383
      %v385 = vpop.f32.mrb[0].mxu0
      %v386 = vpop.f32.mrb[0].mxu0
      %v387 = vadd.f32 %v255, %v386
      %v388 = vpop.f32.mrb[0].mxu0
      %389 = vmatprep.mubr.bf16.mxu0 0
      %390 = vmatmul.mubr.bf16.gmra.mrb[0].mxu0 %v320
      %v391 = vpop.f32.mrb[0].mxu0
      %v392 = vadd.f32 %v255, %v391
      %v393 = vpop.f32.mrb[0].mxu0
      %v394 = vpop.f32.mrb[0].mxu0
      %v395 = vadd.f32 %v255, %v394
      %v396 = vpop.f32.mrb[0].mxu0
      %397 = vmatprep.mubr.bf16.mxu0 0
      %398 = vmatmul.mubr.bf16.gmra.mrb[0].mxu0 %v323
      %v399 = vpop.f32.mrb[0].mxu0
      %v400 = vadd.f32 %v255, %v399
      %v401 = vpop.f32.mrb[0].mxu0
      %v402 = vpop.f32.mrb[0].mxu0
      %v403 = vadd.f32 %v255, %v402
      %v404 = vpop.f32.mrb[0].mxu0
      %405 = vmatprep.mubr.bf16.mxu0 0
      %406 = vmatmul.mubr.bf16.gmra.mrb[0].mxu0 %v326
      %v407 = vpop.f32.mrb[0].mxu0
      %v408 = vadd.f32 %v255, %v407
      %v409 = vpop.f32.mrb[0].mxu0
      %v410 = vpop.f32.mrb[0].mxu0
      %v411 = vadd.f32 %v255, %v410
      %v412 = vpop.f32.mrb[0].mxu0
      %413 = vmatprep.mubr.bf16.mxu0 0
      %414 = vmatmul.mubr.bf16.gmra.mrb[0].mxu0 %v329
      %v415 = vpop.f32.mrb[0].mxu0
      %v416 = vadd.f32 %v255, %v415
      %v417 = vpop.f32.mrb[0].mxu0
      %v418 = vpop.f32.mrb[0].mxu0
      %v419 = vadd.f32 %v255, %v418
      %v420 = vpop.f32.mrb[0].mxu0
      %421 = vmatprep.mubr.bf16.mxu0 0
      %422 = vmatmul.mubr.bf16.gmra.mrb[0].mxu0 %v332
      %v423 = vpop.f32.mrb[0].mxu0
      %v424 = vadd.f32 %v255, %v423
      %v425 = vpop.f32.mrb[0].mxu0
      %v426 = vpop.f32.mrb[0].mxu0
      %v427 = vadd.f32 %v255, %v426
      %v428 = vpop.f32.mrb[0].mxu0
      %429 = vmatprep.mubr.bf16.mxu0 0
      %430 = vmatmul.mubr.bf16.gmra.mrb[0].mxu0 %v335
      %v431 = vpop.f32.mrb[0].mxu0
      %v432 = vadd.f32 %v255, %v431
      %v433 = vpop.f32.mrb[0].mxu0
      %v434 = vpop.f32.mrb[0].mxu0
      %v435 = vadd.f32 %v255, %v434
      %v436 = vpop.f32.mrb[0].mxu0
      %437 = vdwg.mxu0
      %v438 = vxor.u32 %v376, 2147483648
      %v439 = vxor.u32 %v379, 2147483648
      %v440 = vxor.u32 %v384, 2147483648
      %v441 = vxor.u32 %v387, 2147483648
      %v442 = vxor.u32 %v392, 2147483648
      %v443 = vxor.u32 %v395, 2147483648
      %v444 = vxor.u32 %v400, 2147483648
      %v445 = vxor.u32 %v403, 2147483648
      %v446 = vxor.u32 %v408, 2147483648
      %v447 = vxor.u32 %v411, 2147483648
      %v448 = vxor.u32 %v416, 2147483648
      %v449 = vxor.u32 %v419, 2147483648
      %v450 = vxor.u32 %v424, 2147483648
      %v451 = vxor.u32 %v427, 2147483648
      %v452 = vxor.u32 %v432, 2147483648
      %v453 = vxor.u32 %v435, 2147483648
      %v454 = vmul.f32 %v438, 1.442695
      %v455 = vpow.pop %v454
      %v456 = vmul.f32 %v439, 1.442695
      %v457 = vpow.pop %v456
      %v458 = vmul.f32 %v440, 1.442695
      %v459 = vpow.pop %v458
      %v460 = vmul.f32 %v441, 1.442695
      %v461 = vpow.pop %v460
      %v462 = vmul.f32 %v442, 1.442695
      %v463 = vpow.pop %v462
      %v464 = vmul.f32 %v443, 1.442695
      %v465 = vpow.pop %v464
      %v466 = vmul.f32 %v444, 1.442695
      %v467 = vpow.pop %v466
      %v468 = vmul.f32 %v445, 1.442695
      %v469 = vpow.pop %v468
      %v470 = vmul.f32 %v446, 1.442695
      %v471 = vpow.pop %v470
      %v472 = vmul.f32 %v447, 1.442695
      %v473 = vpow.pop %v472
      %v474 = vmul.f32 %v448, 1.442695
      %v475 = vpow.pop %v474
      %v476 = vmul.f32 %v449, 1.442695
      %v477 = vpow.pop %v476
      %v478 = vmul.f32 %v450, 1.442695
      %v479 = vpow.pop %v478
      %v480 = vmul.f32 %v451, 1.442695
      %v481 = vpow.pop %v480
      %v482 = vmul.f32 %v452, 1.442695
      %v483 = vpow.pop %v482
      %v484 = vmul.f32 %v453, 1.442695
      %v485 = vpow.pop %v484
      %v486 = vadd.f32 %v455, 1.0
      %v487 = vadd.f32 %v457, 1.0
      %v488 = vadd.f32 %v459, 1.0
      %v489 = vadd.f32 %v461, 1.0
      %v490 = vadd.f32 %v463, 1.0
      %v491 = vadd.f32 %v465, 1.0
      %v492 = vadd.f32 %v467, 1.0
      %v493 = vadd.f32 %v469, 1.0
      %v494 = vadd.f32 %v471, 1.0
      %v495 = vadd.f32 %v473, 1.0
      %v496 = vadd.f32 %v475, 1.0
      %v497 = vadd.f32 %v477, 1.0
      %v498 = vadd.f32 %v479, 1.0
      %v499 = vadd.f32 %v481, 1.0
      %v500 = vadd.f32 %v483, 1.0
      %v501 = vadd.f32 %v485, 1.0
      %v502 = vrcp.pop %v486
      %v503 = vmul.f32 1.0, %v502
      %v504 = vrcp.pop %v487
      %v505 = vmul.f32 1.0, %v504
      %v506 = vrcp.pop %v488
      %v507 = vmul.f32 1.0, %v506
      %v508 = vrcp.pop %v489
      %v509 = vmul.f32 1.0, %v508
      %v510 = vrcp.pop %v490
      %v511 = vmul.f32 1.0, %v510
      %v512 = vrcp.pop %v491
      %v513 = vmul.f32 1.0, %v512
      %v514 = vrcp.pop %v492
      %v515 = vmul.f32 1.0, %v514
      %v516 = vrcp.pop %v493
      %v517 = vmul.f32 1.0, %v516
      %v518 = vrcp.pop %v494
      %v519 = vmul.f32 1.0, %v518
      %v520 = vrcp.pop %v495
      %v521 = vmul.f32 1.0, %v520
      %v522 = vrcp.pop %v496
      %v523 = vmul.f32 1.0, %v522
      %v524 = vrcp.pop %v497
      %v525 = vmul.f32 1.0, %v524
      %v526 = vrcp.pop %v498
      %v527 = vmul.f32 1.0, %v526
      %v528 = vrcp.pop %v499
      %v529 = vmul.f32 1.0, %v528
      %v530 = vrcp.pop %v500
      %v531 = vmul.f32 1.0, %v530
      %v532 = vrcp.pop %v501
      %v533 = vmul.f32 1.0, %v532
      %v534 = vmul.f32 %v376, %v503
      %v535 = vmul.f32 %v379, %v505
      %v536 = vmul.f32 %v384, %v507
      %v537 = vmul.f32 %v387, %v509
      %v538 = vmul.f32 %v392, %v511
      %v539 = vmul.f32 %v395, %v513
      %v540 = vmul.f32 %v400, %v515
      %v541 = vmul.f32 %v403, %v517
      %v542 = vmul.f32 %v408, %v519
      %v543 = vmul.f32 %v411, %v521
      %v544 = vmul.f32 %v416, %v523
      %v545 = vmul.f32 %v419, %v525
      %v546 = vmul.f32 %v424, %v527
      %v547 = vmul.f32 %v427, %v529
      %v548 = vmul.f32 %v432, %v531
      %v549 = vmul.f32 %v435, %v533
      %v550 = vpack.c.bf16 %v535, %v534
      %v551 = vpack.c.bf16 %v537, %v536
      %v552 = vpack.c.bf16 %v539, %v538
      %v553 = vpack.c.bf16 %v541, %v540
      %v554 = vpack.c.bf16 %v543, %v542
      %v555 = vpack.c.bf16 %v545, %v544
      %v556 = vpack.c.bf16 %v547, %v546
      %v557 = vpack.c.bf16 %v549, %v548
      %v558 = vld [vmem:[%s3] sm:$0xf]
      %v559 = vld [vmem:[%s3 + $0x4] sm:$0xf]
      %v560 = vld [vmem:[%s3 + $0x8] sm:$0xf]
      %v561 = vld [vmem:[%s3 + $0xc] sm:$0xf]
      %v562 = vld [vmem:[%s4] sm:$0x1]
      %v564 = vlaneseq
      %v565 = vshrl.u32 %v564, 7
      %v566 = vsub.s32 0, %v565
      %v567 = vrot.slane %v562, %v566
      %v573 = vunpack.c.l.b16 %v558
      %v574 = vunpack.c.l.b16 %v559
      %v575 = vunpack.c.l.b16 %v560
      %v576 = vunpack.c.l.b16 %v561
      %v577 = vpack.c.b16 %v574, %v573
      %v578 = vpack.c.b16 %v576, %v575
      %vm581 = vcmask 261120
      %v583 = vsel %vm581, %v550, 0
      %v586 = vsel %vm581, %v551, 0
      %v589 = vsel %vm581, %v552, 0
      %v592 = vsel %vm581, %v553, 0
      %v595 = vsel %vm581, %v554, 0
      %v598 = vsel %vm581, %v555, 0
      %v601 = vsel %vm581, %v556, 0
      %v604 = vsel %vm581, %v557, 0
      %606 = vmatprep.subr.bf16.mxu0 0
      %607 = vmatpush1.bf16.msra.mxu0 %v577
      %608 = vmatprep.subr.bf16.mxu0 0
      %609 = vmatpush1.bf16.msra.mxu0 %v578
      %610 = vmatprep.subr.bf16.mxu0 0
      %611 = vmatpush1.bf16.msra.mxu0 0
      %612 = vmatprep.subr.bf16.mxu0 0
      %613 = vmatpush1.bf16.msra.mxu0 0
      %614 = vmatprep.subr.bf16.mxu0 0
      %615 = vmatpush1.bf16.msra.mxu0 0
      %616 = vmatprep.subr.bf16.mxu0 0
      %617 = vmatpush1.bf16.msra.mxu0 0
      %618 = vmatprep.subr.bf16.mxu0 0
      %619 = vmatpush1.bf16.msra.mxu0 0
      %620 = vmatprep.subr.bf16.mxu0 0
      %621 = vmatpush1.bf16.msra.mxu0 0
      %622 = vmatprep.subr.bf16.mxu0 0
      %623 = vmatpush1.bf16.msra.mxu0 0
      %624 = vmatprep.subr.bf16.mxu0 0
      %625 = vmatpush1.bf16.msra.mxu0 0
      %626 = vmatprep.subr.bf16.mxu0 0
      %627 = vmatpush1.bf16.msra.mxu0 0
      %628 = vmatprep.subr.bf16.mxu0 0
      %629 = vmatpush1.bf16.msra.mxu0 0
      %630 = vmatprep.subr.bf16.mxu0 0
      %631 = vmatpush1.bf16.msra.mxu0 0
      %632 = vmatprep.subr.bf16.mxu0 0
      %633 = vmatpush1.bf16.msra.mxu0 0
      %634 = vmatprep.subr.bf16.mxu0 0
      %635 = vmatpush1.bf16.msra.mxu0 0
      %636 = vmatprep.subr.bf16.mxu0 0
      %637 = vmatpush1.bf16.msra.mxu0 0
      %638 = vmatprep.mubr.bf16.mxu0 0
      %639 = vmatmul.mubr.bf16.gmra.mrb[0].mxu0 %v583
      %v640 = vpop.f32.mrb[0].mxu0
      %v641 = vadd.f32 %v567, %v640
      %v642 = vpop.f32.mrb[0].mxu0
      %v643 = vpop.f32.mrb[0].mxu0
      %v644 = vadd.f32 %v567, %v643
      %v645 = vpop.f32.mrb[0].mxu0
      %646 = vmatprep.mubr.bf16.mxu0 0
      %647 = vmatmul.mubr.bf16.gmra.mrb[0].mxu0 %v586
      %v648 = vpop.f32.mrb[0].mxu0
      %v649 = vadd.f32 %v567, %v648
      %v650 = vpop.f32.mrb[0].mxu0
      %v651 = vpop.f32.mrb[0].mxu0
      %v652 = vadd.f32 %v567, %v651
      %v653 = vpop.f32.mrb[0].mxu0
      %654 = vmatprep.mubr.bf16.mxu0 0
      %655 = vmatmul.mubr.bf16.gmra.mrb[0].mxu0 %v589
      %v656 = vpop.f32.mrb[0].mxu0
      %v657 = vadd.f32 %v567, %v656
      %v658 = vpop.f32.mrb[0].mxu0
      %v659 = vpop.f32.mrb[0].mxu0
      %v660 = vadd.f32 %v567, %v659
      %v661 = vpop.f32.mrb[0].mxu0
      %662 = vmatprep.mubr.bf16.mxu0 0
      %663 = vmatmul.mubr.bf16.gmra.mrb[0].mxu0 %v592
      %v664 = vpop.f32.mrb[0].mxu0
      %v665 = vadd.f32 %v567, %v664
      %v666 = vpop.f32.mrb[0].mxu0
      %v667 = vpop.f32.mrb[0].mxu0
      %v668 = vadd.f32 %v567, %v667
      %v669 = vpop.f32.mrb[0].mxu0
      %670 = vmatprep.mubr.bf16.mxu0 0
      %671 = vmatmul.mubr.bf16.gmra.mrb[0].mxu0 %v595
      %v672 = vpop.f32.mrb[0].mxu0
      %v673 = vadd.f32 %v567, %v672
      %v674 = vpop.f32.mrb[0].mxu0
      %v675 = vpop.f32.mrb[0].mxu0
      %v676 = vadd.f32 %v567, %v675
      %v677 = vpop.f32.mrb[0].mxu0
      %678 = vmatprep.mubr.bf16.mxu0 0
      %679 = vmatmul.mubr.bf16.gmra.mrb[0].mxu0 %v598
      %v680 = vpop.f32.mrb[0].mxu0
      %v681 = vadd.f32 %v567, %v680
      %v682 = vpop.f32.mrb[0].mxu0
      %v683 = vpop.f32.mrb[0].mxu0
      %v684 = vadd.f32 %v567, %v683
      %v685 = vpop.f32.mrb[0].mxu0
      %686 = vmatprep.mubr.bf16.mxu0 0
      %687 = vmatmul.mubr.bf16.gmra.mrb[0].mxu0 %v601
      %v688 = vpop.f32.mrb[0].mxu0
      %v689 = vadd.f32 %v567, %v688
      %v690 = vpop.f32.mrb[0].mxu0
      %v691 = vpop.f32.mrb[0].mxu0
      %v692 = vadd.f32 %v567, %v691
      %v693 = vpop.f32.mrb[0].mxu0
      %694 = vmatprep.mubr.bf16.mxu0 0
      %695 = vmatmul.mubr.bf16.gmra.mrb[0].mxu0 %v604
      %v696 = vpop.f32.mrb[0].mxu0
      %v697 = vadd.f32 %v567, %v696
      %v698 = vpop.f32.mrb[0].mxu0
      %v699 = vpop.f32.mrb[0].mxu0
      %v700 = vadd.f32 %v567, %v699
      %v701 = vpop.f32.mrb[0].mxu0
      %702 = vdwg.mxu0
      %v703 = vmax.f32 %v641, 0.0
      %v704 = vmax.f32 %v644, 0.0
      %v705 = vmax.f32 %v649, 0.0
      %v706 = vmax.f32 %v652, 0.0
      %v707 = vmax.f32 %v657, 0.0
      %v708 = vmax.f32 %v660, 0.0
      %v709 = vmax.f32 %v665, 0.0
      %v710 = vmax.f32 %v668, 0.0
      %v711 = vmax.f32 %v673, 0.0
      %v712 = vmax.f32 %v676, 0.0
      %v713 = vmax.f32 %v681, 0.0
      %v714 = vmax.f32 %v684, 0.0
      %v715 = vmax.f32 %v689, 0.0
      %v716 = vmax.f32 %v692, 0.0
      %v717 = vmax.f32 %v697, 0.0
      %v718 = vmax.f32 %v700, 0.0
      %vm719 = vcmask 523264
      %720 = vst.msk [vmem:[%s226] sm:$0xff] %vm719, %v703
      %721 = vst.msk [vmem:[%s226 + $0x8] sm:$0xff] %vm719, %v704
      %722 = vst.msk [vmem:[%s226 + $0x10] sm:$0xff] %vm719, %v705
      %723 = vst.msk [vmem:[%s226 + $0x18] sm:$0xff] %vm719, %v706
      %724 = vst.msk [vmem:[%s226 + $0x20] sm:$0xff] %vm719, %v707
      %725 = vst.msk [vmem:[%s226 + $0x28] sm:$0xff] %vm719, %v708
      %726 = vst.msk [vmem:[%s226 + $0x30] sm:$0xff] %vm719, %v709
      %727 = vst.msk [vmem:[%s226 + $0x38] sm:$0xff] %vm719, %v710
      %728 = vst.msk [vmem:[%s226 + $0x40] sm:$0xff] %vm719, %v711
      %729 = vst.msk [vmem:[%s226 + $0x48] sm:$0xff] %vm719, %v712
      %730 = vst.msk [vmem:[%s226 + $0x50] sm:$0xff] %vm719, %v713
      %731 = vst.msk [vmem:[%s226 + $0x58] sm:$0xff] %vm719, %v714
      %732 = vst.msk [vmem:[%s226 + $0x60] sm:$0xff] %vm719, %v715
      %733 = vst.msk [vmem:[%s226 + $0x68] sm:$0xff] %vm719, %v716
      %734 = vst.msk [vmem:[%s226 + $0x70] sm:$0xff] %vm719, %v717
      %735 = vst.msk [vmem:[%s226 + $0x78] sm:$0xff] %vm719, %v718
      %s736 = smul.u32 16, %s16
      %p737 = scmp.lt.s32.totalorder %s736, 63
      %s738 = scalar_select %p737, %s736, 63
      %s739 = smul.addr %s738, 8
      %s740 = scalar_lea.vmem %s5, %s739
      // Predicated region
      $region41: #{forward.3} parent=39 // pred_check
        %p741 = pneg %p144
      $region42: #{forward.3} parent=39 // pred_check_branch
        %743 = sbr.rel (%p741) target = $region44
      $region43: #{forward.3} parent=39 // pred_region
        %s744 = smul.u32 16, %s16
      $region44: #{forward.3} parent=39 // pred_fallthru
        _
    $region40: #{forward.3} parent=5 // pred_fallthru
      _
    %p745 = scmp.le.s32.totalorder 2, %s11
    // Predicated region
    $region45: #{forward.3} parent=5 // pred_check
      %p746 = pneg %p745
    $region46: #{forward.3} parent=5 // pred_check_branch
      %748 = sbr.rel (%p746) target = $region48
    $region47: #{forward.3} parent=5 // pred_region
      %s749 = ssub.s32 %s11, 2
      // Predicated region
      $region49: #{forward.3} parent=47 // pred_check
        %p750 = pneg %p150
      $region50: #{forward.3} parent=47 // pred_check_branch
        %752 = sbr.rel (%p750) target = $region52
      $region51: #{forward.3} parent=47 // pred_region
        %s753 = smul.u32 16, %s17
        %p754 = scmp.lt.s32.totalorder %s753, 63
        %s755 = scalar_select %p754, %s753, 63
        %s756 = smul.addr %s755, 8
        %s757 = scalar_lea.vmem %s5, %s756
      $region52: #{forward.3} parent=47 // pred_fallthru
        _
    $region48: #{forward.3} parent=5 // pred_fallthru
      _
  $region6: #{forward.3} parent=0 // loop_footer
    %s15 = sadd.s32 1, %s11
  $region7: #{forward.3} parent=0 // loop_footer_branch
    %10 = sbr.rel target = $region3
  $region8: #{forward.3} parent=0 // loop_exit
    _

</llo_original>
